<compile_context>
chip_gen: v7x
topology: tpu7x:2x2x1
jax: 0.10.0
libtpu: 0.0.40
codegen_flags: <defaults>
</compile_context>

<pallas_src>
import jax
import jax.numpy as jnp
from jax import lax
from jax.experimental import pallas as pl
from jax.experimental.pallas import tpu as pltpu

EPS = 1e-5          # BatchNorm / LayerNorm eps
NEG_CLAMP = -100.0  # torch.nn.BCELoss clamps log() outputs at -100


# ---------------------------------------------------------------------------
# Fused per-image XFKD loss kernel
# ---------------------------------------------------------------------------
def _make_main_kernel(C, H, W, temp):
    HW = H * W
    inv_temp = 1.0 / float(temp)

    def smooth_l1(x):  # F.smooth_l1_loss, beta = 1.0, no reduction
        ax = jnp.abs(x)
        return jnp.where(ax < 1.0, 0.5 * x * x, ax - 0.5)

    def kernel(s_ref, t_ref, mask_ref, parc_ref, rowp_ref, out_ref):
        s_raw = s_ref[0]                    # (C, HW) raw student
        t_raw = t_ref[0]                    # (C, HW) raw teacher
        masks = mask_ref[0]                 # (2, HW) fg / bg masks
        parc = parc_ref[...]                # (C, 4)  per-channel BN params
        rowp = rowp_ref[...]                # (8, C)  row params for MXU reductions

        m_fg = masks[0:1, :]                # (1, HW)
        m_bg = masks[1:2, :]
        mean_s, inv_s = parc[:, 0:1], parc[:, 1:2]
        mean_t, inv_t = parc[:, 2:3], parc[:, 3:4]

        # BatchNorm2d, training mode (batch stats computed in glue, w=1, b=0)
        S = (t_raw + s_raw - mean_s) * inv_s    # preds_S := bn_s(preds_T + preds_S)
        T = (t_raw - mean_t) * inv_t            # preds_T := bn_t(preds_T)
        aS = jnp.abs(S)
        aT = jnp.abs(T)

        # ----- channel-axis (sublane) reductions on the MXU -------------------
        # row0 = 1/(C*temp) -> spatial-attention channel mean (already /temp);
        # row1 = conv_mask_s weight, row2 = conv_mask_t weight -> pool logits.
        rows_aS = jnp.dot(rowp, aS, preferred_element_type=jnp.float32)   # (8, HW)
        rows_aT = jnp.dot(rowp, aT, preferred_element_type=jnp.float32)
        rows_S = jnp.dot(rowp, S, preferred_element_type=jnp.float32)
        rows_T = jnp.dot(rowp, T, preferred_element_type=jnp.float32)

        # ----- get_attention (SpatialAttention / ChannelAttention == identity) -
        def s_att_from(sp):                                   # sp: (1, HW)
            es = jnp.exp(sp - jnp.max(sp, axis=1, keepdims=True))
            return es * (float(HW) / jnp.sum(es, axis=1, keepdims=True))

        def c_att_from(aX):
            ch = jnp.mean(aX, axis=1, keepdims=True) * inv_temp           # (C, 1)
            ec = jnp.exp(ch - jnp.max(ch, axis=0, keepdims=True))
            return ec * (float(C) / jnp.sum(ec, axis=0, keepdims=True))

        s_att_t = s_att_from(rows_aT[0:1, :])
        s_att_s = s_att_from(rows_aS[0:1, :])
        c_att_t = c_att_from(aT)
        c_att_s = c_att_from(aS)

        # ----- fg / bg feature loss (factored) + relation-MSE pieces -----------
        # sum((fea_s-fea_t)^2 * m) == sum_hw u * S_att_t * m,  u = sum_c C_att_t*d^2
        d = S - T
        dd = d * d
        u = jnp.sum(dd * c_att_t, axis=0, keepdims=True)                  # (1, HW)
        us = u * s_att_t
        fg_sum = jnp.sum(us * m_fg)
        bg_sum = jnp.sum(us * m_bg)
        d2_sum = jnp.sum(dd)
        sum_d = jnp.sum(d, axis=1, keepdims=True)                         # (C, 1)

        # ----- mask loss: smooth_l1((A_t + A_s) - A_t) == smooth_l1(A_s) -------
        sl1c = jnp.sum(smooth_l1(c_att_s))
        sl1s = jnp.sum(smooth_l1(s_att_s))

        # ----- spatial_pool: logit (MXU) -> softmax over HW -> weighted pool ---
        def spatial_pool(X, logit):                           # logit: (1, HW)
            e = jnp.exp(logit - jnp.max(logit, axis=1, keepdims=True))
            m = e * (1.0 / jnp.sum(e, axis=1, keepdims=True))
            return jnp.sum(X * m, axis=1, keepdims=True)      # (C, 1)

        ctx_s = spatial_pool(S, rows_S[1:2, :])
        ctx_t = spatial_pool(T, rows_T[2:3, :])

        # ----- BCE( softmax over H ), DAN == identity ---------------------------
        # Flat index j = h*W + w, so the per-(c,w) column sums / normalisers are
        # (C, W) arrays built from W-wide lane slices; the loss is accumulated
        # slice-by-slice so no (C, HW) broadcast temporaries are materialised.
        xs = S - jnp.max(S, axis=1, keepdims=True)  # per-channel shift (softmax is shift-invariant)
        e_s = jnp.exp(xs)
        e_t = jnp.exp(T - jnp.max(T, axis=1, keepdims=True))

        cs_s = e_s[:, 0:W]
        cs_t = e_t[:, 0:W]
        for h in range(1, H):
            lo, hi = h * W, (h + 1) * W
            cs_s = cs_s + e_s[:, lo:hi]
            cs_t = cs_t + e_t[:, lo:hi]
        cs_s = jnp.maximum(cs_s, 1e-30)             # guard an all-underflowed column
        cs_t = jnp.maximum(cs_t, 1e-30)
        inv_cs_s = 1.0 / cs_s                       # exact reciprocal on the BCE path
        inv_cs_t = 1.0 / cs_t
        log_cs_s = jnp.log(cs_s)

        bce_acc = jnp.zeros((C, W), jnp.float32)
        for h in range(H):
            lo, hi = h * W, (h + 1) * W
            p_t = jnp.minimum(e_t[:, lo:hi] * inv_cs_t, 1.0)   # target softmax (clamped <= 1)
            p_s = jnp.minimum(e_s[:, lo:hi] * inv_cs_s, 1.0)   # input softmax
            log_ps = jnp.maximum(xs[:, lo:hi] - log_cs_s, NEG_CLAMP)
            log_1ps = jnp.maximum(jnp.log(1.0 - p_s), NEG_CLAMP)
            bce_acc = bce_acc + (p_t * log_ps + (1.0 - p_t) * log_1ps)
        bce_sum = -jnp.sum(bce_acc)

        # ----- packed writeback: one (1, C, 4) block per image ------------------
        out_ref[0:1, :, 0:1] = sum_d.reshape(1, C, 1)
        out_ref[0:1, :, 1:2] = ctx_s.reshape(1, C, 1)
        out_ref[0:1, :, 2:3] = ctx_t.reshape(1, C, 1)
        ridx = lax.broadcasted_iota(jnp.int32, (C, 1), 0)
        scal = (jnp.where(ridx == 0, fg_sum, 0.0) + jnp.where(ridx == 1, bg_sum, 0.0)
                + jnp.where(ridx == 2, sl1c, 0.0) + jnp.where(ridx == 3, sl1s, 0.0)
                + jnp.where(ridx == 4, d2_sum, 0.0) + jnp.where(ridx == 5, bce_sum, 0.0))
        out_ref[0:1, :, 3:4] = scal.reshape(1, C, 1)

    return kernel


def main_pass(s_flat, t_flat, masks, par_col, row_par, temp, H, W):
    N, C, HW = s_flat.shape
    feat = pl.BlockSpec((1, C, HW), lambda n: (n, 0, 0))
    mspec = pl.BlockSpec((1, 2, HW), lambda n: (n, 0, 0))
    pcspec = pl.BlockSpec((C, 4), lambda n: (0, 0))      # tiny, constant index
    rpspec = pl.BlockSpec((8, C), lambda n: (0, 0))      # tiny, constant index
    ospec = pl.BlockSpec((1, C, 4), lambda n: (n, 0, 0))

    # VMEM budget per generation: ~5/8 of physical (40 MiB on v7x's 64 MiB per-TC,
    # 80 MiB on v5e/v6e's 128 MiB), conservative fallback if the query fails.
    try:
        cap = int(pltpu.get_tpu_info().vmem_capacity_bytes)
    except Exception:
        cap = 64 * 1024 * 1024
    vmem_limit = int(min(max(cap * 5 // 8, 32 * 1024 * 1024), 96 * 1024 * 1024))

    kernel = _make_main_kernel(C, H, W, temp)
    return pl.pallas_call(
        kernel,
        grid=(N,),
        in_specs=[feat, feat, mspec, pcspec, rpspec],
        out_specs=ospec,
        out_shape=jax.ShapeDtypeStruct((N, C, 4), jnp.float32),
        compiler_params=pltpu.CompilerParams(
            dimension_semantics=("parallel",),
            vmem_limit_bytes=vmem_limit,
        ),
    )(s_flat, t_flat, masks, par_col, row_par)


# ---------------------------------------------------------------------------
# Glue: gt-box foreground / background masks (tiny, data-dependent box logic)
# ---------------------------------------------------------------------------
def compute_masks(gt_bboxes, img_metas, H, W):
    hs = jnp.arange(H, dtype=jnp.int32).reshape(H, 1)
    ws = jnp.arange(W, dtype=jnp.int32).reshape(1, W)
    fg_list, bg_list = [], []
    for b, (img_h, img_w) in zip(gt_bboxes, img_metas):
        if int(b.shape[0]) == 0:        # box-less image: masked out in glue
            fg_list.append(jnp.zeros((H, W), jnp.float32))
            bg_list.append(jnp.full((H, W), 1.0 / (H * W), jnp.float32))
            continue
        wmin = jnp.floor(b[:, 0] / img_w * W).astype(jnp.int32)
        wmax = jnp.ceil(b[:, 2] / img_w * W).astype(jnp.int32)
        hmin = jnp.floor(b[:, 1] / img_h * H).astype(jnp.int32)
        hmax = jnp.ceil(b[:, 3] / img_h * H).astype(jnp.int32)
        area = 1.0 / (hmax + 1 - hmin).astype(jnp.float32) \
                   / (wmax + 1 - wmin).astype(jnp.float32)                 # (nb,)
        cover = ((hs[None] >= hmin[:, None, None]) & (hs[None] <= hmax[:, None, None]) &
                 (ws[None] >= wmin[:, None, None]) & (ws[None] <= wmax[:, None, None]))
        fg = jnp.max(jnp.where(cover, area[:, None, None], 0.0), axis=0)   # (H, W)
        bg = jnp.where(fg > 0, 0.0, 1.0)
        sbg = jnp.sum(bg)
        bg = jnp.where(sbg > 0, bg / sbg, bg)
        fg_list.append(fg)
        bg_list.append(bg)
    return jnp.stack(fg_list).astype(jnp.float32), jnp.stack(bg_list).astype(jnp.float32)


# ---------------------------------------------------------------------------
# Module
# ---------------------------------------------------------------------------
class XFKDFeatureLossPallas:
    def __init__(self, student_channels, teacher_channels, name,
                 temp=0.5, alpha=0.001, beta=0.0005, gamma=0.001, llambda=5e-6,
                 seed=0):
        assert student_channels == teacher_channels, "align conv not needed (align=None branch)"
        self.name = name
        self.temp, self.alpha, self.beta = temp, alpha, beta
        self.gamma, self.llambda = gamma, llambda
        C = teacher_channels
        C2 = C // 2
        self.C = C

        key = jax.random.PRNGKey(seed)
        k = jax.random.split(key, 6)
        kaiming_std = (2.0 / C) ** 0.5  # kaiming_init(mode='fan_in'), relu gain
        # conv_mask_{s,t}: 1x1 conv C->1 ; bias=0 (kaiming_init) and cancels in softmax
        self.w_mask_s = (jax.random.normal(k[0], (C,)) * kaiming_std).astype(jnp.float32)
        self.w_mask_t = (jax.random.normal(k[1], (C,)) * kaiming_std).astype(jnp.float32)

        def ch_add_params(kk):
            k1, k2 = jax.random.split(kk)
            return dict(
                w1=(jax.random.normal(k1, (C2, C)) * (1.0 / C) ** 0.5).astype(jnp.float32),
                b1=(jax.random.normal(k2, (C2,)) * 0.01).astype(jnp.float32),
                ln_w=jnp.ones((C2,), jnp.float32),
                ln_b=jnp.zeros((C2,), jnp.float32),
                w2=jnp.zeros((C, C2), jnp.float32),   # last_zero_init -> zero output
                b2=jnp.zeros((C,), jnp.float32),
            )

        self.ch_add_s = ch_add_params(k[2])
        self.ch_add_t = ch_add_params(k[3])

    def _channel_add(self, ctx, p):
        # ctx: (N, C).  conv1x1 -> LayerNorm([C/2,1,1]) -> ReLU -> conv1x1 (zero-init)
        h = ctx @ p["w1"].T + p["b1"]
        mu = jnp.mean(h, axis=-1, keepdims=True)
        var = jnp.mean((h - mu) ** 2, axis=-1, keepdims=True)
        h = (h - mu) / jnp.sqrt(var + EPS) * p["ln_w"] + p["ln_b"]
        h = jnp.maximum(h, 0.0)
        return h @ p["w2"].T + p["b2"]        # exactly zero (last_zero_init)

    def __call__(self, preds_S, preds_T, gt_bboxes, img_metas):
        Nfull, C, H, W = preds_S.shape
        assert preds_S.shape[-2:] == preds_T.shape[-2:], \
            "the output dim of teacher and student differ"
        assert C >= 6, "scalar packing in the output block needs C >= 6"
        preds_S = preds_S.astype(jnp.float32)
        preds_T = preds_T.astype(jnp.float32)
        HW = H * W

        # --- BatchNorm statistics over the FULL batch (matches torch ordering) ---
        x_s = preds_T + preds_S
        mean_s = jnp.mean(x_s, axis=(0, 2, 3))
        var_s = jnp.var(x_s, axis=(0, 2, 3))
        mean_t = jnp.mean(preds_T, axis=(0, 2, 3))
        var_t = jnp.var(preds_T, axis=(0, 2, 3))
        inv_s = lax.rsqrt(var_s + EPS)
        inv_t = lax.rsqrt(var_t + EPS)

        # --- keep flags instead of a feature gather: static (Nfull,) grid -> one
        #     compiled kernel and no extra HBM traffic for dropped images ---
        keep = [1.0 if int(gt_bboxes[i].shape[0]) != 0 else 0.0 for i in range(Nfull)]
        n_keep = int(sum(keep))
        if n_keep == 0:
            return jnp.float32(0.0)
        kf = jnp.array(keep, dtype=jnp.float32)          # (Nfull,)
        Nk = float(n_keep)

        # --- foreground / background masks (packed as one (N, 2, HW) input) ---
        mask_fg, mask_bg = compute_masks(gt_bboxes, img_metas, H, W)
        masks = jnp.stack([mask_fg.reshape(Nfull, HW), mask_bg.reshape(Nfull, HW)], axis=1)

        # --- lane-dense flattening: (N, C, H, W) -> (N, C, H*W) (free, row-major) ---
        s_flat = preds_S.reshape(Nfull, C, HW)
        t_flat = preds_T.reshape(Nfull, C, HW)

        # --- packed per-channel column params (C, 4): BN mean / inv-std ---
        par_col = jnp.stack([mean_s, inv_s, mean_t, inv_t], axis=1).astype(jnp.float32)

        # --- packed row params (8, C) for the in-kernel MXU channel reductions ---
        row_par = jnp.zeros((8, C), jnp.float32)
        row_par = row_par.at[0].set(jnp.full((C,), 1.0 / (C * self.temp), jnp.float32))
        row_par = row_par.at[1].set(self.w_mask_s)
        row_par = row_par.at[2].set(self.w_mask_t)

        # --- fused per-image Pallas kernel ---
        out = main_pass(s_flat, t_flat, masks, par_col, row_par,
                        self.temp, H, W)                                   # (Nfull, C, 4)

        sum_d = out[:, :, 0]
        ctx_s = out[:, :, 1]
        ctx_t = out[:, :, 2]
        scal = out[:, :, 3]
        fg_s, bg_s = scal[:, 0], scal[:, 1]
        sl1c, sl1s = scal[:, 2], scal[:, 3]
        d2, bce = scal[:, 4], scal[:, 5]

        fg_loss = jnp.sum(kf * fg_s) / Nk
        bg_loss = jnp.sum(kf * bg_s) / Nk
        mask_loss = jnp.sum(kf * sl1c) / (Nk * C) + jnp.sum(kf * sl1s) / (Nk * H * W)

        # relation loss: out = preds + channel_add(context); exact via expansion
        cadd_s = self._channel_add(ctx_s, self.ch_add_s)
        cadd_t = self._channel_add(ctx_t, self.ch_add_t)
        kdiff = kf[:, None] * (cadd_s - cadd_t)       # zeros here (last_zero_init)
        rela1 = (jnp.sum(kf * d2) + 2.0 * jnp.sum(kdiff * sum_d)
                 + float(H * W) * jnp.sum(kdiff * kdiff)) / Nk
        rela2 = (jnp.sum(kf * bce) / (Nk * C * H * W)) / Nk   # BCE mean, then /len(batch)
        rela_loss = rela1 + rela2

        return (self.alpha * fg_loss + self.beta * bg_loss
                + self.gamma * mask_loss + self.llambda * rela_loss)


# ---------------------------------------------------------------------------
if __name__ == "__main__":
    N, C, H, W = 3, 16, 16, 16
    key = jax.random.PRNGKey(0)
    k1, k2 = jax.random.split(key)
    preds_S = jax.random.normal(k1, (N, C, H, W), dtype=jnp.float32)
    preds_T = jax.random.normal(k2, (N, C, H, W), dtype=jnp.float32)

    img_metas = [(64.0, 64.0), (64.0, 64.0), (64.0, 64.0)]   # (img_h, img_w) per image
    gt_bboxes = [
        jnp.array([[4.0, 8.0, 20.0, 28.0],
                   [30.0, 10.0, 50.0, 40.0]], dtype=jnp.float32),
        jnp.array([[10.0, 12.0, 44.0, 52.0]], dtype=jnp.float32),
        jnp.zeros((0, 4), dtype=jnp.float32),                # no boxes -> filtered image
    ]

    loss_mod = XFKDFeatureLossPallas(student_channels=C, teacher_channels=C,
                                     name="xfkd_fpn0")
    loss = loss_mod(preds_S, preds_T, gt_bboxes, img_metas)
    loss = jax.block_until_ready(loss)
    assert bool(jnp.isfinite(loss)), loss
    print("KERNEL_OK")
</pallas_src>

<mosaic_0001>
module attributes {stable_mosaic.version = 11 : i64} {
  func.func @kernel(%arg0: i32, %arg1: memref<1x16x256xf32, #tpu.memory_space<vmem>>, %arg2: memref<1x16x256xf32, #tpu.memory_space<vmem>>, %arg3: memref<1x2x256xf32, #tpu.memory_space<vmem>>, %arg4: memref<16x4xf32, #tpu.memory_space<vmem>>, %arg5: memref<8x16xf32, #tpu.memory_space<vmem>>, %arg6: memref<1x16x4xf32, #tpu.memory_space<vmem>>) attributes {dimension_semantics = [#tpu.dimension_semantics<parallel>], iteration_bounds = array<i64: 3>, scalar_prefetch = 0 : i64, scratch_operands = 0 : i64, tpu.core_type = #tpu.core_type<tc>, window_params = [{transform_indices = @transform_0, window_bounds = array<i64: 1, 16, 256>}, {transform_indices = @transform_1, window_bounds = array<i64: 1, 16, 256>}, {transform_indices = @transform_2, window_bounds = array<i64: 1, 2, 256>}, {pipeline_mode = #tpu.pipeline_mode<synchronous>, transform_indices = @transform_3, window_bounds = array<i64: 16, 4>}, {pipeline_mode = #tpu.pipeline_mode<synchronous>, transform_indices = @transform_4, window_bounds = array<i64: 8, 16>}, {transform_indices = @transform_5, window_bounds = array<i64: 1, 16, 4>}]} {
    %c0 = arith.constant 0 : index
    %c0_0 = arith.constant 0 : index
    %c0_1 = arith.constant 0 : index
    %0 = vector.load %arg1[%c0, %c0_0, %c0_1] : memref<1x16x256xf32, #tpu.memory_space<vmem>>, vector<1x16x256xf32>
    %1 = vector.shape_cast %0 : vector<1x16x256xf32> to vector<16x256xf32>
    %c0_2 = arith.constant 0 : index
    %c0_3 = arith.constant 0 : index
    %c0_4 = arith.constant 0 : index
    %2 = vector.load %arg2[%c0_2, %c0_3, %c0_4] : memref<1x16x256xf32, #tpu.memory_space<vmem>>, vector<1x16x256xf32>
    %3 = vector.shape_cast %2 : vector<1x16x256xf32> to vector<16x256xf32>
    %c0_5 = arith.constant 0 : index
    %c0_6 = arith.constant 0 : index
    %c0_7 = arith.constant 0 : index
    %4 = vector.load %arg3[%c0_5, %c0_6, %c0_7] : memref<1x2x256xf32, #tpu.memory_space<vmem>>, vector<1x2x256xf32>
    %5 = vector.shape_cast %4 : vector<1x2x256xf32> to vector<2x256xf32>
    %c0_8 = arith.constant 0 : index
    %c0_9 = arith.constant 0 : index
    %6 = vector.load %arg4[%c0_8, %c0_9] : memref<16x4xf32, #tpu.memory_space<vmem>>, vector<16x4xf32>
    %c0_10 = arith.constant 0 : index
    %c0_11 = arith.constant 0 : index
    %7 = vector.load %arg5[%c0_10, %c0_11] : memref<8x16xf32, #tpu.memory_space<vmem>>, vector<8x16xf32>
    %8 = vector.extract_strided_slice %5 {offsets = [0, 0], sizes = [1, 256], strides = [1, 1]} : vector<2x256xf32> to vector<1x256xf32>
    %9 = vector.extract_strided_slice %5 {offsets = [1, 0], sizes = [1, 256], strides = [1, 1]} : vector<2x256xf32> to vector<1x256xf32>
    %10 = vector.extract_strided_slice %6 {offsets = [0, 0], sizes = [16, 1], strides = [1, 1]} : vector<16x4xf32> to vector<16x1xf32>
    %11 = vector.extract_strided_slice %6 {offsets = [0, 1], sizes = [16, 1], strides = [1, 1]} : vector<16x4xf32> to vector<16x1xf32>
    %12 = vector.extract_strided_slice %6 {offsets = [0, 2], sizes = [16, 1], strides = [1, 1]} : vector<16x4xf32> to vector<16x1xf32>
    %13 = vector.extract_strided_slice %6 {offsets = [0, 3], sizes = [16, 1], strides = [1, 1]} : vector<16x4xf32> to vector<16x1xf32>
    %14 = arith.addf %3, %1 : vector<16x256xf32>
    %15 = vector.broadcast %10 : vector<16x1xf32> to vector<16x256xf32>
    %16 = arith.subf %14, %15 : vector<16x256xf32>
    %17 = vector.broadcast %11 : vector<16x1xf32> to vector<16x256xf32>
    %18 = arith.mulf %16, %17 : vector<16x256xf32>
    %19 = vector.broadcast %12 : vector<16x1xf32> to vector<16x256xf32>
    %20 = arith.subf %3, %19 : vector<16x256xf32>
    %21 = vector.broadcast %13 : vector<16x1xf32> to vector<16x256xf32>
    %22 = arith.mulf %20, %21 : vector<16x256xf32>
    %23 = math.absf %18 : vector<16x256xf32>
    %24 = math.absf %22 : vector<16x256xf32>
    %cst = arith.constant dense<0.000000e+00> : vector<8x256xf32>
    %25 = tpu.matmul %7, %23, %cst {dimension_numbers = #tpu.dot_dimension_numbers<[1], [0], [0], [1], [0, 0, 1, 1], [], []>} : vector<8x16xf32>, vector<16x256xf32>, vector<8x256xf32> -> vector<8x256xf32>
    %cst_12 = arith.constant dense<0.000000e+00> : vector<8x256xf32>
    %26 = tpu.matmul %7, %24, %cst_12 {dimension_numbers = #tpu.dot_dimension_numbers<[1], [0], [0], [1], [0, 0, 1, 1], [], []>} : vector<8x16xf32>, vector<16x256xf32>, vector<8x256xf32> -> vector<8x256xf32>
    %cst_13 = arith.constant dense<0.000000e+00> : vector<8x256xf32>
    %27 = tpu.matmul %7, %18, %cst_13 {dimension_numbers = #tpu.dot_dimension_numbers<[1], [0], [0], [1], [0, 0, 1, 1], [], []>} : vector<8x16xf32>, vector<16x256xf32>, vector<8x256xf32> -> vector<8x256xf32>
    %cst_14 = arith.constant dense<0.000000e+00> : vector<8x256xf32>
    %28 = tpu.matmul %7, %22, %cst_14 {dimension_numbers = #tpu.dot_dimension_numbers<[1], [0], [0], [1], [0, 0, 1, 1], [], []>} : vector<8x16xf32>, vector<16x256xf32>, vector<8x256xf32> -> vector<8x256xf32>
    %29 = vector.extract_strided_slice %26 {offsets = [0, 0], sizes = [1, 256], strides = [1, 1]} : vector<8x256xf32> to vector<1x256xf32>
    %cst_15 = arith.constant dense<0xFF800000> : vector<1xf32>
    %30 = vector.multi_reduction <maximumf>, %29, %cst_15 [1] : vector<1x256xf32> to vector<1xf32>
    %31 = vector.shape_cast %30 : vector<1xf32> to vector<1x1xf32>
    %32 = vector.broadcast %31 : vector<1x1xf32> to vector<1x256xf32>
    %33 = arith.subf %29, %32 : vector<1x256xf32>
    %34 = math.exp %33 : vector<1x256xf32>
    %cst_16 = arith.constant dense<0.000000e+00> : vector<1xf32>
    %35 = vector.multi_reduction <add>, %34, %cst_16 [1] : vector<1x256xf32> to vector<1xf32>
    %36 = vector.shape_cast %35 : vector<1xf32> to vector<1x1xf32>
    %cst_17 = arith.constant 2.560000e+02 : f32
    %37 = vector.broadcast %cst_17 : f32 to vector<1x1xf32>
    %38 = arith.divf %37, %36 : vector<1x1xf32>
    %39 = vector.broadcast %38 : vector<1x1xf32> to vector<1x256xf32>
    %40 = arith.mulf %34, %39 : vector<1x256xf32>
    %41 = vector.extract_strided_slice %25 {offsets = [0, 0], sizes = [1, 256], strides = [1, 1]} : vector<8x256xf32> to vector<1x256xf32>
    %cst_18 = arith.constant dense<0xFF800000> : vector<1xf32>
    %42 = vector.multi_reduction <maximumf>, %41, %cst_18 [1] : vector<1x256xf32> to vector<1xf32>
    %43 = vector.shape_cast %42 : vector<1xf32> to vector<1x1xf32>
    %44 = vector.broadcast %43 : vector<1x1xf32> to vector<1x256xf32>
    %45 = arith.subf %41, %44 : vector<1x256xf32>
    %46 = math.exp %45 : vector<1x256xf32>
    %cst_19 = arith.constant dense<0.000000e+00> : vector<1xf32>
    %47 = vector.multi_reduction <add>, %46, %cst_19 [1] : vector<1x256xf32> to vector<1xf32>
    %48 = vector.shape_cast %47 : vector<1xf32> to vector<1x1xf32>
    %cst_20 = arith.constant 2.560000e+02 : f32
    %49 = vector.broadcast %cst_20 : f32 to vector<1x1xf32>
    %50 = arith.divf %49, %48 : vector<1x1xf32>
    %51 = vector.broadcast %50 : vector<1x1xf32> to vector<1x256xf32>
    %52 = arith.mulf %46, %51 : vector<1x256xf32>
    %cst_21 = arith.constant dense<0.000000e+00> : vector<16xf32>
    %53 = vector.multi_reduction <add>, %24, %cst_21 [1] : vector<16x256xf32> to vector<16xf32>
    %54 = vector.shape_cast %53 : vector<16xf32> to vector<16x1xf32>
    %cst_22 = arith.constant 2.560000e+02 : f32
    %55 = vector.broadcast %cst_22 : f32 to vector<16x1xf32>
    %56 = arith.divf %54, %55 : vector<16x1xf32>
    %cst_23 = arith.constant 2.000000e+00 : f32
    %57 = vector.broadcast %cst_23 : f32 to vector<16x1xf32>
    %58 = arith.mulf %56, %57 : vector<16x1xf32>
    %cst_24 = arith.constant dense<0xFF800000> : vector<1xf32>
    %59 = vector.multi_reduction <maximumf>, %58, %cst_24 [0] : vector<16x1xf32> to vector<1xf32>
    %60 = vector.shape_cast %59 : vector<1xf32> to vector<1x1xf32>
    %61 = vector.broadcast %60 : vector<1x1xf32> to vector<16x1xf32>
    %62 = arith.subf %58, %61 : vector<16x1xf32>
    %63 = math.exp %62 : vector<16x1xf32>
    %cst_25 = arith.constant dense<0.000000e+00> : vector<1xf32>
    %64 = vector.multi_reduction <add>, %63, %cst_25 [0] : vector<16x1xf32> to vector<1xf32>
    %65 = vector.shape_cast %64 : vector<1xf32> to vector<1x1xf32>
    %cst_26 = arith.constant 1.600000e+01 : f32
    %66 = vector.broadcast %cst_26 : f32 to vector<1x1xf32>
    %67 = arith.divf %66, %65 : vector<1x1xf32>
    %68 = vector.broadcast %67 : vector<1x1xf32> to vector<16x1xf32>
    %69 = arith.mulf %63, %68 : vector<16x1xf32>
    %cst_27 = arith.constant dense<0.000000e+00> : vector<16xf32>
    %70 = vector.multi_reduction <add>, %23, %cst_27 [1] : vector<16x256xf32> to vector<16xf32>
    %71 = vector.shape_cast %70 : vector<16xf32> to vector<16x1xf32>
    %cst_28 = arith.constant 2.560000e+02 : f32
    %72 = vector.broadcast %cst_28 : f32 to vector<16x1xf32>
    %73 = arith.divf %71, %72 : vector<16x1xf32>
    %cst_29 = arith.constant 2.000000e+00 : f32
    %74 = vector.broadcast %cst_29 : f32 to vector<16x1xf32>
    %75 = arith.mulf %73, %74 : vector<16x1xf32>
    %cst_30 = arith.constant dense<0xFF800000> : vector<1xf32>
    %76 = vector.multi_reduction <maximumf>, %75, %cst_30 [0] : vector<16x1xf32> to vector<1xf32>
    %77 = vector.shape_cast %76 : vector<1xf32> to vector<1x1xf32>
    %78 = vector.broadcast %77 : vector<1x1xf32> to vector<16x1xf32>
    %79 = arith.subf %75, %78 : vector<16x1xf32>
    %80 = math.exp %79 : vector<16x1xf32>
    %cst_31 = arith.constant dense<0.000000e+00> : vector<1xf32>
    %81 = vector.multi_reduction <add>, %80, %cst_31 [0] : vector<16x1xf32> to vector<1xf32>
    %82 = vector.shape_cast %81 : vector<1xf32> to vector<1x1xf32>
    %cst_32 = arith.constant 1.600000e+01 : f32
    %83 = vector.broadcast %cst_32 : f32 to vector<1x1xf32>
    %84 = arith.divf %83, %82 : vector<1x1xf32>
    %85 = vector.broadcast %84 : vector<1x1xf32> to vector<16x1xf32>
    %86 = arith.mulf %80, %85 : vector<16x1xf32>
    %87 = arith.subf %18, %22 : vector<16x256xf32>
    %88 = arith.mulf %87, %87 : vector<16x256xf32>
    %89 = vector.broadcast %69 : vector<16x1xf32> to vector<16x256xf32>
    %90 = arith.mulf %88, %89 : vector<16x256xf32>
    %cst_33 = arith.constant dense<0.000000e+00> : vector<256xf32>
    %91 = vector.multi_reduction <add>, %90, %cst_33 [0] : vector<16x256xf32> to vector<256xf32>
    %92 = vector.shape_cast %91 : vector<256xf32> to vector<1x256xf32>
    %93 = arith.mulf %92, %40 : vector<1x256xf32>
    %94 = arith.mulf %93, %8 : vector<1x256xf32>
    %95 = vector.shape_cast %94 : vector<1x256xf32> to vector<1x1x256xf32>
    %cst_34 = arith.constant dense<0.000000e+00> : vector<1xf32>
    %96 = vector.multi_reduction <add>, %95, %cst_34 [1, 2] : vector<1x1x256xf32> to vector<1xf32>
    %97 = vector.shape_cast %96 : vector<1xf32> to vector<1x1x1xf32>
    %98 = vector.extract %97[0, 0, 0] : f32 from vector<1x1x1xf32>
    %99 = arith.mulf %93, %9 : vector<1x256xf32>
    %100 = vector.shape_cast %99 : vector<1x256xf32> to vector<1x1x256xf32>
    %cst_35 = arith.constant dense<0.000000e+00> : vector<1xf32>
    %101 = vector.multi_reduction <add>, %100, %cst_35 [1, 2] : vector<1x1x256xf32> to vector<1xf32>
    %102 = vector.shape_cast %101 : vector<1xf32> to vector<1x1x1xf32>
    %103 = vector.extract %102[0, 0, 0] : f32 from vector<1x1x1xf32>
    %104 = vector.shape_cast %88 : vector<16x256xf32> to vector<1x16x256xf32>
    %cst_36 = arith.constant dense<0.000000e+00> : vector<1xf32>
    %105 = vector.multi_reduction <add>, %104, %cst_36 [1, 2] : vector<1x16x256xf32> to vector<1xf32>
    %106 = vector.shape_cast %105 : vector<1xf32> to vector<1x1x1xf32>
    %107 = vector.extract %106[0, 0, 0] : f32 from vector<1x1x1xf32>
    %cst_37 = arith.constant dense<0.000000e+00> : vector<16xf32>
    %108 = vector.multi_reduction <add>, %87, %cst_37 [1] : vector<16x256xf32> to vector<16xf32>
    %109 = vector.shape_cast %108 : vector<16xf32> to vector<16x1xf32>
    %110 = math.absf %86 : vector<16x1xf32>
    %cst_38 = arith.constant 1.000000e+00 : f32
    %111 = vector.broadcast %cst_38 : f32 to vector<16x1xf32>
    %112 = arith.cmpf olt, %110, %111 : vector<16x1xf32>
    %cst_39 = arith.constant 5.000000e-01 : f32
    %113 = vector.broadcast %cst_39 : f32 to vector<16x1xf32>
    %114 = arith.mulf %113, %86 : vector<16x1xf32>
    %115 = arith.mulf %114, %86 : vector<16x1xf32>
    %cst_40 = arith.constant 5.000000e-01 : f32
    %116 = vector.broadcast %cst_40 : f32 to vector<16x1xf32>
    %117 = arith.subf %110, %116 : vector<16x1xf32>
    %118 = arith.select %112, %115, %117 : vector<16x1xi1>, vector<16x1xf32>
    %119 = vector.shape_cast %118 : vector<16x1xf32> to vector<1x16x1xf32>
    %cst_41 = arith.constant dense<0.000000e+00> : vector<1xf32>
    %120 = vector.multi_reduction <add>, %119, %cst_41 [1, 2] : vector<1x16x1xf32> to vector<1xf32>
    %121 = vector.shape_cast %120 : vector<1xf32> to vector<1x1x1xf32>
    %122 = vector.extract %121[0, 0, 0] : f32 from vector<1x1x1xf32>
    %123 = math.absf %52 : vector<1x256xf32>
    %cst_42 = arith.constant 1.000000e+00 : f32
    %124 = vector.broadcast %cst_42 : f32 to vector<1x256xf32>
    %125 = arith.cmpf olt, %123, %124 : vector<1x256xf32>
    %cst_43 = arith.constant 5.000000e-01 : f32
    %126 = vector.broadcast %cst_43 : f32 to vector<1x256xf32>
    %127 = arith.mulf %126, %52 : vector<1x256xf32>
    %128 = arith.mulf %127, %52 : vector<1x256xf32>
    %cst_44 = arith.constant 5.000000e-01 : f32
    %129 = vector.broadcast %cst_44 : f32 to vector<1x256xf32>
    %130 = arith.subf %123, %129 : vector<1x256xf32>
    %131 = arith.select %125, %128, %130 : vector<1x256xi1>, vector<1x256xf32>
    %132 = vector.shape_cast %131 : vector<1x256xf32> to vector<1x1x256xf32>
    %cst_45 = arith.constant dense<0.000000e+00> : vector<1xf32>
    %133 = vector.multi_reduction <add>, %132, %cst_45 [1, 2] : vector<1x1x256xf32> to vector<1xf32>
    %134 = vector.shape_cast %133 : vector<1xf32> to vector<1x1x1xf32>
    %135 = vector.extract %134[0, 0, 0] : f32 from vector<1x1x1xf32>
    %136 = vector.extract_strided_slice %27 {offsets = [1, 0], sizes = [1, 256], strides = [1, 1]} : vector<8x256xf32> to vector<1x256xf32>
    %cst_46 = arith.constant dense<0xFF800000> : vector<1xf32>
    %137 = vector.multi_reduction <maximumf>, %136, %cst_46 [1] : vector<1x256xf32> to vector<1xf32>
    %138 = vector.shape_cast %137 : vector<1xf32> to vector<1x1xf32>
    %139 = vector.broadcast %138 : vector<1x1xf32> to vector<1x256xf32>
    %140 = arith.subf %136, %139 : vector<1x256xf32>
    %141 = math.exp %140 : vector<1x256xf32>
    %cst_47 = arith.constant dense<0.000000e+00> : vector<1xf32>
    %142 = vector.multi_reduction <add>, %141, %cst_47 [1] : vector<1x256xf32> to vector<1xf32>
    %143 = vector.shape_cast %142 : vector<1xf32> to vector<1x1xf32>
    %cst_48 = arith.constant 1.000000e+00 : f32
    %144 = vector.broadcast %cst_48 : f32 to vector<1x1xf32>
    %145 = arith.divf %144, %143 : vector<1x1xf32>
    %146 = vector.broadcast %145 : vector<1x1xf32> to vector<1x256xf32>
    %147 = arith.mulf %141, %146 : vector<1x256xf32>
    %148 = vector.broadcast %147 : vector<1x256xf32> to vector<16x256xf32>
    %149 = arith.mulf %18, %148 : vector<16x256xf32>
    %cst_49 = arith.constant dense<0.000000e+00> : vector<16xf32>
    %150 = vector.multi_reduction <add>, %149, %cst_49 [1] : vector<16x256xf32> to vector<16xf32>
    %151 = vector.shape_cast %150 : vector<16xf32> to vector<16x1xf32>
    %152 = vector.extract_strided_slice %28 {offsets = [2, 0], sizes = [1, 256], strides = [1, 1]} : vector<8x256xf32> to vector<1x256xf32>
    %cst_50 = arith.constant dense<0xFF800000> : vector<1xf32>
    %153 = vector.multi_reduction <maximumf>, %152, %cst_50 [1] : vector<1x256xf32> to vector<1xf32>
    %154 = vector.shape_cast %153 : vector<1xf32> to vector<1x1xf32>
    %155 = vector.broadcast %154 : vector<1x1xf32> to vector<1x256xf32>
    %156 = arith.subf %152, %155 : vector<1x256xf32>
    %157 = math.exp %156 : vector<1x256xf32>
    %cst_51 = arith.constant dense<0.000000e+00> : vector<1xf32>
    %158 = vector.multi_reduction <add>, %157, %cst_51 [1] : vector<1x256xf32> to vector<1xf32>
    %159 = vector.shape_cast %158 : vector<1xf32> to vector<1x1xf32>
    %cst_52 = arith.constant 1.000000e+00 : f32
    %160 = vector.broadcast %cst_52 : f32 to vector<1x1xf32>
    %161 = arith.divf %160, %159 : vector<1x1xf32>
    %162 = vector.broadcast %161 : vector<1x1xf32> to vector<1x256xf32>
    %163 = arith.mulf %157, %162 : vector<1x256xf32>
    %164 = vector.broadcast %163 : vector<1x256xf32> to vector<16x256xf32>
    %165 = arith.mulf %22, %164 : vector<16x256xf32>
    %cst_53 = arith.constant dense<0.000000e+00> : vector<16xf32>
    %166 = vector.multi_reduction <add>, %165, %cst_53 [1] : vector<16x256xf32> to vector<16xf32>
    %167 = vector.shape_cast %166 : vector<16xf32> to vector<16x1xf32>
    %cst_54 = arith.constant dense<0xFF800000> : vector<16xf32>
    %168 = vector.multi_reduction <maximumf>, %18, %cst_54 [1] : vector<16x256xf32> to vector<16xf32>
    %169 = vector.shape_cast %168 : vector<16xf32> to vector<16x1xf32>
    %170 = vector.broadcast %169 : vector<16x1xf32> to vector<16x256xf32>
    %171 = arith.subf %18, %170 : vector<16x256xf32>
    %172 = math.exp %171 : vector<16x256xf32>
    %cst_55 = arith.constant dense<0xFF800000> : vector<16xf32>
    %173 = vector.multi_reduction <maximumf>, %22, %cst_55 [1] : vector<16x256xf32> to vector<16xf32>
    %174 = vector.shape_cast %173 : vector<16xf32> to vector<16x1xf32>
    %175 = vector.broadcast %174 : vector<16x1xf32> to vector<16x256xf32>
    %176 = arith.subf %22, %175 : vector<16x256xf32>
    %177 = math.exp %176 : vector<16x256xf32>
    %178 = vector.extract_strided_slice %172 {offsets = [0, 0], sizes = [16, 16], strides = [1, 1]} : vector<16x256xf32> to vector<16x16xf32>
    %179 = vector.extract_strided_slice %177 {offsets = [0, 0], sizes = [16, 16], strides = [1, 1]} : vector<16x256xf32> to vector<16x16xf32>
    %180 = vector.extract_strided_slice %172 {offsets = [0, 16], sizes = [16, 16], strides = [1, 1]} : vector<16x256xf32> to vector<16x16xf32>
    %181 = arith.addf %178, %180 : vector<16x16xf32>
    %182 = vector.extract_strided_slice %177 {offsets = [0, 16], sizes = [16, 16], strides = [1, 1]} : vector<16x256xf32> to vector<16x16xf32>
    %183 = arith.addf %179, %182 : vector<16x16xf32>
    %184 = vector.extract_strided_slice %172 {offsets = [0, 32], sizes = [16, 16], strides = [1, 1]} : vector<16x256xf32> to vector<16x16xf32>
    %185 = arith.addf %181, %184 : vector<16x16xf32>
    %186 = vector.extract_strided_slice %177 {offsets = [0, 32], sizes = [16, 16], strides = [1, 1]} : vector<16x256xf32> to vector<16x16xf32>
    %187 = arith.addf %183, %186 : vector<16x16xf32>
    %188 = vector.extract_strided_slice %172 {offsets = [0, 48], sizes = [16, 16], strides = [1, 1]} : vector<16x256xf32> to vector<16x16xf32>
    %189 = arith.addf %185, %188 : vector<16x16xf32>
    %190 = vector.extract_strided_slice %177 {offsets = [0, 48], sizes = [16, 16], strides = [1, 1]} : vector<16x256xf32> to vector<16x16xf32>
    %191 = arith.addf %187, %190 : vector<16x16xf32>
    %192 = vector.extract_strided_slice %172 {offsets = [0, 64], sizes = [16, 16], strides = [1, 1]} : vector<16x256xf32> to vector<16x16xf32>
    %193 = arith.addf %189, %192 : vector<16x16xf32>
    %194 = vector.extract_strided_slice %177 {offsets = [0, 64], sizes = [16, 16], strides = [1, 1]} : vector<16x256xf32> to vector<16x16xf32>
    %195 = arith.addf %191, %194 : vector<16x16xf32>
    %196 = vector.extract_strided_slice %172 {offsets = [0, 80], sizes = [16, 16], strides = [1, 1]} : vector<16x256xf32> to vector<16x16xf32>
    %197 = arith.addf %193, %196 : vector<16x16xf32>
    %198 = vector.extract_strided_slice %177 {offsets = [0, 80], sizes = [16, 16], strides = [1, 1]} : vector<16x256xf32> to vector<16x16xf32>
    %199 = arith.addf %195, %198 : vector<16x16xf32>
    %200 = vector.extract_strided_slice %172 {offsets = [0, 96], sizes = [16, 16], strides = [1, 1]} : vector<16x256xf32> to vector<16x16xf32>
    %201 = arith.addf %197, %200 : vector<16x16xf32>
    %202 = vector.extract_strided_slice %177 {offsets = [0, 96], sizes = [16, 16], strides = [1, 1]} : vector<16x256xf32> to vector<16x16xf32>
    %203 = arith.addf %199, %202 : vector<16x16xf32>
    %204 = vector.extract_strided_slice %172 {offsets = [0, 112], sizes = [16, 16], strides = [1, 1]} : vector<16x256xf32> to vector<16x16xf32>
    %205 = arith.addf %201, %204 : vector<16x16xf32>
    %206 = vector.extract_strided_slice %177 {offsets = [0, 112], sizes = [16, 16], strides = [1, 1]} : vector<16x256xf32> to vector<16x16xf32>
    %207 = arith.addf %203, %206 : vector<16x16xf32>
    %208 = vector.extract_strided_slice %172 {offsets = [0, 128], sizes = [16, 16], strides = [1, 1]} : vector<16x256xf32> to vector<16x16xf32>
    %209 = arith.addf %205, %208 : vector<16x16xf32>
    %210 = vector.extract_strided_slice %177 {offsets = [0, 128], sizes = [16, 16], strides = [1, 1]} : vector<16x256xf32> to vector<16x16xf32>
    %211 = arith.addf %207, %210 : vector<16x16xf32>
    %212 = vector.extract_strided_slice %172 {offsets = [0, 144], sizes = [16, 16], strides = [1, 1]} : vector<16x256xf32> to vector<16x16xf32>
    %213 = arith.addf %209, %212 : vector<16x16xf32>
    %214 = vector.extract_strided_slice %177 {offsets = [0, 144], sizes = [16, 16], strides = [1, 1]} : vector<16x256xf32> to vector<16x16xf32>
    %215 = arith.addf %211, %214 : vector<16x16xf32>
    %216 = vector.extract_strided_slice %172 {offsets = [0, 160], sizes = [16, 16], strides = [1, 1]} : vector<16x256xf32> to vector<16x16xf32>
    %217 = arith.addf %213, %216 : vector<16x16xf32>
    %218 = vector.extract_strided_slice %177 {offsets = [0, 160], sizes = [16, 16], strides = [1, 1]} : vector<16x256xf32> to vector<16x16xf32>
    %219 = arith.addf %215, %218 : vector<16x16xf32>
    %220 = vector.extract_strided_slice %172 {offsets = [0, 176], sizes = [16, 16], strides = [1, 1]} : vector<16x256xf32> to vector<16x16xf32>
    %221 = arith.addf %217, %220 : vector<16x16xf32>
    %222 = vector.extract_strided_slice %177 {offsets = [0, 176], sizes = [16, 16], strides = [1, 1]} : vector<16x256xf32> to vector<16x16xf32>
    %223 = arith.addf %219, %222 : vector<16x16xf32>
    %224 = vector.extract_strided_slice %172 {offsets = [0, 192], sizes = [16, 16], strides = [1, 1]} : vector<16x256xf32> to vector<16x16xf32>
    %225 = arith.addf %221, %224 : vector<16x16xf32>
    %226 = vector.extract_strided_slice %177 {offsets = [0, 192], sizes = [16, 16], strides = [1, 1]} : vector<16x256xf32> to vector<16x16xf32>
    %227 = arith.addf %223, %226 : vector<16x16xf32>
    %228 = vector.extract_strided_slice %172 {offsets = [0, 208], sizes = [16, 16], strides = [1, 1]} : vector<16x256xf32> to vector<16x16xf32>
    %229 = arith.addf %225, %228 : vector<16x16xf32>
    %230 = vector.extract_strided_slice %177 {offsets = [0, 208], sizes = [16, 16], strides = [1, 1]} : vector<16x256xf32> to vector<16x16xf32>
    %231 = arith.addf %227, %230 : vector<16x16xf32>
    %232 = vector.extract_strided_slice %172 {offsets = [0, 224], sizes = [16, 16], strides = [1, 1]} : vector<16x256xf32> to vector<16x16xf32>
    %233 = arith.addf %229, %232 : vector<16x16xf32>
    %234 = vector.extract_strided_slice %177 {offsets = [0, 224], sizes = [16, 16], strides = [1, 1]} : vector<16x256xf32> to vector<16x16xf32>
    %235 = arith.addf %231, %234 : vector<16x16xf32>
    %236 = vector.extract_strided_slice %172 {offsets = [0, 240], sizes = [16, 16], strides = [1, 1]} : vector<16x256xf32> to vector<16x16xf32>
    %237 = arith.addf %233, %236 : vector<16x16xf32>
    %238 = vector.extract_strided_slice %177 {offsets = [0, 240], sizes = [16, 16], strides = [1, 1]} : vector<16x256xf32> to vector<16x16xf32>
    %239 = arith.addf %235, %238 : vector<16x16xf32>
    %cst_56 = arith.constant 1.000000e-30 : f32
    %240 = vector.broadcast %cst_56 : f32 to vector<16x16xf32>
    %241 = arith.maximumf %237, %240 : vector<16x16xf32>
    %cst_57 = arith.constant 1.000000e-30 : f32
    %242 = vector.broadcast %cst_57 : f32 to vector<16x16xf32>
    %243 = arith.maximumf %239, %242 : vector<16x16xf32>
    %cst_58 = arith.constant 1.000000e+00 : f32
    %244 = vector.broadcast %cst_58 : f32 to vector<16x16xf32>
    %245 = arith.divf %244, %241 : vector<16x16xf32>
    %cst_59 = arith.constant 1.000000e+00 : f32
    %246 = vector.broadcast %cst_59 : f32 to vector<16x16xf32>
    %247 = arith.divf %246, %243 : vector<16x16xf32>
    %248 = math.log %241 : vector<16x16xf32>
    %cst_60 = arith.constant 0.000000e+00 : f32
    %249 = vector.broadcast %cst_60 : f32 to vector<16x16xf32>
    %250 = vector.extract_strided_slice %177 {offsets = [0, 0], sizes = [16, 16], strides = [1, 1]} : vector<16x256xf32> to vector<16x16xf32>
    %251 = arith.mulf %250, %247 : vector<16x16xf32>
    %cst_61 = arith.constant 1.000000e+00 : f32
    %252 = vector.broadcast %cst_61 : f32 to vector<16x16xf32>
    %253 = arith.minimumf %251, %252 : vector<16x16xf32>
    %254 = vector.extract_strided_slice %172 {offsets = [0, 0], sizes = [16, 16], strides = [1, 1]} : vector<16x256xf32> to vector<16x16xf32>
    %255 = arith.mulf %254, %245 : vector<16x16xf32>
    %cst_62 = arith.constant 1.000000e+00 : f32
    %256 = vector.broadcast %cst_62 : f32 to vector<16x16xf32>
    %257 = arith.minimumf %255, %256 : vector<16x16xf32>
    %258 = vector.extract_strided_slice %171 {offsets = [0, 0], sizes = [16, 16], strides = [1, 1]} : vector<16x256xf32> to vector<16x16xf32>
    %259 = arith.subf %258, %248 : vector<16x16xf32>
    %cst_63 = arith.constant -1.000000e+02 : f32
    %260 = vector.broadcast %cst_63 : f32 to vector<16x16xf32>
    %261 = arith.maximumf %259, %260 : vector<16x16xf32>
    %cst_64 = arith.constant 1.000000e+00 : f32
    %262 = vector.broadcast %cst_64 : f32 to vector<16x16xf32>
    %263 = arith.subf %262, %257 : vector<16x16xf32>
    %264 = math.log %263 : vector<16x16xf32>
    %cst_65 = arith.constant -1.000000e+02 : f32
    %265 = vector.broadcast %cst_65 : f32 to vector<16x16xf32>
    %266 = arith.maximumf %264, %265 : vector<16x16xf32>
    %267 = arith.mulf %253, %261 : vector<16x16xf32>
    %cst_66 = arith.constant 1.000000e+00 : f32
    %268 = vector.broadcast %cst_66 : f32 to vector<16x16xf32>
    %269 = arith.subf %268, %253 : vector<16x16xf32>
    %270 = arith.mulf %269, %266 : vector<16x16xf32>
    %271 = arith.addf %267, %270 : vector<16x16xf32>
    %272 = arith.addf %249, %271 : vector<16x16xf32>
    %273 = vector.extract_strided_slice %177 {offsets = [0, 16], sizes = [16, 16], strides = [1, 1]} : vector<16x256xf32> to vector<16x16xf32>
    %274 = arith.mulf %273, %247 : vector<16x16xf32>
    %cst_67 = arith.constant 1.000000e+00 : f32
    %275 = vector.broadcast %cst_67 : f32 to vector<16x16xf32>
    %276 = arith.minimumf %274, %275 : vector<16x16xf32>
    %277 = vector.extract_strided_slice %172 {offsets = [0, 16], sizes = [16, 16], strides = [1, 1]} : vector<16x256xf32> to vector<16x16xf32>
    %278 = arith.mulf %277, %245 : vector<16x16xf32>
    %cst_68 = arith.constant 1.000000e+00 : f32
    %279 = vector.broadcast %cst_68 : f32 to vector<16x16xf32>
    %280 = arith.minimumf %278, %279 : vector<16x16xf32>
    %281 = vector.extract_strided_slice %171 {offsets = [0, 16], sizes = [16, 16], strides = [1, 1]} : vector<16x256xf32> to vector<16x16xf32>
    %282 = arith.subf %281, %248 : vector<16x16xf32>
    %cst_69 = arith.constant -1.000000e+02 : f32
    %283 = vector.broadcast %cst_69 : f32 to vector<16x16xf32>
    %284 = arith.maximumf %282, %283 : vector<16x16xf32>
    %cst_70 = arith.constant 1.000000e+00 : f32
    %285 = vector.broadcast %cst_70 : f32 to vector<16x16xf32>
    %286 = arith.subf %285, %280 : vector<16x16xf32>
    %287 = math.log %286 : vector<16x16xf32>
    %cst_71 = arith.constant -1.000000e+02 : f32
    %288 = vector.broadcast %cst_71 : f32 to vector<16x16xf32>
    %289 = arith.maximumf %287, %288 : vector<16x16xf32>
    %290 = arith.mulf %276, %284 : vector<16x16xf32>
    %cst_72 = arith.constant 1.000000e+00 : f32
    %291 = vector.broadcast %cst_72 : f32 to vector<16x16xf32>
    %292 = arith.subf %291, %276 : vector<16x16xf32>
    %293 = arith.mulf %292, %289 : vector<16x16xf32>
    %294 = arith.addf %290, %293 : vector<16x16xf32>
    %295 = arith.addf %272, %294 : vector<16x16xf32>
    %296 = vector.extract_strided_slice %177 {offsets = [0, 32], sizes = [16, 16], strides = [1, 1]} : vector<16x256xf32> to vector<16x16xf32>
    %297 = arith.mulf %296, %247 : vector<16x16xf32>
    %cst_73 = arith.constant 1.000000e+00 : f32
    %298 = vector.broadcast %cst_73 : f32 to vector<16x16xf32>
    %299 = arith.minimumf %297, %298 : vector<16x16xf32>
    %300 = vector.extract_strided_slice %172 {offsets = [0, 32], sizes = [16, 16], strides = [1, 1]} : vector<16x256xf32> to vector<16x16xf32>
    %301 = arith.mulf %300, %245 : vector<16x16xf32>
    %cst_74 = arith.constant 1.000000e+00 : f32
    %302 = vector.broadcast %cst_74 : f32 to vector<16x16xf32>
    %303 = arith.minimumf %301, %302 : vector<16x16xf32>
    %304 = vector.extract_strided_slice %171 {offsets = [0, 32], sizes = [16, 16], strides = [1, 1]} : vector<16x256xf32> to vector<16x16xf32>
    %305 = arith.subf %304, %248 : vector<16x16xf32>
    %cst_75 = arith.constant -1.000000e+02 : f32
    %306 = vector.broadcast %cst_75 : f32 to vector<16x16xf32>
    %307 = arith.maximumf %305, %306 : vector<16x16xf32>
    %cst_76 = arith.constant 1.000000e+00 : f32
    %308 = vector.broadcast %cst_76 : f32 to vector<16x16xf32>
    %309 = arith.subf %308, %303 : vector<16x16xf32>
    %310 = math.log %309 : vector<16x16xf32>
    %cst_77 = arith.constant -1.000000e+02 : f32
    %311 = vector.broadcast %cst_77 : f32 to vector<16x16xf32>
    %312 = arith.maximumf %310, %311 : vector<16x16xf32>
    %313 = arith.mulf %299, %307 : vector<16x16xf32>
    %cst_78 = arith.constant 1.000000e+00 : f32
    %314 = vector.broadcast %cst_78 : f32 to vector<16x16xf32>
    %315 = arith.subf %314, %299 : vector<16x16xf32>
    %316 = arith.mulf %315, %312 : vector<16x16xf32>
    %317 = arith.addf %313, %316 : vector<16x16xf32>
    %318 = arith.addf %295, %317 : vector<16x16xf32>
    %319 = vector.extract_strided_slice %177 {offsets = [0, 48], sizes = [16, 16], strides = [1, 1]} : vector<16x256xf32> to vector<16x16xf32>
    %320 = arith.mulf %319, %247 : vector<16x16xf32>
    %cst_79 = arith.constant 1.000000e+00 : f32
    %321 = vector.broadcast %cst_79 : f32 to vector<16x16xf32>
    %322 = arith.minimumf %320, %321 : vector<16x16xf32>
    %323 = vector.extract_strided_slice %172 {offsets = [0, 48], sizes = [16, 16], strides = [1, 1]} : vector<16x256xf32> to vector<16x16xf32>
    %324 = arith.mulf %323, %245 : vector<16x16xf32>
    %cst_80 = arith.constant 1.000000e+00 : f32
    %325 = vector.broadcast %cst_80 : f32 to vector<16x16xf32>
    %326 = arith.minimumf %324, %325 : vector<16x16xf32>
    %327 = vector.extract_strided_slice %171 {offsets = [0, 48], sizes = [16, 16], strides = [1, 1]} : vector<16x256xf32> to vector<16x16xf32>
    %328 = arith.subf %327, %248 : vector<16x16xf32>
    %cst_81 = arith.constant -1.000000e+02 : f32
    %329 = vector.broadcast %cst_81 : f32 to vector<16x16xf32>
    %330 = arith.maximumf %328, %329 : vector<16x16xf32>
    %cst_82 = arith.constant 1.000000e+00 : f32
    %331 = vector.broadcast %cst_82 : f32 to vector<16x16xf32>
    %332 = arith.subf %331, %326 : vector<16x16xf32>
    %333 = math.log %332 : vector<16x16xf32>
    %cst_83 = arith.constant -1.000000e+02 : f32
    %334 = vector.broadcast %cst_83 : f32 to vector<16x16xf32>
    %335 = arith.maximumf %333, %334 : vector<16x16xf32>
    %336 = arith.mulf %322, %330 : vector<16x16xf32>
    %cst_84 = arith.constant 1.000000e+00 : f32
    %337 = vector.broadcast %cst_84 : f32 to vector<16x16xf32>
    %338 = arith.subf %337, %322 : vector<16x16xf32>
    %339 = arith.mulf %338, %335 : vector<16x16xf32>
    %340 = arith.addf %336, %339 : vector<16x16xf32>
    %341 = arith.addf %318, %340 : vector<16x16xf32>
    %342 = vector.extract_strided_slice %177 {offsets = [0, 64], sizes = [16, 16], strides = [1, 1]} : vector<16x256xf32> to vector<16x16xf32>
    %343 = arith.mulf %342, %247 : vector<16x16xf32>
    %cst_85 = arith.constant 1.000000e+00 : f32
    %344 = vector.broadcast %cst_85 : f32 to vector<16x16xf32>
    %345 = arith.minimumf %343, %344 : vector<16x16xf32>
    %346 = vector.extract_strided_slice %172 {offsets = [0, 64], sizes = [16, 16], strides = [1, 1]} : vector<16x256xf32> to vector<16x16xf32>
    %347 = arith.mulf %346, %245 : vector<16x16xf32>
    %cst_86 = arith.constant 1.000000e+00 : f32
    %348 = vector.broadcast %cst_86 : f32 to vector<16x16xf32>
    %349 = arith.minimumf %347, %348 : vector<16x16xf32>
    %350 = vector.extract_strided_slice %171 {offsets = [0, 64], sizes = [16, 16], strides = [1, 1]} : vector<16x256xf32> to vector<16x16xf32>
    %351 = arith.subf %350, %248 : vector<16x16xf32>
    %cst_87 = arith.constant -1.000000e+02 : f32
    %352 = vector.broadcast %cst_87 : f32 to vector<16x16xf32>
    %353 = arith.maximumf %351, %352 : vector<16x16xf32>
    %cst_88 = arith.constant 1.000000e+00 : f32
    %354 = vector.broadcast %cst_88 : f32 to vector<16x16xf32>
    %355 = arith.subf %354, %349 : vector<16x16xf32>
    %356 = math.log %355 : vector<16x16xf32>
    %cst_89 = arith.constant -1.000000e+02 : f32
    %357 = vector.broadcast %cst_89 : f32 to vector<16x16xf32>
    %358 = arith.maximumf %356, %357 : vector<16x16xf32>
    %359 = arith.mulf %345, %353 : vector<16x16xf32>
    %cst_90 = arith.constant 1.000000e+00 : f32
    %360 = vector.broadcast %cst_90 : f32 to vector<16x16xf32>
    %361 = arith.subf %360, %345 : vector<16x16xf32>
    %362 = arith.mulf %361, %358 : vector<16x16xf32>
    %363 = arith.addf %359, %362 : vector<16x16xf32>
    %364 = arith.addf %341, %363 : vector<16x16xf32>
    %365 = vector.extract_strided_slice %177 {offsets = [0, 80], sizes = [16, 16], strides = [1, 1]} : vector<16x256xf32> to vector<16x16xf32>
    %366 = arith.mulf %365, %247 : vector<16x16xf32>
    %cst_91 = arith.constant 1.000000e+00 : f32
    %367 = vector.broadcast %cst_91 : f32 to vector<16x16xf32>
    %368 = arith.minimumf %366, %367 : vector<16x16xf32>
    %369 = vector.extract_strided_slice %172 {offsets = [0, 80], sizes = [16, 16], strides = [1, 1]} : vector<16x256xf32> to vector<16x16xf32>
    %370 = arith.mulf %369, %245 : vector<16x16xf32>
    %cst_92 = arith.constant 1.000000e+00 : f32
    %371 = vector.broadcast %cst_92 : f32 to vector<16x16xf32>
    %372 = arith.minimumf %370, %371 : vector<16x16xf32>
    %373 = vector.extract_strided_slice %171 {offsets = [0, 80], sizes = [16, 16], strides = [1, 1]} : vector<16x256xf32> to vector<16x16xf32>
    %374 = arith.subf %373, %248 : vector<16x16xf32>
    %cst_93 = arith.constant -1.000000e+02 : f32
    %375 = vector.broadcast %cst_93 : f32 to vector<16x16xf32>
    %376 = arith.maximumf %374, %375 : vector<16x16xf32>
    %cst_94 = arith.constant 1.000000e+00 : f32
    %377 = vector.broadcast %cst_94 : f32 to vector<16x16xf32>
    %378 = arith.subf %377, %372 : vector<16x16xf32>
    %379 = math.log %378 : vector<16x16xf32>
    %cst_95 = arith.constant -1.000000e+02 : f32
    %380 = vector.broadcast %cst_95 : f32 to vector<16x16xf32>
    %381 = arith.maximumf %379, %380 : vector<16x16xf32>
    %382 = arith.mulf %368, %376 : vector<16x16xf32>
    %cst_96 = arith.constant 1.000000e+00 : f32
    %383 = vector.broadcast %cst_96 : f32 to vector<16x16xf32>
    %384 = arith.subf %383, %368 : vector<16x16xf32>
    %385 = arith.mulf %384, %381 : vector<16x16xf32>
    %386 = arith.addf %382, %385 : vector<16x16xf32>
    %387 = arith.addf %364, %386 : vector<16x16xf32>
    %388 = vector.extract_strided_slice %177 {offsets = [0, 96], sizes = [16, 16], strides = [1, 1]} : vector<16x256xf32> to vector<16x16xf32>
    %389 = arith.mulf %388, %247 : vector<16x16xf32>
    %cst_97 = arith.constant 1.000000e+00 : f32
    %390 = vector.broadcast %cst_97 : f32 to vector<16x16xf32>
    %391 = arith.minimumf %389, %390 : vector<16x16xf32>
    %392 = vector.extract_strided_slice %172 {offsets = [0, 96], sizes = [16, 16], strides = [1, 1]} : vector<16x256xf32> to vector<16x16xf32>
    %393 = arith.mulf %392, %245 : vector<16x16xf32>
    %cst_98 = arith.constant 1.000000e+00 : f32
    %394 = vector.broadcast %cst_98 : f32 to vector<16x16xf32>
    %395 = arith.minimumf %393, %394 : vector<16x16xf32>
    %396 = vector.extract_strided_slice %171 {offsets = [0, 96], sizes = [16, 16], strides = [1, 1]} : vector<16x256xf32> to vector<16x16xf32>
    %397 = arith.subf %396, %248 : vector<16x16xf32>
    %cst_99 = arith.constant -1.000000e+02 : f32
    %398 = vector.broadcast %cst_99 : f32 to vector<16x16xf32>
    %399 = arith.maximumf %397, %398 : vector<16x16xf32>
    %cst_100 = arith.constant 1.000000e+00 : f32
    %400 = vector.broadcast %cst_100 : f32 to vector<16x16xf32>
    %401 = arith.subf %400, %395 : vector<16x16xf32>
    %402 = math.log %401 : vector<16x16xf32>
    %cst_101 = arith.constant -1.000000e+02 : f32
    %403 = vector.broadcast %cst_101 : f32 to vector<16x16xf32>
    %404 = arith.maximumf %402, %403 : vector<16x16xf32>
    %405 = arith.mulf %391, %399 : vector<16x16xf32>
    %cst_102 = arith.constant 1.000000e+00 : f32
    %406 = vector.broadcast %cst_102 : f32 to vector<16x16xf32>
    %407 = arith.subf %406, %391 : vector<16x16xf32>
    %408 = arith.mulf %407, %404 : vector<16x16xf32>
    %409 = arith.addf %405, %408 : vector<16x16xf32>
    %410 = arith.addf %387, %409 : vector<16x16xf32>
    %411 = vector.extract_strided_slice %177 {offsets = [0, 112], sizes = [16, 16], strides = [1, 1]} : vector<16x256xf32> to vector<16x16xf32>
    %412 = arith.mulf %411, %247 : vector<16x16xf32>
    %cst_103 = arith.constant 1.000000e+00 : f32
    %413 = vector.broadcast %cst_103 : f32 to vector<16x16xf32>
    %414 = arith.minimumf %412, %413 : vector<16x16xf32>
    %415 = vector.extract_strided_slice %172 {offsets = [0, 112], sizes = [16, 16], strides = [1, 1]} : vector<16x256xf32> to vector<16x16xf32>
    %416 = arith.mulf %415, %245 : vector<16x16xf32>
    %cst_104 = arith.constant 1.000000e+00 : f32
    %417 = vector.broadcast %cst_104 : f32 to vector<16x16xf32>
    %418 = arith.minimumf %416, %417 : vector<16x16xf32>
    %419 = vector.extract_strided_slice %171 {offsets = [0, 112], sizes = [16, 16], strides = [1, 1]} : vector<16x256xf32> to vector<16x16xf32>
    %420 = arith.subf %419, %248 : vector<16x16xf32>
    %cst_105 = arith.constant -1.000000e+02 : f32
    %421 = vector.broadcast %cst_105 : f32 to vector<16x16xf32>
    %422 = arith.maximumf %420, %421 : vector<16x16xf32>
    %cst_106 = arith.constant 1.000000e+00 : f32
    %423 = vector.broadcast %cst_106 : f32 to vector<16x16xf32>
    %424 = arith.subf %423, %418 : vector<16x16xf32>
    %425 = math.log %424 : vector<16x16xf32>
    %cst_107 = arith.constant -1.000000e+02 : f32
    %426 = vector.broadcast %cst_107 : f32 to vector<16x16xf32>
    %427 = arith.maximumf %425, %426 : vector<16x16xf32>
    %428 = arith.mulf %414, %422 : vector<16x16xf32>
    %cst_108 = arith.constant 1.000000e+00 : f32
    %429 = vector.broadcast %cst_108 : f32 to vector<16x16xf32>
    %430 = arith.subf %429, %414 : vector<16x16xf32>
    %431 = arith.mulf %430, %427 : vector<16x16xf32>
    %432 = arith.addf %428, %431 : vector<16x16xf32>
    %433 = arith.addf %410, %432 : vector<16x16xf32>
    %434 = vector.extract_strided_slice %177 {offsets = [0, 128], sizes = [16, 16], strides = [1, 1]} : vector<16x256xf32> to vector<16x16xf32>
    %435 = arith.mulf %434, %247 : vector<16x16xf32>
    %cst_109 = arith.constant 1.000000e+00 : f32
    %436 = vector.broadcast %cst_109 : f32 to vector<16x16xf32>
    %437 = arith.minimumf %435, %436 : vector<16x16xf32>
    %438 = vector.extract_strided_slice %172 {offsets = [0, 128], sizes = [16, 16], strides = [1, 1]} : vector<16x256xf32> to vector<16x16xf32>
    %439 = arith.mulf %438, %245 : vector<16x16xf32>
    %cst_110 = arith.constant 1.000000e+00 : f32
    %440 = vector.broadcast %cst_110 : f32 to vector<16x16xf32>
    %441 = arith.minimumf %439, %440 : vector<16x16xf32>
    %442 = vector.extract_strided_slice %171 {offsets = [0, 128], sizes = [16, 16], strides = [1, 1]} : vector<16x256xf32> to vector<16x16xf32>
    %443 = arith.subf %442, %248 : vector<16x16xf32>
    %cst_111 = arith.constant -1.000000e+02 : f32
    %444 = vector.broadcast %cst_111 : f32 to vector<16x16xf32>
    %445 = arith.maximumf %443, %444 : vector<16x16xf32>
    %cst_112 = arith.constant 1.000000e+00 : f32
    %446 = vector.broadcast %cst_112 : f32 to vector<16x16xf32>
    %447 = arith.subf %446, %441 : vector<16x16xf32>
    %448 = math.log %447 : vector<16x16xf32>
    %cst_113 = arith.constant -1.000000e+02 : f32
    %449 = vector.broadcast %cst_113 : f32 to vector<16x16xf32>
    %450 = arith.maximumf %448, %449 : vector<16x16xf32>
    %451 = arith.mulf %437, %445 : vector<16x16xf32>
    %cst_114 = arith.constant 1.000000e+00 : f32
    %452 = vector.broadcast %cst_114 : f32 to vector<16x16xf32>
    %453 = arith.subf %452, %437 : vector<16x16xf32>
    %454 = arith.mulf %453, %450 : vector<16x16xf32>
    %455 = arith.addf %451, %454 : vector<16x16xf32>
    %456 = arith.addf %433, %455 : vector<16x16xf32>
    %457 = vector.extract_strided_slice %177 {offsets = [0, 144], sizes = [16, 16], strides = [1, 1]} : vector<16x256xf32> to vector<16x16xf32>
    %458 = arith.mulf %457, %247 : vector<16x16xf32>
    %cst_115 = arith.constant 1.000000e+00 : f32
    %459 = vector.broadcast %cst_115 : f32 to vector<16x16xf32>
    %460 = arith.minimumf %458, %459 : vector<16x16xf32>
    %461 = vector.extract_strided_slice %172 {offsets = [0, 144], sizes = [16, 16], strides = [1, 1]} : vector<16x256xf32> to vector<16x16xf32>
    %462 = arith.mulf %461, %245 : vector<16x16xf32>
    %cst_116 = arith.constant 1.000000e+00 : f32
    %463 = vector.broadcast %cst_116 : f32 to vector<16x16xf32>
    %464 = arith.minimumf %462, %463 : vector<16x16xf32>
    %465 = vector.extract_strided_slice %171 {offsets = [0, 144], sizes = [16, 16], strides = [1, 1]} : vector<16x256xf32> to vector<16x16xf32>
    %466 = arith.subf %465, %248 : vector<16x16xf32>
    %cst_117 = arith.constant -1.000000e+02 : f32
    %467 = vector.broadcast %cst_117 : f32 to vector<16x16xf32>
    %468 = arith.maximumf %466, %467 : vector<16x16xf32>
    %cst_118 = arith.constant 1.000000e+00 : f32
    %469 = vector.broadcast %cst_118 : f32 to vector<16x16xf32>
    %470 = arith.subf %469, %464 : vector<16x16xf32>
    %471 = math.log %470 : vector<16x16xf32>
    %cst_119 = arith.constant -1.000000e+02 : f32
    %472 = vector.broadcast %cst_119 : f32 to vector<16x16xf32>
    %473 = arith.maximumf %471, %472 : vector<16x16xf32>
    %474 = arith.mulf %460, %468 : vector<16x16xf32>
    %cst_120 = arith.constant 1.000000e+00 : f32
    %475 = vector.broadcast %cst_120 : f32 to vector<16x16xf32>
    %476 = arith.subf %475, %460 : vector<16x16xf32>
    %477 = arith.mulf %476, %473 : vector<16x16xf32>
    %478 = arith.addf %474, %477 : vector<16x16xf32>
    %479 = arith.addf %456, %478 : vector<16x16xf32>
    %480 = vector.extract_strided_slice %177 {offsets = [0, 160], sizes = [16, 16], strides = [1, 1]} : vector<16x256xf32> to vector<16x16xf32>
    %481 = arith.mulf %480, %247 : vector<16x16xf32>
    %cst_121 = arith.constant 1.000000e+00 : f32
    %482 = vector.broadcast %cst_121 : f32 to vector<16x16xf32>
    %483 = arith.minimumf %481, %482 : vector<16x16xf32>
    %484 = vector.extract_strided_slice %172 {offsets = [0, 160], sizes = [16, 16], strides = [1, 1]} : vector<16x256xf32> to vector<16x16xf32>
    %485 = arith.mulf %484, %245 : vector<16x16xf32>
    %cst_122 = arith.constant 1.000000e+00 : f32
    %486 = vector.broadcast %cst_122 : f32 to vector<16x16xf32>
    %487 = arith.minimumf %485, %486 : vector<16x16xf32>
    %488 = vector.extract_strided_slice %171 {offsets = [0, 160], sizes = [16, 16], strides = [1, 1]} : vector<16x256xf32> to vector<16x16xf32>
    %489 = arith.subf %488, %248 : vector<16x16xf32>
    %cst_123 = arith.constant -1.000000e+02 : f32
    %490 = vector.broadcast %cst_123 : f32 to vector<16x16xf32>
    %491 = arith.maximumf %489, %490 : vector<16x16xf32>
    %cst_124 = arith.constant 1.000000e+00 : f32
    %492 = vector.broadcast %cst_124 : f32 to vector<16x16xf32>
    %493 = arith.subf %492, %487 : vector<16x16xf32>
    %494 = math.log %493 : vector<16x16xf32>
    %cst_125 = arith.constant -1.000000e+02 : f32
    %495 = vector.broadcast %cst_125 : f32 to vector<16x16xf32>
    %496 = arith.maximumf %494, %495 : vector<16x16xf32>
    %497 = arith.mulf %483, %491 : vector<16x16xf32>
    %cst_126 = arith.constant 1.000000e+00 : f32
    %498 = vector.broadcast %cst_126 : f32 to vector<16x16xf32>
    %499 = arith.subf %498, %483 : vector<16x16xf32>
    %500 = arith.mulf %499, %496 : vector<16x16xf32>
    %501 = arith.addf %497, %500 : vector<16x16xf32>
    %502 = arith.addf %479, %501 : vector<16x16xf32>
    %503 = vector.extract_strided_slice %177 {offsets = [0, 176], sizes = [16, 16], strides = [1, 1]} : vector<16x256xf32> to vector<16x16xf32>
    %504 = arith.mulf %503, %247 : vector<16x16xf32>
    %cst_127 = arith.constant 1.000000e+00 : f32
    %505 = vector.broadcast %cst_127 : f32 to vector<16x16xf32>
    %506 = arith.minimumf %504, %505 : vector<16x16xf32>
    %507 = vector.extract_strided_slice %172 {offsets = [0, 176], sizes = [16, 16], strides = [1, 1]} : vector<16x256xf32> to vector<16x16xf32>
    %508 = arith.mulf %507, %245 : vector<16x16xf32>
    %cst_128 = arith.constant 1.000000e+00 : f32
    %509 = vector.broadcast %cst_128 : f32 to vector<16x16xf32>
    %510 = arith.minimumf %508, %509 : vector<16x16xf32>
    %511 = vector.extract_strided_slice %171 {offsets = [0, 176], sizes = [16, 16], strides = [1, 1]} : vector<16x256xf32> to vector<16x16xf32>
    %512 = arith.subf %511, %248 : vector<16x16xf32>
    %cst_129 = arith.constant -1.000000e+02 : f32
    %513 = vector.broadcast %cst_129 : f32 to vector<16x16xf32>
    %514 = arith.maximumf %512, %513 : vector<16x16xf32>
    %cst_130 = arith.constant 1.000000e+00 : f32
    %515 = vector.broadcast %cst_130 : f32 to vector<16x16xf32>
    %516 = arith.subf %515, %510 : vector<16x16xf32>
    %517 = math.log %516 : vector<16x16xf32>
    %cst_131 = arith.constant -1.000000e+02 : f32
    %518 = vector.broadcast %cst_131 : f32 to vector<16x16xf32>
    %519 = arith.maximumf %517, %518 : vector<16x16xf32>
    %520 = arith.mulf %506, %514 : vector<16x16xf32>
    %cst_132 = arith.constant 1.000000e+00 : f32
    %521 = vector.broadcast %cst_132 : f32 to vector<16x16xf32>
    %522 = arith.subf %521, %506 : vector<16x16xf32>
    %523 = arith.mulf %522, %519 : vector<16x16xf32>
    %524 = arith.addf %520, %523 : vector<16x16xf32>
    %525 = arith.addf %502, %524 : vector<16x16xf32>
    %526 = vector.extract_strided_slice %177 {offsets = [0, 192], sizes = [16, 16], strides = [1, 1]} : vector<16x256xf32> to vector<16x16xf32>
    %527 = arith.mulf %526, %247 : vector<16x16xf32>
    %cst_133 = arith.constant 1.000000e+00 : f32
    %528 = vector.broadcast %cst_133 : f32 to vector<16x16xf32>
    %529 = arith.minimumf %527, %528 : vector<16x16xf32>
    %530 = vector.extract_strided_slice %172 {offsets = [0, 192], sizes = [16, 16], strides = [1, 1]} : vector<16x256xf32> to vector<16x16xf32>
    %531 = arith.mulf %530, %245 : vector<16x16xf32>
    %cst_134 = arith.constant 1.000000e+00 : f32
    %532 = vector.broadcast %cst_134 : f32 to vector<16x16xf32>
    %533 = arith.minimumf %531, %532 : vector<16x16xf32>
    %534 = vector.extract_strided_slice %171 {offsets = [0, 192], sizes = [16, 16], strides = [1, 1]} : vector<16x256xf32> to vector<16x16xf32>
    %535 = arith.subf %534, %248 : vector<16x16xf32>
    %cst_135 = arith.constant -1.000000e+02 : f32
    %536 = vector.broadcast %cst_135 : f32 to vector<16x16xf32>
    %537 = arith.maximumf %535, %536 : vector<16x16xf32>
    %cst_136 = arith.constant 1.000000e+00 : f32
    %538 = vector.broadcast %cst_136 : f32 to vector<16x16xf32>
    %539 = arith.subf %538, %533 : vector<16x16xf32>
    %540 = math.log %539 : vector<16x16xf32>
    %cst_137 = arith.constant -1.000000e+02 : f32
    %541 = vector.broadcast %cst_137 : f32 to vector<16x16xf32>
    %542 = arith.maximumf %540, %541 : vector<16x16xf32>
    %543 = arith.mulf %529, %537 : vector<16x16xf32>
    %cst_138 = arith.constant 1.000000e+00 : f32
    %544 = vector.broadcast %cst_138 : f32 to vector<16x16xf32>
    %545 = arith.subf %544, %529 : vector<16x16xf32>
    %546 = arith.mulf %545, %542 : vector<16x16xf32>
    %547 = arith.addf %543, %546 : vector<16x16xf32>
    %548 = arith.addf %525, %547 : vector<16x16xf32>
    %549 = vector.extract_strided_slice %177 {offsets = [0, 208], sizes = [16, 16], strides = [1, 1]} : vector<16x256xf32> to vector<16x16xf32>
    %550 = arith.mulf %549, %247 : vector<16x16xf32>
    %cst_139 = arith.constant 1.000000e+00 : f32
    %551 = vector.broadcast %cst_139 : f32 to vector<16x16xf32>
    %552 = arith.minimumf %550, %551 : vector<16x16xf32>
    %553 = vector.extract_strided_slice %172 {offsets = [0, 208], sizes = [16, 16], strides = [1, 1]} : vector<16x256xf32> to vector<16x16xf32>
    %554 = arith.mulf %553, %245 : vector<16x16xf32>
    %cst_140 = arith.constant 1.000000e+00 : f32
    %555 = vector.broadcast %cst_140 : f32 to vector<16x16xf32>
    %556 = arith.minimumf %554, %555 : vector<16x16xf32>
    %557 = vector.extract_strided_slice %171 {offsets = [0, 208], sizes = [16, 16], strides = [1, 1]} : vector<16x256xf32> to vector<16x16xf32>
    %558 = arith.subf %557, %248 : vector<16x16xf32>
    %cst_141 = arith.constant -1.000000e+02 : f32
    %559 = vector.broadcast %cst_141 : f32 to vector<16x16xf32>
    %560 = arith.maximumf %558, %559 : vector<16x16xf32>
    %cst_142 = arith.constant 1.000000e+00 : f32
    %561 = vector.broadcast %cst_142 : f32 to vector<16x16xf32>
    %562 = arith.subf %561, %556 : vector<16x16xf32>
    %563 = math.log %562 : vector<16x16xf32>
    %cst_143 = arith.constant -1.000000e+02 : f32
    %564 = vector.broadcast %cst_143 : f32 to vector<16x16xf32>
    %565 = arith.maximumf %563, %564 : vector<16x16xf32>
    %566 = arith.mulf %552, %560 : vector<16x16xf32>
    %cst_144 = arith.constant 1.000000e+00 : f32
    %567 = vector.broadcast %cst_144 : f32 to vector<16x16xf32>
    %568 = arith.subf %567, %552 : vector<16x16xf32>
    %569 = arith.mulf %568, %565 : vector<16x16xf32>
    %570 = arith.addf %566, %569 : vector<16x16xf32>
    %571 = arith.addf %548, %570 : vector<16x16xf32>
    %572 = vector.extract_strided_slice %177 {offsets = [0, 224], sizes = [16, 16], strides = [1, 1]} : vector<16x256xf32> to vector<16x16xf32>
    %573 = arith.mulf %572, %247 : vector<16x16xf32>
    %cst_145 = arith.constant 1.000000e+00 : f32
    %574 = vector.broadcast %cst_145 : f32 to vector<16x16xf32>
    %575 = arith.minimumf %573, %574 : vector<16x16xf32>
    %576 = vector.extract_strided_slice %172 {offsets = [0, 224], sizes = [16, 16], strides = [1, 1]} : vector<16x256xf32> to vector<16x16xf32>
    %577 = arith.mulf %576, %245 : vector<16x16xf32>
    %cst_146 = arith.constant 1.000000e+00 : f32
    %578 = vector.broadcast %cst_146 : f32 to vector<16x16xf32>
    %579 = arith.minimumf %577, %578 : vector<16x16xf32>
    %580 = vector.extract_strided_slice %171 {offsets = [0, 224], sizes = [16, 16], strides = [1, 1]} : vector<16x256xf32> to vector<16x16xf32>
    %581 = arith.subf %580, %248 : vector<16x16xf32>
    %cst_147 = arith.constant -1.000000e+02 : f32
    %582 = vector.broadcast %cst_147 : f32 to vector<16x16xf32>
    %583 = arith.maximumf %581, %582 : vector<16x16xf32>
    %cst_148 = arith.constant 1.000000e+00 : f32
    %584 = vector.broadcast %cst_148 : f32 to vector<16x16xf32>
    %585 = arith.subf %584, %579 : vector<16x16xf32>
    %586 = math.log %585 : vector<16x16xf32>
    %cst_149 = arith.constant -1.000000e+02 : f32
    %587 = vector.broadcast %cst_149 : f32 to vector<16x16xf32>
    %588 = arith.maximumf %586, %587 : vector<16x16xf32>
    %589 = arith.mulf %575, %583 : vector<16x16xf32>
    %cst_150 = arith.constant 1.000000e+00 : f32
    %590 = vector.broadcast %cst_150 : f32 to vector<16x16xf32>
    %591 = arith.subf %590, %575 : vector<16x16xf32>
    %592 = arith.mulf %591, %588 : vector<16x16xf32>
    %593 = arith.addf %589, %592 : vector<16x16xf32>
    %594 = arith.addf %571, %593 : vector<16x16xf32>
    %595 = vector.extract_strided_slice %177 {offsets = [0, 240], sizes = [16, 16], strides = [1, 1]} : vector<16x256xf32> to vector<16x16xf32>
    %596 = arith.mulf %595, %247 : vector<16x16xf32>
    %cst_151 = arith.constant 1.000000e+00 : f32
    %597 = vector.broadcast %cst_151 : f32 to vector<16x16xf32>
    %598 = arith.minimumf %596, %597 : vector<16x16xf32>
    %599 = vector.extract_strided_slice %172 {offsets = [0, 240], sizes = [16, 16], strides = [1, 1]} : vector<16x256xf32> to vector<16x16xf32>
    %600 = arith.mulf %599, %245 : vector<16x16xf32>
    %cst_152 = arith.constant 1.000000e+00 : f32
    %601 = vector.broadcast %cst_152 : f32 to vector<16x16xf32>
    %602 = arith.minimumf %600, %601 : vector<16x16xf32>
    %603 = vector.extract_strided_slice %171 {offsets = [0, 240], sizes = [16, 16], strides = [1, 1]} : vector<16x256xf32> to vector<16x16xf32>
    %604 = arith.subf %603, %248 : vector<16x16xf32>
    %cst_153 = arith.constant -1.000000e+02 : f32
    %605 = vector.broadcast %cst_153 : f32 to vector<16x16xf32>
    %606 = arith.maximumf %604, %605 : vector<16x16xf32>
    %cst_154 = arith.constant 1.000000e+00 : f32
    %607 = vector.broadcast %cst_154 : f32 to vector<16x16xf32>
    %608 = arith.subf %607, %602 : vector<16x16xf32>
    %609 = math.log %608 : vector<16x16xf32>
    %cst_155 = arith.constant -1.000000e+02 : f32
    %610 = vector.broadcast %cst_155 : f32 to vector<16x16xf32>
    %611 = arith.maximumf %609, %610 : vector<16x16xf32>
    %612 = arith.mulf %598, %606 : vector<16x16xf32>
    %cst_156 = arith.constant 1.000000e+00 : f32
    %613 = vector.broadcast %cst_156 : f32 to vector<16x16xf32>
    %614 = arith.subf %613, %598 : vector<16x16xf32>
    %615 = arith.mulf %614, %611 : vector<16x16xf32>
    %616 = arith.addf %612, %615 : vector<16x16xf32>
    %617 = arith.addf %594, %616 : vector<16x16xf32>
    %618 = vector.shape_cast %617 : vector<16x16xf32> to vector<1x16x16xf32>
    %cst_157 = arith.constant dense<0.000000e+00> : vector<1xf32>
    %619 = vector.multi_reduction <add>, %618, %cst_157 [1, 2] : vector<1x16x16xf32> to vector<1xf32>
    %620 = vector.shape_cast %619 : vector<1xf32> to vector<1x1x1xf32>
    %621 = vector.extract %620[0, 0, 0] : f32 from vector<1x1x1xf32>
    %cst_158 = arith.constant 0.000000e+00 : f32
    %622 = arith.subf %cst_158, %621 : f32
    %623 = vector.shape_cast %109 : vector<16x1xf32> to vector<1x16x1xf32>
    %c0_159 = arith.constant 0 : index
    %c0_160 = arith.constant 0 : index
    %c0_161 = arith.constant 0 : index
    %624 = vector.load %arg6[%c0_159, %c0_160, %c0_161] : memref<1x16x4xf32, #tpu.memory_space<vmem>>, vector<1x16x1xf32>
    tpu.vector_store %arg6[%c0_159, %c0_160, %c0_161], %623 {strides = array<i32>} : memref<1x16x4xf32, #tpu.memory_space<vmem>>, vector<1x16x1xf32>,
    %625 = vector.shape_cast %151 : vector<16x1xf32> to vector<1x16x1xf32>
    %c0_162 = arith.constant 0 : index
    %c0_163 = arith.constant 0 : index
    %c1 = arith.constant 1 : index
    %626 = vector.load %arg6[%c0_162, %c0_163, %c1] : memref<1x16x4xf32, #tpu.memory_space<vmem>>, vector<1x16x1xf32>
    tpu.vector_store %arg6[%c0_162, %c0_163, %c1], %625 {strides = array<i32>} : memref<1x16x4xf32, #tpu.memory_space<vmem>>, vector<1x16x1xf32>,
    %627 = vector.shape_cast %167 : vector<16x1xf32> to vector<1x16x1xf32>
    %c0_164 = arith.constant 0 : index
    %c0_165 = arith.constant 0 : index
    %c2 = arith.constant 2 : index
    %628 = vector.load %arg6[%c0_164, %c0_165, %c2] : memref<1x16x4xf32, #tpu.memory_space<vmem>>, vector<1x16x1xf32>
    tpu.vector_store %arg6[%c0_164, %c0_165, %c2], %627 {strides = array<i32>} : memref<1x16x4xf32, #tpu.memory_space<vmem>>, vector<1x16x1xf32>,
    %629 = tpu.iota {dimensions = array<i32: 0>} : vector<16x1xi32>
    %c0_i32 = arith.constant 0 : i32
    %630 = vector.broadcast %c0_i32 : i32 to vector<16x1xi32>
    %631 = arith.cmpi eq, %629, %630 : vector<16x1xi32>
    %cst_166 = arith.constant 0.000000e+00 : f32
    %632 = vector.broadcast %98 : f32 to vector<16x1xf32>
    %633 = vector.broadcast %cst_166 : f32 to vector<16x1xf32>
    %634 = arith.select %631, %632, %633 : vector<16x1xi1>, vector<16x1xf32>
    %c1_i32 = arith.constant 1 : i32
    %635 = vector.broadcast %c1_i32 : i32 to vector<16x1xi32>
    %636 = arith.cmpi eq, %629, %635 : vector<16x1xi32>
    %cst_167 = arith.constant 0.000000e+00 : f32
    %637 = vector.broadcast %103 : f32 to vector<16x1xf32>
    %638 = vector.broadcast %cst_167 : f32 to vector<16x1xf32>
    %639 = arith.select %636, %637, %638 : vector<16x1xi1>, vector<16x1xf32>
    %640 = arith.addf %634, %639 : vector<16x1xf32>
    %c2_i32 = arith.constant 2 : i32
    %641 = vector.broadcast %c2_i32 : i32 to vector<16x1xi32>
    %642 = arith.cmpi eq, %629, %641 : vector<16x1xi32>
    %cst_168 = arith.constant 0.000000e+00 : f32
    %643 = vector.broadcast %122 : f32 to vector<16x1xf32>
    %644 = vector.broadcast %cst_168 : f32 to vector<16x1xf32>
    %645 = arith.select %642, %643, %644 : vector<16x1xi1>, vector<16x1xf32>
    %646 = arith.addf %640, %645 : vector<16x1xf32>
    %c3_i32 = arith.constant 3 : i32
    %647 = vector.broadcast %c3_i32 : i32 to vector<16x1xi32>
    %648 = arith.cmpi eq, %629, %647 : vector<16x1xi32>
    %cst_169 = arith.constant 0.000000e+00 : f32
    %649 = vector.broadcast %135 : f32 to vector<16x1xf32>
    %650 = vector.broadcast %cst_169 : f32 to vector<16x1xf32>
    %651 = arith.select %648, %649, %650 : vector<16x1xi1>, vector<16x1xf32>
    %652 = arith.addf %646, %651 : vector<16x1xf32>
    %c4_i32 = arith.constant 4 : i32
    %653 = vector.broadcast %c4_i32 : i32 to vector<16x1xi32>
    %654 = arith.cmpi eq, %629, %653 : vector<16x1xi32>
    %cst_170 = arith.constant 0.000000e+00 : f32
    %655 = vector.broadcast %107 : f32 to vector<16x1xf32>
    %656 = vector.broadcast %cst_170 : f32 to vector<16x1xf32>
    %657 = arith.select %654, %655, %656 : vector<16x1xi1>, vector<16x1xf32>
    %658 = arith.addf %652, %657 : vector<16x1xf32>
    %c5_i32 = arith.constant 5 : i32
    %659 = vector.broadcast %c5_i32 : i32 to vector<16x1xi32>
    %660 = arith.cmpi eq, %629, %659 : vector<16x1xi32>
    %cst_171 = arith.constant 0.000000e+00 : f32
    %661 = vector.broadcast %622 : f32 to vector<16x1xf32>
    %662 = vector.broadcast %cst_171 : f32 to vector<16x1xf32>
    %663 = arith.select %660, %661, %662 : vector<16x1xi1>, vector<16x1xf32>
    %664 = arith.addf %658, %663 : vector<16x1xf32>
    %665 = vector.shape_cast %664 : vector<16x1xf32> to vector<1x16x1xf32>
    %c0_172 = arith.constant 0 : index
    %c0_173 = arith.constant 0 : index
    %c3 = arith.constant 3 : index
    %666 = vector.load %arg6[%c0_172, %c0_173, %c3] : memref<1x16x4xf32, #tpu.memory_space<vmem>>, vector<1x16x1xf32>
    tpu.vector_store %arg6[%c0_172, %c0_173, %c3], %665 {strides = array<i32>} : memref<1x16x4xf32, #tpu.memory_space<vmem>>, vector<1x16x1xf32>,
    return
  }
  func.func @transform_0(%arg0: i32) -> (i32, i32, i32) {
    %c0_i32 = arith.constant 0 : i32
    %c0_i32_0 = arith.constant 0 : i32
    %c0_i32_1 = arith.constant 0 : i32
    return %arg0, %c0_i32, %c0_i32_0 : i32, i32, i32
  }
  func.func @transform_1(%arg0: i32) -> (i32, i32, i32) {
    %c0_i32 = arith.constant 0 : i32
    %c0_i32_0 = arith.constant 0 : i32
    %c0_i32_1 = arith.constant 0 : i32
    return %arg0, %c0_i32, %c0_i32_0 : i32, i32, i32
  }
  func.func @transform_2(%arg0: i32) -> (i32, i32, i32) {
    %c0_i32 = arith.constant 0 : i32
    %c0_i32_0 = arith.constant 0 : i32
    %c0_i32_1 = arith.constant 0 : i32
    return %arg0, %c0_i32, %c0_i32_0 : i32, i32, i32
  }
  func.func @transform_3(%arg0: i32) -> (i32, i32) {
    %c0_i32 = arith.constant 0 : i32
    %c0_i32_0 = arith.constant 0 : i32
    %c0_i32_1 = arith.constant 0 : i32
    return %c0_i32, %c0_i32_0 : i32, i32
  }
  func.func @transform_4(%arg0: i32) -> (i32, i32) {
    %c0_i32 = arith.constant 0 : i32
    %c0_i32_0 = arith.constant 0 : i32
    %c0_i32_1 = arith.constant 0 : i32
    return %c0_i32, %c0_i32_0 : i32, i32
  }
  func.func @transform_5(%arg0: i32) -> (i32, i32, i32) {
    %c0_i32 = arith.constant 0 : i32
    %c0_i32_0 = arith.constant 0 : i32
    %c0_i32_1 = arith.constant 0 : i32
    return %arg0, %c0_i32, %c0_i32_0 : i32, i32, i32
  }
}

</mosaic_0001>

<llo_original>
// kernel: tpu_custom_call.1
$region0: #{tpu_custom_call.1}
  #allocation0 [shape = 'u32[]', space=smem, size = 0x4, offset = 0x4, fixed_abs, tag = 'smem constant byte address 0x4 - core index']
  #allocation1 [shape = 'u32[144,128]{1,0:T(1,128)}', space=vmem, size = 0x12000, scoped, tag = 'internal scratch']
  %s0 = inlined_call_operand.hbm [shape: f32[3,16,256], index: 0, kind: input, shape index: {}]
  %s1 = inlined_call_operand.hbm [shape: f32[3,16,256], index: 1, kind: input, shape index: {}]
  %s2 = inlined_call_operand.vmem [shape: f32[3,2,256], index: 2, kind: input, shape index: {}]
  %s3 = inlined_call_operand.vmem [shape: f32[16,4], index: 3, kind: input, shape index: {}]
  %s4 = inlined_call_operand.vmem [shape: f32[8,16], index: 4, kind: input, shape index: {}]
  %s5 = inlined_call_operand.vmem [shape: f32[3,16,4], index: 5, kind: output, shape index: {}]
  %s6 = sld [smem:[#allocation0]]
  $region61: #{tpu_custom_call.1} parent=0
    _
  %s8 = ssub.s32 1, %s6
  %s9 = scalar_select 0, %s8, %s6
  $region1: #{tpu_custom_call.1} parent=0
    #allocation2 [shape = 'u8[32768]{0}', space=vmem, size = 0x8000, scoped, tag = 'input window, operand 0']
    #allocation3 [shape = 's32[2]{0}', space=sflag, size = 0x8, scoped, tag = 'scoped memory for tpu_custom_call.1']
    #allocation4 [shape = 'u8[32768]{0}', space=vmem, size = 0x8000, scoped, tag = 'input window, operand 1']
    #allocation5 [shape = 's32[2]{0}', space=sflag, size = 0x8, scoped, tag = 'scoped memory for tpu_custom_call.1']
    %10 = vsyncpa [#allocation3], 0
    %s11 = scalar_lea.sflag [#allocation3], 1
    %12 = vsyncpa %s11, 0
    %13 = vsyncpa [#allocation5], 0
    %s14 = scalar_lea.sflag [#allocation5], 1
    %15 = vsyncpa %s14, 0
    loop: start=0, step=1, limit=5
    $region2: #{tpu_custom_call.1} parent=1 // loop_pre_header
      _
    $region3: #{tpu_custom_call.1} parent=1 // loop_header
      %s17 = sphi 0, %s21
      %p18 = scmp.ge.s32.totalorder %s17, 5
      %s27 = sphi 0, %s29
      %s30 = sphi 0, %s27
      %s31 = sphi 0, %s30
      %s47 = sphi 0, %s31
      %s53 = sphi 0, %s55
      %s56 = sphi 0, %s53
      %s57 = sphi 0, %s56
      %s73 = sphi 0, %s57
      %s79 = sphi 0, %s81
      %s82 = sphi 0, %s79
      %s83 = sphi 0, %s82
      %s99 = sphi 0, %s83
      %s103 = sphi 0, %s103
      %s105 = sphi 0, %s103
      %s106 = sphi 0, %s105
      %s120 = sphi 0, %s106
      %s124 = sphi 0, %s124
      %s126 = sphi 0, %s124
      %s127 = sphi 0, %s126
      %s141 = sphi 0, %s127
      %s147 = sphi 0, %s149
      %s150 = sphi 0, %s147
      %s151 = sphi 0, %s150
      %s167 = sphi 0, %s151
    $region4: #{tpu_custom_call.1} parent=1 // loop_header_branch
      %20 = sbr.rel (%p18) target = $region8
    $region5: #{tpu_custom_call.1} parent=1 // loop_body
      %s22 = ssub.s32 %s17, 1
      %s23 = ssub.s32 %s17, 2
      %s24 = sadd.s32 %s17, 1
      %s25 = ssub.s32 %s17, %s24
      %p26 = scmp.eq.s32.totalorder %s25, 0
      %s28 = sadd.s32 %s27, 1
      %s29 = scalar_select %p26, %s27, %s28
      %p32 = pneg %p26
      %p33 = scmp.eq.s32.totalorder %s17, 2
      %p34 = por %p32, %p33
      %p35 = scmp.ne.s32.totalorder %s27, %s30
      %p36 = scmp.eq.s32.totalorder %s17, 0
      %p37 = por %p35, %p36
      %p38 = scmp.ne.s32.totalorder %s27, %s30
      %p39 = scmp.eq.s32.totalorder %s22, 2
      %p40 = por %p38, %p39
      %p41 = scmp.ne.s32.totalorder %s30, %s31
      %p42 = scmp.eq.s32.totalorder %s22, 0
      %p43 = por %p41, %p42
      %p44 = scmp.ne.s32.totalorder %s30, %s31
      %p45 = scmp.eq.s32.totalorder %s23, 2
      %p46 = por %p44, %p45
      %p48 = scmp.ne.s32.totalorder %s31, %s47
      %p49 = scmp.eq.s32.totalorder %s23, 0
      %p50 = por %p48, %p49
      %s51 = ssub.s32 %s17, %s24
      %p52 = scmp.eq.s32.totalorder %s51, 0
      %s54 = sadd.s32 %s53, 1
      %s55 = scalar_select %p52, %s53, %s54
      %p58 = pneg %p52
      %p59 = scmp.eq.s32.totalorder %s17, 2
      %p60 = por %p58, %p59
      %p61 = scmp.ne.s32.totalorder %s53, %s56
      %p62 = scmp.eq.s32.totalorder %s17, 0
      %p63 = por %p61, %p62
      %p64 = scmp.ne.s32.totalorder %s53, %s56
      %p65 = scmp.eq.s32.totalorder %s22, 2
      %p66 = por %p64, %p65
      %p67 = scmp.ne.s32.totalorder %s56, %s57
      %p68 = scmp.eq.s32.totalorder %s22, 0
      %p69 = por %p67, %p68
      %p70 = scmp.ne.s32.totalorder %s56, %s57
      %p71 = scmp.eq.s32.totalorder %s23, 2
      %p72 = por %p70, %p71
      %p74 = scmp.ne.s32.totalorder %s57, %s73
      %p75 = scmp.eq.s32.totalorder %s23, 0
      %p76 = por %p74, %p75
      %s77 = ssub.s32 %s17, %s24
      %p78 = scmp.eq.s32.totalorder %s77, 0
      %s80 = sadd.s32 %s79, 1
      %s81 = scalar_select %p78, %s79, %s80
      %p84 = pneg %p78
      %p85 = scmp.eq.s32.totalorder %s17, 2
      %p86 = por %p84, %p85
      %p87 = scmp.ne.s32.totalorder %s79, %s82
      %p88 = scmp.eq.s32.totalorder %s17, 0
      %p89 = por %p87, %p88
      %p90 = scmp.ne.s32.totalorder %s79, %s82
      %p91 = scmp.eq.s32.totalorder %s22, 2
      %p92 = por %p90, %p91
      %p93 = scmp.ne.s32.totalorder %s82, %s83
      %p94 = scmp.eq.s32.totalorder %s22, 0
      %p95 = por %p93, %p94
      %p96 = scmp.ne.s32.totalorder %s82, %s83
      %p97 = scmp.eq.s32.totalorder %s23, 2
      %p98 = por %p96, %p97
      %p100 = scmp.ne.s32.totalorder %s83, %s99
      %p101 = scmp.eq.s32.totalorder %s23, 0
      %p102 = por %p100, %p101
      %s104 = sadd.s32 %s103, 1
      %p107 = scmp.eq.s32.totalorder %s17, 2
      %p108 = scmp.ne.s32.totalorder %s103, %s105
      %p109 = scmp.eq.s32.totalorder %s17, 0
      %p110 = por %p108, %p109
      %p111 = scmp.ne.s32.totalorder %s103, %s105
      %p112 = scmp.eq.s32.totalorder %s22, 2
      %p113 = por %p111, %p112
      %p114 = scmp.ne.s32.totalorder %s105, %s106
      %p115 = scmp.eq.s32.totalorder %s22, 0
      %p116 = por %p114, %p115
      %p117 = scmp.ne.s32.totalorder %s105, %s106
      %p118 = scmp.eq.s32.totalorder %s23, 2
      %p119 = por %p117, %p118
      %p121 = scmp.ne.s32.totalorder %s106, %s120
      %p122 = scmp.eq.s32.totalorder %s23, 0
      %p123 = por %p121, %p122
      %s125 = sadd.s32 %s124, 1
      %p128 = scmp.eq.s32.totalorder %s17, 2
      %p129 = scmp.ne.s32.totalorder %s124, %s126
      %p130 = scmp.eq.s32.totalorder %s17, 0
      %p131 = por %p129, %p130
      %p132 = scmp.ne.s32.totalorder %s124, %s126
      %p133 = scmp.eq.s32.totalorder %s22, 2
      %p134 = por %p132, %p133
      %p135 = scmp.ne.s32.totalorder %s126, %s127
      %p136 = scmp.eq.s32.totalorder %s22, 0
      %p137 = por %p135, %p136
      %p138 = scmp.ne.s32.totalorder %s126, %s127
      %p139 = scmp.eq.s32.totalorder %s23, 2
      %p140 = por %p138, %p139
      %p142 = scmp.ne.s32.totalorder %s127, %s141
      %p143 = scmp.eq.s32.totalorder %s23, 0
      %p144 = por %p142, %p143
      %s145 = ssub.s32 %s17, %s24
      %p146 = scmp.eq.s32.totalorder %s145, 0
      %s148 = sadd.s32 %s147, 1
      %s149 = scalar_select %p146, %s147, %s148
      %p152 = pneg %p146
      %p153 = scmp.eq.s32.totalorder %s17, 2
      %p154 = por %p152, %p153
      %p155 = scmp.ne.s32.totalorder %s147, %s150
      %p156 = scmp.eq.s32.totalorder %s17, 0
      %p157 = por %p155, %p156
      %p158 = scmp.ne.s32.totalorder %s147, %s150
      %p159 = scmp.eq.s32.totalorder %s22, 2
      %p160 = por %p158, %p159
      %p161 = scmp.ne.s32.totalorder %s150, %s151
      %p162 = scmp.eq.s32.totalorder %s22, 0
      %p163 = por %p161, %p162
      %p164 = scmp.ne.s32.totalorder %s150, %s151
      %p165 = scmp.eq.s32.totalorder %s23, 2
      %p166 = por %p164, %p165
      %p168 = scmp.ne.s32.totalorder %s151, %s167
      %p169 = scmp.eq.s32.totalorder %s23, 0
      %p170 = por %p168, %p169
      %p171 = scmp.le.s32.totalorder 1, %s17
      %p172 = scmp.lt.s32.totalorder %s17, 4
      %p173 = pnand %p171, %p172
      %p174 = pneg %p173
      // Predicated region
      $region9: #{tpu_custom_call.1} parent=5 // pred_check
        _
      $region10: #{tpu_custom_call.1} parent=5 // pred_check_branch
        %176 = sbr.rel (%p173) target = $region12
      $region11: #{tpu_custom_call.1} parent=5 // pred_region
        %s177 = ssub.s32 %s17, 1
        // Predicated region
        $region13: #{tpu_custom_call.1} parent=11 // pred_check
          %p178 = pneg %p116
        $region14: #{tpu_custom_call.1} parent=11 // pred_check_branch
          %180 = sbr.rel (%p178) target = $region16
        $region15: #{tpu_custom_call.1} parent=11 // pred_region
          _
        $region16: #{tpu_custom_call.1} parent=11 // pred_fallthru
          _
        // Predicated region
        $region17: #{tpu_custom_call.1} parent=11 // pred_check
          %p181 = pneg %p137
        $region18: #{tpu_custom_call.1} parent=11 // pred_check_branch
          %183 = sbr.rel (%p181) target = $region20
        $region19: #{tpu_custom_call.1} parent=11 // pred_region
          _
        $region20: #{tpu_custom_call.1} parent=11 // pred_fallthru
          _
      $region12: #{tpu_custom_call.1} parent=5 // pred_fallthru
        _
      %p184 = scmp.lt.s32.totalorder %s17, 3
      // Predicated region
      $region21: #{tpu_custom_call.1} parent=5 // pred_check
        %p185 = pneg %p184
      $region22: #{tpu_custom_call.1} parent=5 // pred_check_branch
        %187 = sbr.rel (%p185) target = $region24
      $region23: #{tpu_custom_call.1} parent=5 // pred_region
        // Predicated region
        $region25: #{tpu_custom_call.1} parent=23 // pred_check
          %p188 = pneg %p37
        $region26: #{tpu_custom_call.1} parent=23 // pred_check_branch
          %190 = sbr.rel (%p188) target = $region28
        $region27: #{tpu_custom_call.1} parent=23 // pred_region
          %s191 = sand.u32 %s27, 1
          %s192 = scalar_lea.sflag [#allocation3], %s191
          %s193 = sand.u32 %s27, 1
          %s194 = smul.addr %s193, 32
          %s195 = scalar_lea.vmem [#allocation2], %s194
          %s197 = ssub.s32 512, 512
          %198 = vsyncadd %s192, %s197
          %s199 = smul.addr %s17, 4
          %s200 = smul.addr %s199, 128
          %s201 = scalar_lea.hbm %s0, %s200
          %s202 = sshll.u32 %s195, 4
          %s203 = int_to_ptr.vmem [resolvable:$true] %s202
          %208 = dma.hbm_to_vmem [thread:$0]  %s201, 512, %s203, %s192, 256, 256, 16
        $region28: #{tpu_custom_call.1} parent=23 // pred_fallthru
          _
        // Predicated region
        $region29: #{tpu_custom_call.1} parent=23 // pred_check
          %p209 = pneg %p63
        $region30: #{tpu_custom_call.1} parent=23 // pred_check_branch
          %211 = sbr.rel (%p209) target = $region32
        $region31: #{tpu_custom_call.1} parent=23 // pred_region
          %s212 = sand.u32 %s53, 1
          %s213 = scalar_lea.sflag [#allocation5], %s212
          %s214 = sand.u32 %s53, 1
          %s215 = smul.addr %s214, 32
          %s216 = scalar_lea.vmem [#allocation4], %s215
          %s218 = ssub.s32 512, 512
          %219 = vsyncadd %s213, %s218
          %s220 = smul.addr %s17, 4
          %s221 = smul.addr %s220, 128
          %s222 = scalar_lea.hbm %s1, %s221
          %s223 = sshll.u32 %s216, 4
          %s224 = int_to_ptr.vmem [resolvable:$true] %s223
          %229 = dma.hbm_to_vmem [thread:$0]  %s222, 512, %s224, %s213, 256, 256, 16
        $region32: #{tpu_custom_call.1} parent=23 // pred_fallthru
          _
        // Predicated region
        $region33: #{tpu_custom_call.1} parent=23 // pred_check
          %p230 = pneg %p89
        $region34: #{tpu_custom_call.1} parent=23 // pred_check_branch
          %232 = sbr.rel (%p230) target = $region36
        $region35: #{tpu_custom_call.1} parent=23 // pred_region
          %p233 = scmp.lt.s32.totalorder %s17, 2
          %s234 = scalar_select %p233, %s17, 2
          %s235 = smul.addr %s234, 2
          %s236 = smul.addr %s235, 2
          %s237 = scalar_lea.vmem %s2, %s236
        $region36: #{tpu_custom_call.1} parent=23 // pred_fallthru
          _
      $region24: #{tpu_custom_call.1} parent=5 // pred_fallthru
        _
      %p238 = scmp.le.s32.totalorder 1, %s17
      %p239 = scmp.lt.s32.totalorder %s17, 4
      %p240 = pnand %p238, %p239
      %p241 = pneg %p240
      // Predicated region
      $region37: #{tpu_custom_call.1} parent=5 // pred_check
        _
      $region38: #{tpu_custom_call.1} parent=5 // pred_check_branch
        %243 = sbr.rel (%p240) target = $region40
      $region39: #{tpu_custom_call.1} parent=5 // pred_region
        %s244 = ssub.s32 %s17, 1
        %s245 = sand.u32 %s30, 1
        %s246 = scalar_lea.sflag [#allocation3], %s245
        %s247 = sand.u32 %s30, 1
        %s248 = smul.addr %s247, 32
        %s249 = scalar_lea.vmem [#allocation2], %s248
        // Predicated region
        $region41: #{tpu_custom_call.1} parent=39 // pred_check
          %p250 = pneg %p43
        $region42: #{tpu_custom_call.1} parent=39 // pred_check_branch
          %252 = sbr.rel (%p250) target = $region44
        $region43: #{tpu_custom_call.1} parent=39 // pred_region
          %253 = dma.done %s246, 512
        $region44: #{tpu_custom_call.1} parent=39 // pred_fallthru
          _
        %s254 = sand.u32 %s56, 1
        %s255 = scalar_lea.sflag [#allocation5], %s254
        %s256 = sand.u32 %s56, 1
        %s257 = smul.addr %s256, 32
        %s258 = scalar_lea.vmem [#allocation4], %s257
        // Predicated region
        $region45: #{tpu_custom_call.1} parent=39 // pred_check
          %p259 = pneg %p69
        $region46: #{tpu_custom_call.1} parent=39 // pred_check_branch
          %261 = sbr.rel (%p259) target = $region48
        $region47: #{tpu_custom_call.1} parent=39 // pred_region
          %262 = dma.done %s255, 512
        $region48: #{tpu_custom_call.1} parent=39 // pred_fallthru
          _
        %s263 = sand.u32 %s30, 1
        %s264 = scalar_lea.sflag [#allocation3], %s263
        %s265 = sand.u32 %s30, 1
        %s266 = smul.addr %s265, 32
        %s267 = scalar_lea.vmem [#allocation2], %s266
        %p268 = pneg %p43
        %p269 = pneg %p40
        %s270 = sand.u32 %s56, 1
        %s271 = scalar_lea.sflag [#allocation5], %s270
        %s272 = sand.u32 %s56, 1
        %s273 = smul.addr %s272, 32
        %s274 = scalar_lea.vmem [#allocation4], %s273
        %p275 = pneg %p69
        %p276 = pneg %p66
        %p277 = scmp.lt.s32.totalorder %s22, 2
        %s278 = scalar_select %p277, %s22, 2
        %s279 = smul.addr %s278, 2
        %s280 = smul.addr %s279, 2
        %s281 = scalar_lea.vmem %s2, %s280
        %p282 = pneg %p95
        %p283 = pneg %p92
        %p284 = pneg %p116
        %p285 = pneg %p113
        %p286 = pneg %p137
        %p287 = pneg %p134
        %p288 = pneg %p163
        %p289 = pneg %p160
        %p290 = scmp.lt.s32.totalorder %s22, 2
        %s291 = scalar_select %p290, %s22, 2
        %s292 = smul.addr %s291, 2
        %s293 = smul.addr %s292, 8
        %s294 = scalar_lea.vmem %s5, %s293
        %p295 = scmp.lt.s32.totalorder %s22, 2
        %s296 = scalar_select %p295, %s22, 2
        %s297 = smul.addr %s296, 2
        %s298 = smul.addr %s297, 2
        %s299 = scalar_lea.vmem %s2, %s298
        %p300 = scmp.lt.s32.totalorder %s22, 2
        %s301 = scalar_select %p300, %s22, 2
        %s302 = smul.addr %s301, 2
        %s303 = smul.addr %s302, 8
        %s304 = scalar_lea.vmem %s5, %s303
        %v305 = vld [vmem:[%s249] sm:$0xff]
        %v306 = vld [vmem:[%s249 + $0x8] sm:$0xff]
        %v307 = vld [vmem:[%s249 + $0x10] sm:$0xff]
        %v308 = vld [vmem:[%s249 + $0x18] sm:$0xff]
        %v309 = vld [vmem:[%s258] sm:$0xff]
        %v310 = vld [vmem:[%s258 + $0x8] sm:$0xff]
        %v311 = vld [vmem:[%s258 + $0x10] sm:$0xff]
        %v312 = vld [vmem:[%s258 + $0x18] sm:$0xff]
        %v313 = vld [vmem:[%s299] sm:$0xf]
        %v314 = vld [vmem:[%s3] sm:$0xff]
        %v315 = vld [vmem:[%s3 + $0x8] sm:$0xff]
        %v316 = vld [vmem:[%s4] sm:$0xff]
        %v317 = vadd.f32 %v309, %v305
        %v318 = vadd.f32 %v310, %v306
        %v319 = vadd.f32 %v311, %v307
        %v320 = vadd.f32 %v312, %v308
        %322 = vset.pattern.permute.xlu0 0
        %323 = vperm.xlu0 %322, %v314
        %v324 = vpop.permute.xlu0 %323
        %327 = vset.pattern.permute.xlu0 0
        %328 = vperm.xlu0 %327, %v315
        %v329 = vpop.permute.xlu0 %328
        %v331 = vsub.f32 %v317, %v324
        %v332 = vsub.f32 %v318, %v324
        %v333 = vsub.f32 %v319, %v329
        %v334 = vsub.f32 %v320, %v329
        %335 = vset.pattern.permute.xlu0 1
        %336 = vperm.xlu0 %335, %v314
        %v337 = vpop.permute.xlu0 %336
        %339 = vset.pattern.permute.xlu0 1
        %340 = vperm.xlu0 %339, %v315
        %v341 = vpop.permute.xlu0 %340
        %v343 = vmul.f32 %v331, %v337
        %v344 = vmul.f32 %v332, %v337
        %v345 = vmul.f32 %v333, %v341
        %v346 = vmul.f32 %v334, %v341
        %347 = vset.pattern.permute.xlu0 2
        %348 = vperm.xlu0 %347, %v314
        %v349 = vpop.permute.xlu0 %348
        %351 = vset.pattern.permute.xlu0 2
        %352 = vperm.xlu0 %351, %v315
        %v353 = vpop.permute.xlu0 %352
        %v355 = vsub.f32 %v309, %v349
        %v356 = vsub.f32 %v310, %v349
        %v357 = vsub.f32 %v311, %v353
        %v358 = vsub.f32 %v312, %v353
        %359 = vset.pattern.permute.xlu0 3
        %360 = vperm.xlu0 %359, %v314
        %v361 = vpop.permute.xlu0 %360
        %363 = vset.pattern.permute.xlu0 3
        %364 = vperm.xlu0 %363, %v315
        %v365 = vpop.permute.xlu0 %364
        %v367 = vmul.f32 %v355, %v361
        %v368 = vmul.f32 %v356, %v361
        %v369 = vmul.f32 %v357, %v365
        %v370 = vmul.f32 %v358, %v365
        %v371 = vand.u32 2147483647, %v343
        %v372 = vand.u32 2147483647, %v344
        %v373 = vand.u32 2147483647, %v345
        %v374 = vand.u32 2147483647, %v346
        %v375 = vand.u32 2147483647, %v367
        %v376 = vand.u32 2147483647, %v368
        %v377 = vand.u32 2147483647, %v369
        %v378 = vand.u32 2147483647, %v370
        %vm379 = vcmask 130048
        %v381 = vsel %vm379, %v316, 0
        %383 = vmatprep.subr.mxu0 %v372
        %384 = vmatpush1.msra.mxu0 %v371
        %385 = vmatprep.subr.mxu0 %v374
        %386 = vmatpush1.msra.mxu0 %v373
        %387 = vmatprep.subr.mxu0 0.0
        %388 = vmatpush1.msra.mxu0 0.0
        %389 = vmatprep.subr.mxu0 0.0
        %390 = vmatpush1.msra.mxu0 0.0
        %391 = vmatprep.subr.mxu0 0.0
        %392 = vmatpush1.msra.mxu0 0.0
        %393 = vmatprep.subr.mxu0 0.0
        %394 = vmatpush1.msra.mxu0 0.0
        %395 = vmatprep.subr.mxu0 0.0
        %396 = vmatpush1.msra.mxu0 0.0
        %397 = vmatprep.subr.mxu0 0.0
        %398 = vmatpush1.msra.mxu0 0.0
        %399 = vmatprep.subr.mxu0 0.0
        %400 = vmatpush1.msra.mxu0 0.0
        %401 = vmatprep.subr.mxu0 0.0
        %402 = vmatpush1.msra.mxu0 0.0
        %403 = vmatprep.subr.mxu0 0.0
        %404 = vmatpush1.msra.mxu0 0.0
        %405 = vmatprep.subr.mxu0 0.0
        %406 = vmatpush1.msra.mxu0 0.0
        %407 = vmatprep.subr.mxu0 0.0
        %408 = vmatpush1.msra.mxu0 0.0
        %409 = vmatprep.subr.mxu0 0.0
        %410 = vmatpush1.msra.mxu0 0.0
        %411 = vmatprep.subr.mxu0 0.0
        %412 = vmatpush1.msra.mxu0 0.0
        %413 = vmatprep.subr.mxu0 0.0
        %414 = vmatpush1.msra.mxu0 0.0
        %415 = vmatprep.subr.mxu0 0.0
        %416 = vmatpush1.msra.mxu0 0.0
        %417 = vmatprep.subr.mxu0 0.0
        %418 = vmatpush1.msra.mxu0 0.0
        %419 = vmatprep.subr.mxu0 0.0
        %420 = vmatpush1.msra.mxu0 0.0
        %421 = vmatprep.subr.mxu0 0.0
        %422 = vmatpush1.msra.mxu0 0.0
        %423 = vmatprep.subr.mxu0 0.0
        %424 = vmatpush1.msra.mxu0 0.0
        %425 = vmatprep.subr.mxu0 0.0
        %426 = vmatpush1.msra.mxu0 0.0
        %427 = vmatprep.subr.mxu0 0.0
        %428 = vmatpush1.msra.mxu0 0.0
        %429 = vmatprep.subr.mxu0 0.0
        %430 = vmatpush1.msra.mxu0 0.0
        %431 = vmatprep.subr.mxu0 0.0
        %432 = vmatpush1.msra.mxu0 0.0
        %433 = vmatprep.subr.mxu0 0.0
        %434 = vmatpush1.msra.mxu0 0.0
        %435 = vmatprep.subr.mxu0 0.0
        %436 = vmatpush1.msra.mxu0 0.0
        %437 = vmatprep.subr.mxu0 0.0
        %438 = vmatpush1.msra.mxu0 0.0
        %439 = vmatprep.subr.mxu0 0.0
        %440 = vmatpush1.msra.mxu0 0.0
        %441 = vmatprep.subr.mxu0 0.0
        %442 = vmatpush1.msra.mxu0 0.0
        %443 = vmatprep.subr.mxu0 0.0
        %444 = vmatpush1.msra.mxu0 0.0
        %445 = vmatprep.subr.mxu0 0.0
        %446 = vmatpush1.msra.mxu0 0.0
        %447 = vmatprep.mubr.f32.mxu0 0.0
        %448 = vmatmul.mubr.f32.gmra.mrb[0].mxu0 %v381
        %v449 = vpop.f32.mrb[0].mxu0
        %v450 = vadd.f32 0.0, %v449
        %v451 = vpop.f32.mrb[0].mxu0
        %v452 = vadd.f32 0.0, %v451
        %453 = vdwg.mxu0
        %454 = vmatprep.subr.mxu0 %v376
        %455 = vmatpush1.msra.mxu0 %v375
        %456 = vmatprep.subr.mxu0 %v378
        %457 = vmatpush1.msra.mxu0 %v377
        %458 = vmatprep.subr.mxu0 0.0
        %459 = vmatpush1.msra.mxu0 0.0
        %460 = vmatprep.subr.mxu0 0.0
        %461 = vmatpush1.msra.mxu0 0.0
        %462 = vmatprep.subr.mxu0 0.0
        %463 = vmatpush1.msra.mxu0 0.0
        %464 = vmatprep.subr.mxu0 0.0
        %465 = vmatpush1.msra.mxu0 0.0
        %466 = vmatprep.subr.mxu0 0.0
        %467 = vmatpush1.msra.mxu0 0.0
        %468 = vmatprep.subr.mxu0 0.0
        %469 = vmatpush1.msra.mxu0 0.0
        %470 = vmatprep.subr.mxu0 0.0
        %471 = vmatpush1.msra.mxu0 0.0
        %472 = vmatprep.subr.mxu0 0.0
        %473 = vmatpush1.msra.mxu0 0.0
        %474 = vmatprep.subr.mxu0 0.0
        %475 = vmatpush1.msra.mxu0 0.0
        %476 = vmatprep.subr.mxu0 0.0
        %477 = vmatpush1.msra.mxu0 0.0
        %478 = vmatprep.subr.mxu0 0.0
        %479 = vmatpush1.msra.mxu0 0.0
        %480 = vmatprep.subr.mxu0 0.0
        %481 = vmatpush1.msra.mxu0 0.0
        %482 = vmatprep.subr.mxu0 0.0
        %483 = vmatpush1.msra.mxu0 0.0
        %484 = vmatprep.subr.mxu0 0.0
        %485 = vmatpush1.msra.mxu0 0.0
        %486 = vmatprep.subr.mxu0 0.0
        %487 = vmatpush1.msra.mxu0 0.0
        %488 = vmatprep.subr.mxu0 0.0
        %489 = vmatpush1.msra.mxu0 0.0
        %490 = vmatprep.subr.mxu0 0.0
        %491 = vmatpush1.msra.mxu0 0.0
        %492 = vmatprep.subr.mxu0 0.0
        %493 = vmatpush1.msra.mxu0 0.0
        %494 = vmatprep.subr.mxu0 0.0
        %495 = vmatpush1.msra.mxu0 0.0
        %496 = vmatprep.subr.mxu0 0.0
        %497 = vmatpush1.msra.mxu0 0.0
        %498 = vmatprep.subr.mxu0 0.0
        %499 = vmatpush1.msra.mxu0 0.0
        %500 = vmatprep.subr.mxu0 0.0
        %501 = vmatpush1.msra.mxu0 0.0
        %502 = vmatprep.subr.mxu0 0.0
        %503 = vmatpush1.msra.mxu0 0.0
        %504 = vmatprep.subr.mxu0 0.0
        %505 = vmatpush1.msra.mxu0 0.0
        %506 = vmatprep.subr.mxu0 0.0
        %507 = vmatpush1.msra.mxu0 0.0
        %508 = vmatprep.subr.mxu0 0.0
        %509 = vmatpush1.msra.mxu0 0.0
        %510 = vmatprep.subr.mxu0 0.0
        %511 = vmatpush1.msra.mxu0 0.0
        %512 = vmatprep.subr.mxu0 0.0
        %513 = vmatpush1.msra.mxu0 0.0
        %514 = vmatprep.subr.mxu0 0.0
        %515 = vmatpush1.msra.mxu0 0.0
        %516 = vmatprep.subr.mxu0 0.0
        %517 = vmatpush1.msra.mxu0 0.0
        %518 = vmatprep.mubr.f32.mxu0 0.0
        %519 = vmatmul.mubr.f32.gmra.mrb[0].mxu0 %v381
        %v520 = vpop.f32.mrb[0].mxu0
        %v521 = vadd.f32 0.0, %v520
        %v522 = vpop.f32.mrb[0].mxu0
        %v523 = vadd.f32 0.0, %v522
        %524 = vdwg.mxu0
        %525 = vmatprep.subr.mxu0 %v344
        %526 = vmatpush1.msra.mxu0 %v343
        %527 = vmatprep.subr.mxu0 %v346
        %528 = vmatpush1.msra.mxu0 %v345
        %529 = vmatprep.subr.mxu0 0.0
        %530 = vmatpush1.msra.mxu0 0.0
        %531 = vmatprep.subr.mxu0 0.0
        %532 = vmatpush1.msra.mxu0 0.0
        %533 = vmatprep.subr.mxu0 0.0
        %534 = vmatpush1.msra.mxu0 0.0
        %535 = vmatprep.subr.mxu0 0.0
        %536 = vmatpush1.msra.mxu0 0.0
        %537 = vmatprep.subr.mxu0 0.0
        %538 = vmatpush1.msra.mxu0 0.0
        %539 = vmatprep.subr.mxu0 0.0
        %540 = vmatpush1.msra.mxu0 0.0
        %541 = vmatprep.subr.mxu0 0.0
        %542 = vmatpush1.msra.mxu0 0.0
        %543 = vmatprep.subr.mxu0 0.0
        %544 = vmatpush1.msra.mxu0 0.0
        %545 = vmatprep.subr.mxu0 0.0
        %546 = vmatpush1.msra.mxu0 0.0
        %547 = vmatprep.subr.mxu0 0.0
        %548 = vmatpush1.msra.mxu0 0.0
        %549 = vmatprep.subr.mxu0 0.0
        %550 = vmatpush1.msra.mxu0 0.0
        %551 = vmatprep.subr.mxu0 0.0
        %552 = vmatpush1.msra.mxu0 0.0
        %553 = vmatprep.subr.mxu0 0.0
        %554 = vmatpush1.msra.mxu0 0.0
        %555 = vmatprep.subr.mxu0 0.0
        %556 = vmatpush1.msra.mxu0 0.0
        %557 = vmatprep.subr.mxu0 0.0
        %558 = vmatpush1.msra.mxu0 0.0
        %559 = vmatprep.subr.mxu0 0.0
        %560 = vmatpush1.msra.mxu0 0.0
        %561 = vmatprep.subr.mxu0 0.0
        %562 = vmatpush1.msra.mxu0 0.0
        %563 = vmatprep.subr.mxu0 0.0
        %564 = vmatpush1.msra.mxu0 0.0
        %565 = vmatprep.subr.mxu0 0.0
        %566 = vmatpush1.msra.mxu0 0.0
        %567 = vmatprep.subr.mxu0 0.0
        %568 = vmatpush1.msra.mxu0 0.0
        %569 = vmatprep.subr.mxu0 0.0
        %570 = vmatpush1.msra.mxu0 0.0
        %571 = vmatprep.subr.mxu0 0.0
        %572 = vmatpush1.msra.mxu0 0.0
        %573 = vmatprep.subr.mxu0 0.0
        %574 = vmatpush1.msra.mxu0 0.0
        %575 = vmatprep.subr.mxu0 0.0
        %576 = vmatpush1.msra.mxu0 0.0
        %577 = vmatprep.subr.mxu0 0.0
        %578 = vmatpush1.msra.mxu0 0.0
        %579 = vmatprep.subr.mxu0 0.0
        %580 = vmatpush1.msra.mxu0 0.0
        %581 = vmatprep.subr.mxu0 0.0
        %582 = vmatpush1.msra.mxu0 0.0
        %583 = vmatprep.subr.mxu0 0.0
        %584 = vmatpush1.msra.mxu0 0.0
        %585 = vmatprep.subr.mxu0 0.0
        %586 = vmatpush1.msra.mxu0 0.0
        %587 = vmatprep.subr.mxu0 0.0
        %588 = vmatpush1.msra.mxu0 0.0
        %589 = vmatprep.mubr.f32.mxu0 0.0
        %590 = vmatmul.mubr.f32.gmra.mrb[0].mxu0 %v381
        %v591 = vpop.f32.mrb[0].mxu0
        %v592 = vadd.f32 0.0, %v591
        %v593 = vpop.f32.mrb[0].mxu0
        %v594 = vadd.f32 0.0, %v593
        %595 = vdwg.mxu0
        %596 = vmatprep.subr.mxu0 %v368
        %597 = vmatpush1.msra.mxu0 %v367
        %598 = vmatprep.subr.mxu0 %v370
        %599 = vmatpush1.msra.mxu0 %v369
        %600 = vmatprep.subr.mxu0 0.0
        %601 = vmatpush1.msra.mxu0 0.0
        %602 = vmatprep.subr.mxu0 0.0
        %603 = vmatpush1.msra.mxu0 0.0
        %604 = vmatprep.subr.mxu0 0.0
        %605 = vmatpush1.msra.mxu0 0.0
        %606 = vmatprep.subr.mxu0 0.0
        %607 = vmatpush1.msra.mxu0 0.0
        %608 = vmatprep.subr.mxu0 0.0
        %609 = vmatpush1.msra.mxu0 0.0
        %610 = vmatprep.subr.mxu0 0.0
        %611 = vmatpush1.msra.mxu0 0.0
        %612 = vmatprep.subr.mxu0 0.0
        %613 = vmatpush1.msra.mxu0 0.0
        %614 = vmatprep.subr.mxu0 0.0
        %615 = vmatpush1.msra.mxu0 0.0
        %616 = vmatprep.subr.mxu0 0.0
        %617 = vmatpush1.msra.mxu0 0.0
        %618 = vmatprep.subr.mxu0 0.0
        %619 = vmatpush1.msra.mxu0 0.0
        %620 = vmatprep.subr.mxu0 0.0
        %621 = vmatpush1.msra.mxu0 0.0
        %622 = vmatprep.subr.mxu0 0.0
        %623 = vmatpush1.msra.mxu0 0.0
        %624 = vmatprep.subr.mxu0 0.0
        %625 = vmatpush1.msra.mxu0 0.0
        %626 = vmatprep.subr.mxu0 0.0
        %627 = vmatpush1.msra.mxu0 0.0
        %628 = vmatprep.subr.mxu0 0.0
        %629 = vmatpush1.msra.mxu0 0.0
        %630 = vmatprep.subr.mxu0 0.0
        %631 = vmatpush1.msra.mxu0 0.0
        %632 = vmatprep.subr.mxu0 0.0
        %633 = vmatpush1.msra.mxu0 0.0
        %634 = vmatprep.subr.mxu0 0.0
        %635 = vmatpush1.msra.mxu0 0.0
        %636 = vmatprep.subr.mxu0 0.0
        %637 = vmatpush1.msra.mxu0 0.0
        %638 = vmatprep.subr.mxu0 0.0
        %639 = vmatpush1.msra.mxu0 0.0
        %640 = vmatprep.subr.mxu0 0.0
        %641 = vmatpush1.msra.mxu0 0.0
        %642 = vmatprep.subr.mxu0 0.0
        %643 = vmatpush1.msra.mxu0 0.0
        %644 = vmatprep.subr.mxu0 0.0
        %645 = vmatpush1.msra.mxu0 0.0
        %646 = vmatprep.subr.mxu0 0.0
        %647 = vmatpush1.msra.mxu0 0.0
        %648 = vmatprep.subr.mxu0 0.0
        %649 = vmatpush1.msra.mxu0 0.0
        %650 = vmatprep.subr.mxu0 0.0
        %651 = vmatpush1.msra.mxu0 0.0
        %652 = vmatprep.subr.mxu0 0.0
        %653 = vmatpush1.msra.mxu0 0.0
        %654 = vmatprep.subr.mxu0 0.0
        %655 = vmatpush1.msra.mxu0 0.0
        %656 = vmatprep.subr.mxu0 0.0
        %657 = vmatpush1.msra.mxu0 0.0
        %658 = vmatprep.subr.mxu0 0.0
        %659 = vmatpush1.msra.mxu0 0.0
        %660 = vmatprep.mubr.f32.mxu0 0.0
        %661 = vmatmul.mubr.f32.gmra.mrb[0].mxu0 %v381
        %v662 = vpop.f32.mrb[0].mxu0
        %v663 = vadd.f32 0.0, %v662
        %v664 = vpop.f32.mrb[0].mxu0
        %v665 = vadd.f32 0.0, %v664
        %666 = vdwg.mxu0
        %vm667 = vcmask 1040384
        %v668 = vsel %vm667, %v521, -inf
        %v669 = vsel %vm667, %v523, -inf
        %v670 = vmax.f32 %v668, %v669
        %671 = vmax.xlane.f32.xlu0 %v670
        %v672 = vpop.xlane.xlu0 %671
        %v673 = vsub.f32 %v521, %v672
        %v674 = vsub.f32 %v523, %v672
        %v675 = vmul.f32 %v673, 1.442695
        %v676 = vpow.pop %v675
        %v677 = vmul.f32 %v674, 1.442695
        %v678 = vpow.pop %v677
        %v679 = vsel %vm667, %v676, 0.0
        %v680 = vsel %vm667, %v678, 0.0
        %v681 = vadd.f32 %v679, %v680
        %682 = vadd.xlane.f32.xlu0 %v681
        %v683 = vpop.xlane.xlu0 %682
        %v684 = vrcp.pop %v683
        %v685 = vmul.f32 256.0, %v684
        %v686 = vmul.f32 %v676, %v685
        %v687 = vmul.f32 %v678, %v685
        %v688 = vsel %vm667, %v450, -inf
        %v689 = vsel %vm667, %v452, -inf
        %v690 = vmax.f32 %v688, %v689
        %691 = vmax.xlane.f32.xlu0 %v690
        %v692 = vpop.xlane.xlu0 %691
        %v693 = vsub.f32 %v450, %v692
        %v694 = vsub.f32 %v452, %v692
        %v695 = vmul.f32 %v693, 1.442695
        %v696 = vpow.pop %v695
        %v697 = vmul.f32 %v694, 1.442695
        %v698 = vpow.pop %v697
        %v699 = vsel %vm667, %v696, 0.0
        %v700 = vsel %vm667, %v698, 0.0
        %v701 = vadd.f32 %v699, %v700
        %702 = vadd.xlane.f32.xlu0 %v701
        %v703 = vpop.xlane.xlu0 %702
        %v704 = vrcp.pop %v703
        %v705 = vmul.f32 256.0, %v704
        %v706 = vmul.f32 %v696, %v705
        %v707 = vmul.f32 %v698, %v705
        %v708 = vadd.f32 %v375, %v376
        %709 = vadd.xlane.f32.xlu0 %v708
        %v710 = vpop.xlane.xlu0 %709
        %v711 = vadd.f32 %v377, %v378
        %712 = vadd.xlane.f32.xlu0 %v711
        %v713 = vpop.xlane.xlu0 %712
        %v714 = vrcp.pop 256.0
        %v715 = vmul.f32 %v710, %v714
        %v716 = vmul.f32 %v713, %v714
        %v717 = vmul.f32 %v715, 2.0
        %v718 = vmul.f32 %v716, 2.0
        %v719 = vmax.f32 %v717, %v718
        %v720 = vrot.slane %v719, 4
        %v721 = vmax.f32 %v719, %v720
        %v722 = vrot.slane %v721, 2
        %v723 = vmax.f32 %v721, %v722
        %v724 = vrot.slane %v723, 1
        %v725 = vmax.f32 %v723, %v724
        %v726 = vsub.f32 %v717, %v725
        %v727 = vsub.f32 %v718, %v725
        %v728 = vmul.f32 %v726, 1.442695
        %v729 = vpow.pop %v728
        %v730 = vmul.f32 %v727, 1.442695
        %v731 = vpow.pop %v730
        %v732 = vadd.f32 %v729, %v731
        %v733 = vrot.slane %v732, 4
        %v734 = vadd.f32 %v732, %v733
        %v735 = vrot.slane %v734, 2
        %v736 = vadd.f32 %v734, %v735
        %v737 = vrot.slane %v736, 1
        %v738 = vadd.f32 %v736, %v737
        %v739 = vrcp.pop %v738
        %v740 = vmul.f32 16.0, %v739
        %v741 = vmul.f32 %v729, %v740
        %v742 = vmul.f32 %v731, %v740
        %v743 = vadd.f32 %v371, %v372
        %744 = vadd.xlane.f32.xlu0 %v743
        %v745 = vpop.xlane.xlu0 %744
        %v746 = vadd.f32 %v373, %v374
        %747 = vadd.xlane.f32.xlu0 %v746
        %v748 = vpop.xlane.xlu0 %747
        %v749 = vmul.f32 %v745, %v714
        %v750 = vmul.f32 %v748, %v714
        %v751 = vmul.f32 %v749, 2.0
        %v752 = vmul.f32 %v750, 2.0
        %v753 = vmax.f32 %v751, %v752
        %v754 = vrot.slane %v753, 4
        %v755 = vmax.f32 %v753, %v754
        %v756 = vrot.slane %v755, 2
        %v757 = vmax.f32 %v755, %v756
        %v758 = vrot.slane %v757, 1
        %v759 = vmax.f32 %v757, %v758
        %v760 = vsub.f32 %v751, %v759
        %v761 = vsub.f32 %v752, %v759
        %v762 = vmul.f32 %v760, 1.442695
        %v763 = vpow.pop %v762
        %v764 = vmul.f32 %v761, 1.442695
        %v765 = vpow.pop %v764
        %v766 = vadd.f32 %v763, %v765
        %v767 = vrot.slane %v766, 4
        %v768 = vadd.f32 %v766, %v767
        %v769 = vrot.slane %v768, 2
        %v770 = vadd.f32 %v768, %v769
        %v771 = vrot.slane %v770, 1
        %v772 = vadd.f32 %v770, %v771
        %v773 = vrcp.pop %v772
        %v774 = vmul.f32 16.0, %v773
        %v775 = vmul.f32 %v763, %v774
        %v776 = vmul.f32 %v765, %v774
        %v777 = vsub.f32 %v343, %v367
        %v778 = vsub.f32 %v344, %v368
        %v779 = vsub.f32 %v345, %v369
        %v780 = vsub.f32 %v346, %v370
        %v781 = vmul.f32 %v777, %v777
        %v782 = vmul.f32 %v778, %v778
        %v783 = vmul.f32 %v779, %v779
        %v784 = vmul.f32 %v780, %v780
        %v785 = vmul.f32 %v781, %v741
        %v786 = vmul.f32 %v782, %v741
        %v787 = vmul.f32 %v783, %v742
        %v788 = vmul.f32 %v784, %v742
        %v789 = vadd.f32 %v785, %v787
        %v790 = vrot.slane %v789, 4
        %v791 = vadd.f32 %v789, %v790
        %v792 = vrot.slane %v791, 2
        %v793 = vadd.f32 %v791, %v792
        %v794 = vrot.slane %v793, 1
        %v795 = vadd.f32 %v793, %v794
        %v796 = vadd.f32 %v786, %v788
        %v797 = vrot.slane %v796, 4
        %v798 = vadd.f32 %v796, %v797
        %v799 = vrot.slane %v798, 2
        %v800 = vadd.f32 %v798, %v799
        %v801 = vrot.slane %v800, 1
        %v802 = vadd.f32 %v800, %v801
        %v803 = vmul.f32 %v795, %v686
        %v804 = vmul.f32 %v802, %v687
        %v806 = vlaneseq
        %v807 = vshrl.u32 %v806, 7
        %v808 = vsub.s32 0, %v807
        %v809 = vrot.slane %v313, %v808
        %v810 = vlaneseq
        %v811 = vshrl.u32 %v810, 7
        %v812 = vsub.s32 2, %v811
        %v813 = vrot.slane %v313, %v812
        %v816 = vmul.f32 %v803, %v809
        %v817 = vmul.f32 %v804, %v813
        %v818 = vsel %vm667, %v816, 0.0
        %v819 = vsel %vm667, %v817, 0.0
        %v820 = vadd.f32 %v818, %v819
        %821 = vadd.xlane.f32.xlu0 %v820
        %v822 = vpop.xlane.xlu0 %821
        %v823 = vrot.slane %v822, 4
        %v824 = vadd.f32 %v822, %v823
        %v825 = vrot.slane %v824, 2
        %v826 = vadd.f32 %v824, %v825
        %v827 = vrot.slane %v826, 1
        %v828 = vadd.f32 %v826, %v827
        %s829 = vtos %v828
        %v830 = vlaneseq
        %v831 = vshrl.u32 %v830, 7
        %v832 = vsub.s32 1, %v831
        %v833 = vrot.slane %v313, %v832
        %v834 = vlaneseq
        %v835 = vshrl.u32 %v834, 7
        %v836 = vsub.s32 3, %v835
        %v837 = vrot.slane %v313, %v836
        %v840 = vmul.f32 %v803, %v833
        %v841 = vmul.f32 %v804, %v837
        %v842 = vsel %vm667, %v840, 0.0
        %v843 = vsel %vm667, %v841, 0.0
        %v844 = vadd.f32 %v842, %v843
        %845 = vadd.xlane.f32.xlu0 %v844
        %v846 = vpop.xlane.xlu0 %845
        %v847 = vrot.slane %v846, 4
        %v848 = vadd.f32 %v846, %v847
        %v849 = vrot.slane %v848, 2
        %v850 = vadd.f32 %v848, %v849
        %v851 = vrot.slane %v850, 1
        %v852 = vadd.f32 %v850, %v851
        %s853 = vtos %v852
        %v854 = vadd.f32 %v781, %v782
        %v855 = vadd.f32 %v854, %v783
        %v856 = vadd.f32 %v855, %v784
        %857 = vadd.xlane.f32.xlu0 %v856
        %v858 = vpop.xlane.xlu0 %857
        %v859 = vrot.slane %v858, 4
        %v860 = vadd.f32 %v858, %v859
        %v861 = vrot.slane %v860, 2
        %v862 = vadd.f32 %v860, %v861
        %v863 = vrot.slane %v862, 1
        %v864 = vadd.f32 %v862, %v863
        %s865 = vtos %v864
        %v866 = vadd.f32 %v777, %v778
        %867 = vadd.xlane.f32.xlu0 %v866
        %v868 = vpop.xlane.xlu0 %867
        %v869 = vadd.f32 %v779, %v780
        %870 = vadd.xlane.f32.xlu0 %v869
        %v871 = vpop.xlane.xlu0 %870
        %v872 = vand.u32 2147483647, %v775
        %v873 = vand.u32 2147483647, %v776
        %vm874 = vcmp.lt.f32.partialorder %v872, 1.0
        %vm875 = vcmp.lt.f32.partialorder %v873, 1.0
        %v876 = vmul.f32 %v775, 0.5
        %v877 = vmul.f32 %v776, 0.5
        %v878 = vmul.f32 %v876, %v775
        %v879 = vmul.f32 %v877, %v776
        %v880 = vsub.f32 %v872, 0.5
        %v881 = vsub.f32 %v873, 0.5
        %v882 = vsel %vm874, %v878, %v880
        %v883 = vsel %vm875, %v879, %v881
        %vm884 = vcmask 7168
        %v885 = vsel %vm884, %v882, 0.0
        %v886 = vsel %vm884, %v883, 0.0
        %v887 = vadd.f32 %v885, %v886
        %888 = vadd.xlane.f32.xlu0 %v887
        %v889 = vpop.xlane.xlu0 %888
        %v890 = vrot.slane %v889, 4
        %v891 = vadd.f32 %v889, %v890
        %v892 = vrot.slane %v891, 2
        %v893 = vadd.f32 %v891, %v892
        %v894 = vrot.slane %v893, 1
        %v895 = vadd.f32 %v893, %v894
        %s896 = vtos %v895
        %v897 = vand.u32 2147483647, %v706
        %v898 = vand.u32 2147483647, %v707
        %vm899 = vcmp.lt.f32.partialorder %v897, 1.0
        %vm900 = vcmp.lt.f32.partialorder %v898, 1.0
        %v901 = vmul.f32 %v706, 0.5
        %v902 = vmul.f32 %v707, 0.5
        %v903 = vmul.f32 %v901, %v706
        %v904 = vmul.f32 %v902, %v707
        %v905 = vsub.f32 %v897, 0.5
        %v906 = vsub.f32 %v898, 0.5
        %v907 = vsel %vm899, %v903, %v905
        %v908 = vsel %vm900, %v904, %v906
        %v909 = vsel %vm667, %v907, 0.0
        %v910 = vsel %vm667, %v908, 0.0
        %v911 = vadd.f32 %v909, %v910
        %912 = vadd.xlane.f32.xlu0 %v911
        %v913 = vpop.xlane.xlu0 %912
        %v914 = vrot.slane %v913, 4
        %v915 = vadd.f32 %v913, %v914
        %v916 = vrot.slane %v915, 2
        %v917 = vadd.f32 %v915, %v916
        %v918 = vrot.slane %v917, 1
        %v919 = vadd.f32 %v917, %v918
        %s920 = vtos %v919
        %vm921 = vcmask 1041409
        %v922 = vsel %vm921, %v592, -inf
        %v923 = vsel %vm921, %v594, -inf
        %v924 = vmax.f32 %v922, %v923
        %925 = vmax.xlane.f32.xlu0 %v924
        %v926 = vpop.xlane.xlu0 %925
        %v927 = vsub.f32 %v592, %v926
        %v928 = vsub.f32 %v594, %v926
        %v929 = vmul.f32 %v927, 1.442695
        %v930 = vpow.pop %v929
        %v931 = vmul.f32 %v928, 1.442695
        %v932 = vpow.pop %v931
        %v933 = vsel %vm921, %v930, 0.0
        %v934 = vsel %vm921, %v932, 0.0
        %v935 = vadd.f32 %v933, %v934
        %936 = vadd.xlane.f32.xlu0 %v935
        %v937 = vpop.xlane.xlu0 %936
        %v938 = vrcp.pop %v937
        %v939 = vmul.f32 1.0, %v938
        %v940 = vmul.f32 %v930, %v939
        %v941 = vmul.f32 %v932, %v939
        %v942 = vlaneseq
        %v943 = vshrl.u32 %v942, 7
        %v944 = vsub.s32 1, %v943
        %v945 = vrot.slane %v940, %v944
        %v946 = vlaneseq
        %v947 = vshrl.u32 %v946, 7
        %v948 = vsub.s32 1, %v947
        %v949 = vrot.slane %v941, %v948
        %v950 = vmul.f32 %v343, %v945
        %v951 = vmul.f32 %v344, %v949
        %v952 = vmul.f32 %v345, %v945
        %v953 = vmul.f32 %v346, %v949
        %v954 = vadd.f32 %v950, %v951
        %955 = vadd.xlane.f32.xlu0 %v954
        %v956 = vpop.xlane.xlu0 %955
        %v957 = vadd.f32 %v952, %v953
        %958 = vadd.xlane.f32.xlu0 %v957
        %v959 = vpop.xlane.xlu0 %958
        %vm960 = vcmask 1042434
        %v961 = vsel %vm960, %v663, -inf
        %v962 = vsel %vm960, %v665, -inf
        %v963 = vmax.f32 %v961, %v962
        %964 = vmax.xlane.f32.xlu0 %v963
        %v965 = vpop.xlane.xlu0 %964
        %v966 = vsub.f32 %v663, %v965
        %v967 = vsub.f32 %v665, %v965
        %v968 = vmul.f32 %v966, 1.442695
        %v969 = vpow.pop %v968
        %v970 = vmul.f32 %v967, 1.442695
        %v971 = vpow.pop %v970
        %v972 = vsel %vm960, %v969, 0.0
        %v973 = vsel %vm960, %v971, 0.0
        %v974 = vadd.f32 %v972, %v973
        %975 = vadd.xlane.f32.xlu0 %v974
        %v976 = vpop.xlane.xlu0 %975
        %v977 = vrcp.pop %v976
        %v978 = vmul.f32 1.0, %v977
        %v979 = vmul.f32 %v969, %v978
        %v980 = vmul.f32 %v971, %v978
        %v981 = vlaneseq
        %v982 = vshrl.u32 %v981, 7
        %v983 = vsub.s32 2, %v982
        %v984 = vrot.slane %v979, %v983
        %v985 = vlaneseq
        %v986 = vshrl.u32 %v985, 7
        %v987 = vsub.s32 2, %v986
        %v988 = vrot.slane %v980, %v987
        %v989 = vmul.f32 %v367, %v984
        %v990 = vmul.f32 %v368, %v988
        %v991 = vmul.f32 %v369, %v984
        %v992 = vmul.f32 %v370, %v988
        %v993 = vadd.f32 %v989, %v990
        %994 = vadd.xlane.f32.xlu0 %v993
        %v995 = vpop.xlane.xlu0 %994
        %v996 = vadd.f32 %v991, %v992
        %997 = vadd.xlane.f32.xlu0 %v996
        %v998 = vpop.xlane.xlu0 %997
        %v999 = vmax.f32 %v343, %v344
        %1000 = vmax.xlane.f32.xlu0 %v999
        %v1001 = vpop.xlane.xlu0 %1000
        %v1002 = vmax.f32 %v345, %v346
        %1003 = vmax.xlane.f32.xlu0 %v1002
        %v1004 = vpop.xlane.xlu0 %1003
        %v1005 = vsub.f32 %v343, %v1001
        %v1006 = vsub.f32 %v344, %v1001
        %v1007 = vsub.f32 %v345, %v1004
        %v1008 = vsub.f32 %v346, %v1004
        %v1009 = vmul.f32 %v1005, 1.442695
        %v1010 = vpow.pop %v1009
        %v1011 = vmul.f32 %v1006, 1.442695
        %v1012 = vpow.pop %v1011
        %v1013 = vmul.f32 %v1007, 1.442695
        %v1014 = vpow.pop %v1013
        %v1015 = vmul.f32 %v1008, 1.442695
        %v1016 = vpow.pop %v1015
        %v1017 = vmax.f32 %v367, %v368
        %1018 = vmax.xlane.f32.xlu0 %v1017
        %v1019 = vpop.xlane.xlu0 %1018
        %v1020 = vmax.f32 %v369, %v370
        %1021 = vmax.xlane.f32.xlu0 %v1020
        %v1022 = vpop.xlane.xlu0 %1021
        %v1023 = vsub.f32 %v367, %v1019
        %v1024 = vsub.f32 %v368, %v1019
        %v1025 = vsub.f32 %v369, %v1022
        %v1026 = vsub.f32 %v370, %v1022
        %v1027 = vmul.f32 %v1023, 1.442695
        %v1028 = vpow.pop %v1027
        %v1029 = vmul.f32 %v1024, 1.442695
        %v1030 = vpow.pop %v1029
        %v1031 = vmul.f32 %v1025, 1.442695
        %v1032 = vpow.pop %v1031
        %v1033 = vmul.f32 %v1026, 1.442695
        %v1034 = vpow.pop %v1033
        %1037 = vrot.lane.b32.xlu0 %v1010, 112
        %v1038 = vpop.permute.xlu0 %1037
        %1039 = vrot.lane.b32.xlu0 %v1014, 112
        %v1040 = vpop.permute.xlu0 %1039
        %v1043 = vadd.f32 %v1010, %v1038
        %v1044 = vadd.f32 %v1014, %v1040
        %1047 = vrot.lane.b32.xlu0 %v1028, 112
        %v1048 = vpop.permute.xlu0 %1047
        %1049 = vrot.lane.b32.xlu0 %v1032, 112
        %v1050 = vpop.permute.xlu0 %1049
        %v1053 = vadd.f32 %v1028, %v1048
        %v1054 = vadd.f32 %v1032, %v1050
        %1055 = vrot.lane.b32.xlu0 %v1010, 96
        %v1056 = vpop.permute.xlu0 %1055
        %1057 = vrot.lane.b32.xlu0 %v1014, 96
        %v1058 = vpop.permute.xlu0 %1057
        %v1061 = vadd.f32 %v1043, %v1056
        %v1062 = vadd.f32 %v1044, %v1058
        %1063 = vrot.lane.b32.xlu0 %v1028, 96
        %v1064 = vpop.permute.xlu0 %1063
        %1065 = vrot.lane.b32.xlu0 %v1032, 96
        %v1066 = vpop.permute.xlu0 %1065
        %v1069 = vadd.f32 %v1053, %v1064
        %v1070 = vadd.f32 %v1054, %v1066
        %1071 = vrot.lane.b32.xlu0 %v1010, 80
        %v1072 = vpop.permute.xlu0 %1071
        %1073 = vrot.lane.b32.xlu0 %v1014, 80
        %v1074 = vpop.permute.xlu0 %1073
        %v1077 = vadd.f32 %v1061, %v1072
        %v1078 = vadd.f32 %v1062, %v1074
        %1079 = vrot.lane.b32.xlu0 %v1028, 80
        %v1080 = vpop.permute.xlu0 %1079
        %1081 = vrot.lane.b32.xlu0 %v1032, 80
        %v1082 = vpop.permute.xlu0 %1081
        %v1085 = vadd.f32 %v1069, %v1080
        %v1086 = vadd.f32 %v1070, %v1082
        %1087 = vrot.lane.b32.xlu0 %v1010, 64
        %v1088 = vpop.permute.xlu0 %1087
        %1089 = vrot.lane.b32.xlu0 %v1014, 64
        %v1090 = vpop.permute.xlu0 %1089
        %v1093 = vadd.f32 %v1077, %v1088
        %v1094 = vadd.f32 %v1078, %v1090
        %1095 = vrot.lane.b32.xlu0 %v1028, 64
        %v1096 = vpop.permute.xlu0 %1095
        %1097 = vrot.lane.b32.xlu0 %v1032, 64
        %v1098 = vpop.permute.xlu0 %1097
        %v1101 = vadd.f32 %v1085, %v1096
        %v1102 = vadd.f32 %v1086, %v1098
        %1103 = vrot.lane.b32.xlu0 %v1010, 48
        %v1104 = vpop.permute.xlu0 %1103
        %1105 = vrot.lane.b32.xlu0 %v1014, 48
        %v1106 = vpop.permute.xlu0 %1105
        %v1109 = vadd.f32 %v1093, %v1104
        %v1110 = vadd.f32 %v1094, %v1106
        %1111 = vrot.lane.b32.xlu0 %v1028, 48
        %v1112 = vpop.permute.xlu0 %1111
        %1113 = vrot.lane.b32.xlu0 %v1032, 48
        %v1114 = vpop.permute.xlu0 %1113
        %v1117 = vadd.f32 %v1101, %v1112
        %v1118 = vadd.f32 %v1102, %v1114
        %1119 = vrot.lane.b32.xlu0 %v1010, 32
        %v1120 = vpop.permute.xlu0 %1119
        %1121 = vrot.lane.b32.xlu0 %v1014, 32
        %v1122 = vpop.permute.xlu0 %1121
        %v1125 = vadd.f32 %v1109, %v1120
        %v1126 = vadd.f32 %v1110, %v1122
        %1127 = vrot.lane.b32.xlu0 %v1028, 32
        %v1128 = vpop.permute.xlu0 %1127
        %1129 = vrot.lane.b32.xlu0 %v1032, 32
        %v1130 = vpop.permute.xlu0 %1129
        %v1133 = vadd.f32 %v1117, %v1128
        %v1134 = vadd.f32 %v1118, %v1130
        %1135 = vrot.lane.b32.xlu0 %v1010, 16
        %v1136 = vpop.permute.xlu0 %1135
        %1137 = vrot.lane.b32.xlu0 %v1014, 16
        %v1138 = vpop.permute.xlu0 %1137
        %v1141 = vadd.f32 %v1125, %v1136
        %v1142 = vadd.f32 %v1126, %v1138
        %1143 = vrot.lane.b32.xlu0 %v1028, 16
        %v1144 = vpop.permute.xlu0 %1143
        %1145 = vrot.lane.b32.xlu0 %v1032, 16
        %v1146 = vpop.permute.xlu0 %1145
        %v1149 = vadd.f32 %v1133, %v1144
        %v1150 = vadd.f32 %v1134, %v1146
        %v1151 = vadd.f32 %v1141, %v1012
        %v1152 = vadd.f32 %v1142, %v1016
        %v1153 = vadd.f32 %v1149, %v1030
        %v1154 = vadd.f32 %v1150, %v1034
        %1157 = vrot.lane.b32.xlu0 %v1012, 112
        %v1158 = vpop.permute.xlu0 %1157
        %1159 = vrot.lane.b32.xlu0 %v1016, 112
        %v1160 = vpop.permute.xlu0 %1159
        %v1163 = vadd.f32 %v1151, %v1158
        %v1164 = vadd.f32 %v1152, %v1160
        %1167 = vrot.lane.b32.xlu0 %v1030, 112
        %v1168 = vpop.permute.xlu0 %1167
        %1169 = vrot.lane.b32.xlu0 %v1034, 112
        %v1170 = vpop.permute.xlu0 %1169
        %v1173 = vadd.f32 %v1153, %v1168
        %v1174 = vadd.f32 %v1154, %v1170
        %1175 = vrot.lane.b32.xlu0 %v1012, 96
        %v1176 = vpop.permute.xlu0 %1175
        %1177 = vrot.lane.b32.xlu0 %v1016, 96
        %v1178 = vpop.permute.xlu0 %1177
        %v1181 = vadd.f32 %v1163, %v1176
        %v1182 = vadd.f32 %v1164, %v1178
        %1183 = vrot.lane.b32.xlu0 %v1030, 96
        %v1184 = vpop.permute.xlu0 %1183
        %1185 = vrot.lane.b32.xlu0 %v1034, 96
        %v1186 = vpop.permute.xlu0 %1185
        %v1189 = vadd.f32 %v1173, %v1184
        %v1190 = vadd.f32 %v1174, %v1186
        %1191 = vrot.lane.b32.xlu0 %v1012, 80
        %v1192 = vpop.permute.xlu0 %1191
        %1193 = vrot.lane.b32.xlu0 %v1016, 80
        %v1194 = vpop.permute.xlu0 %1193
        %v1197 = vadd.f32 %v1181, %v1192
        %v1198 = vadd.f32 %v1182, %v1194
        %1199 = vrot.lane.b32.xlu0 %v1030, 80
        %v1200 = vpop.permute.xlu0 %1199
        %1201 = vrot.lane.b32.xlu0 %v1034, 80
        %v1202 = vpop.permute.xlu0 %1201
        %v1205 = vadd.f32 %v1189, %v1200
        %v1206 = vadd.f32 %v1190, %v1202
        %1207 = vrot.lane.b32.xlu0 %v1012, 64
        %v1208 = vpop.permute.xlu0 %1207
        %1209 = vrot.lane.b32.xlu0 %v1016, 64
        %v1210 = vpop.permute.xlu0 %1209
        %v1213 = vadd.f32 %v1197, %v1208
        %v1214 = vadd.f32 %v1198, %v1210
        %1215 = vrot.lane.b32.xlu0 %v1030, 64
        %v1216 = vpop.permute.xlu0 %1215
        %1217 = vrot.lane.b32.xlu0 %v1034, 64
        %v1218 = vpop.permute.xlu0 %1217
        %v1221 = vadd.f32 %v1205, %v1216
        %v1222 = vadd.f32 %v1206, %v1218
        %1223 = vrot.lane.b32.xlu0 %v1012, 48
        %v1224 = vpop.permute.xlu0 %1223
        %1225 = vrot.lane.b32.xlu0 %v1016, 48
        %v1226 = vpop.permute.xlu0 %1225
        %v1229 = vadd.f32 %v1213, %v1224
        %v1230 = vadd.f32 %v1214, %v1226
        %1231 = vrot.lane.b32.xlu0 %v1030, 48
        %v1232 = vpop.permute.xlu0 %1231
        %1233 = vrot.lane.b32.xlu0 %v1034, 48
        %v1234 = vpop.permute.xlu0 %1233
        %v1237 = vadd.f32 %v1221, %v1232
        %v1238 = vadd.f32 %v1222, %v1234
        %1239 = vrot.lane.b32.xlu0 %v1012, 32
        %v1240 = vpop.permute.xlu0 %1239
        %1241 = vrot.lane.b32.xlu0 %v1016, 32
        %v1242 = vpop.permute.xlu0 %1241
        %v1245 = vadd.f32 %v1229, %v1240
        %v1246 = vadd.f32 %v1230, %v1242
        %1247 = vrot.lane.b32.xlu0 %v1030, 32
        %v1248 = vpop.permute.xlu0 %1247
        %1249 = vrot.lane.b32.xlu0 %v1034, 32
        %v1250 = vpop.permute.xlu0 %1249
        %v1253 = vadd.f32 %v1237, %v1248
        %v1254 = vadd.f32 %v1238, %v1250
        %1255 = vrot.lane.b32.xlu0 %v1012, 16
        %v1256 = vpop.permute.xlu0 %1255
        %1257 = vrot.lane.b32.xlu0 %v1016, 16
        %v1258 = vpop.permute.xlu0 %1257
        %v1261 = vadd.f32 %v1245, %v1256
        %v1262 = vadd.f32 %v1246, %v1258
        %1263 = vrot.lane.b32.xlu0 %v1030, 16
        %v1264 = vpop.permute.xlu0 %1263
        %1265 = vrot.lane.b32.xlu0 %v1034, 16
        %v1266 = vpop.permute.xlu0 %1265
        %v1269 = vadd.f32 %v1253, %v1264
        %v1270 = vadd.f32 %v1254, %v1266
        %v1271 = vmax.f32 %v1261, 1e-30
        %v1272 = vmax.f32 %v1262, 1e-30
        %v1273 = vmax.f32 %v1269, 1e-30
        %v1274 = vmax.f32 %v1270, 1e-30
        %v1275 = vrcp.pop %v1271
        %v1276 = vmul.f32 1.0, %v1275
        %v1277 = vrcp.pop %v1272
        %v1278 = vmul.f32 1.0, %v1277
        %v1279 = vrcp.pop %v1273
        %v1280 = vmul.f32 1.0, %v1279
        %v1281 = vrcp.pop %v1274
        %v1282 = vmul.f32 1.0, %v1281
        %v1283 = vlog2.pop %v1271
        %v1284 = vmul.f32 %v1283, 0.6931472
        %v1285 = vlog2.pop %v1272
        %v1286 = vmul.f32 %v1285, 0.6931472
        %v1287 = vmul.f32 %v1028, %v1280
        %v1288 = vmul.f32 %v1032, %v1282
        %v1289 = vmin.f32 %v1287, 1.0
        %v1290 = vmin.f32 %v1288, 1.0
        %v1291 = vmul.f32 %v1010, %v1276
        %v1292 = vmul.f32 %v1014, %v1278
        %v1293 = vmin.f32 %v1291, 1.0
        %v1294 = vmin.f32 %v1292, 1.0
        %v1295 = vsub.f32 %v1005, %v1284
        %v1296 = vsub.f32 %v1007, %v1286
        %v1297 = vmax.f32 %v1295, -100.0
        %v1298 = vmax.f32 %v1296, -100.0
        %v1299 = vsub.f32 1.0, %v1293
        %v1300 = vsub.f32 1.0, %v1294
        %v1301 = vlog2.pop %v1299
        %v1302 = vmul.f32 %v1301, 0.6931472
        %v1303 = vlog2.pop %v1300
        %v1304 = vmul.f32 %v1303, 0.6931472
        %v1305 = vmax.f32 %v1302, -100.0
        %v1306 = vmax.f32 %v1304, -100.0
        %v1307 = vmul.f32 %v1289, %v1297
        %v1308 = vmul.f32 %v1290, %v1298
        %v1309 = vsub.f32 1.0, %v1289
        %v1310 = vsub.f32 1.0, %v1290
        %v1311 = vmul.f32 %v1309, %v1305
        %v1312 = vmul.f32 %v1310, %v1306
        %v1313 = vadd.f32 %v1307, %v1311
        %v1314 = vadd.f32 %v1308, %v1312
        %v1315 = vadd.f32 %v1313, 0.0
        %v1316 = vadd.f32 %v1314, 0.0
        %1319 = vrot.lane.b32.xlu0 %v1280, 16
        %v1320 = vpop.permute.xlu0 %1319
        %1321 = vrot.lane.b32.xlu0 %v1282, 16
        %v1322 = vpop.permute.xlu0 %1321
        %v1325 = vmul.f32 %v1028, %v1320
        %v1326 = vmul.f32 %v1032, %v1322
        %v1327 = vmin.f32 %v1325, 1.0
        %v1328 = vmin.f32 %v1326, 1.0
        %1331 = vrot.lane.b32.xlu0 %v1276, 16
        %v1332 = vpop.permute.xlu0 %1331
        %1333 = vrot.lane.b32.xlu0 %v1278, 16
        %v1334 = vpop.permute.xlu0 %1333
        %v1337 = vmul.f32 %v1010, %v1332
        %v1338 = vmul.f32 %v1014, %v1334
        %v1339 = vmin.f32 %v1337, 1.0
        %v1340 = vmin.f32 %v1338, 1.0
        %1343 = vrot.lane.b32.xlu0 %v1284, 16
        %v1344 = vpop.permute.xlu0 %1343
        %1345 = vrot.lane.b32.xlu0 %v1286, 16
        %v1346 = vpop.permute.xlu0 %1345
        %v1349 = vsub.f32 %v1005, %v1344
        %v1350 = vsub.f32 %v1007, %v1346
        %v1351 = vmax.f32 %v1349, -100.0
        %v1352 = vmax.f32 %v1350, -100.0
        %v1353 = vsub.f32 1.0, %v1339
        %v1354 = vsub.f32 1.0, %v1340
        %v1355 = vlog2.pop %v1353
        %v1356 = vmul.f32 %v1355, 0.6931472
        %v1357 = vlog2.pop %v1354
        %v1358 = vmul.f32 %v1357, 0.6931472
        %v1359 = vmax.f32 %v1356, -100.0
        %v1360 = vmax.f32 %v1358, -100.0
        %v1361 = vmul.f32 %v1327, %v1351
        %v1362 = vmul.f32 %v1328, %v1352
        %v1363 = vsub.f32 1.0, %v1327
        %v1364 = vsub.f32 1.0, %v1328
        %v1365 = vmul.f32 %v1363, %v1359
        %v1366 = vmul.f32 %v1364, %v1360
        %v1367 = vadd.f32 %v1361, %v1365
        %v1368 = vadd.f32 %v1362, %v1366
        %1371 = vrot.lane.b32.xlu0 %v1367, 112
        %v1372 = vpop.permute.xlu0 %1371
        %1373 = vrot.lane.b32.xlu0 %v1368, 112
        %v1374 = vpop.permute.xlu0 %1373
        %v1377 = vadd.f32 %v1315, %v1372
        %v1378 = vadd.f32 %v1316, %v1374
        %1379 = vrot.lane.b32.xlu0 %v1280, 32
        %v1380 = vpop.permute.xlu0 %1379
        %1381 = vrot.lane.b32.xlu0 %v1282, 32
        %v1382 = vpop.permute.xlu0 %1381
        %v1385 = vmul.f32 %v1028, %v1380
        %v1386 = vmul.f32 %v1032, %v1382
        %v1387 = vmin.f32 %v1385, 1.0
        %v1388 = vmin.f32 %v1386, 1.0
        %1389 = vrot.lane.b32.xlu0 %v1276, 32
        %v1390 = vpop.permute.xlu0 %1389
        %1391 = vrot.lane.b32.xlu0 %v1278, 32
        %v1392 = vpop.permute.xlu0 %1391
        %v1395 = vmul.f32 %v1010, %v1390
        %v1396 = vmul.f32 %v1014, %v1392
        %v1397 = vmin.f32 %v1395, 1.0
        %v1398 = vmin.f32 %v1396, 1.0
        %1399 = vrot.lane.b32.xlu0 %v1284, 32
        %v1400 = vpop.permute.xlu0 %1399
        %1401 = vrot.lane.b32.xlu0 %v1286, 32
        %v1402 = vpop.permute.xlu0 %1401
        %v1405 = vsub.f32 %v1005, %v1400
        %v1406 = vsub.f32 %v1007, %v1402
        %v1407 = vmax.f32 %v1405, -100.0
        %v1408 = vmax.f32 %v1406, -100.0
        %v1409 = vsub.f32 1.0, %v1397
        %v1410 = vsub.f32 1.0, %v1398
        %v1411 = vlog2.pop %v1409
        %v1412 = vmul.f32 %v1411, 0.6931472
        %v1413 = vlog2.pop %v1410
        %v1414 = vmul.f32 %v1413, 0.6931472
        %v1415 = vmax.f32 %v1412, -100.0
        %v1416 = vmax.f32 %v1414, -100.0
        %v1417 = vmul.f32 %v1387, %v1407
        %v1418 = vmul.f32 %v1388, %v1408
        %v1419 = vsub.f32 1.0, %v1387
        %v1420 = vsub.f32 1.0, %v1388
        %v1421 = vmul.f32 %v1419, %v1415
        %v1422 = vmul.f32 %v1420, %v1416
        %v1423 = vadd.f32 %v1417, %v1421
        %v1424 = vadd.f32 %v1418, %v1422
        %1427 = vrot.lane.b32.xlu0 %v1423, 96
        %v1428 = vpop.permute.xlu0 %1427
        %1429 = vrot.lane.b32.xlu0 %v1424, 96
        %v1430 = vpop.permute.xlu0 %1429
        %v1433 = vadd.f32 %v1377, %v1428
        %v1434 = vadd.f32 %v1378, %v1430
        %1435 = vrot.lane.b32.xlu0 %v1280, 48
        %v1436 = vpop.permute.xlu0 %1435
        %1437 = vrot.lane.b32.xlu0 %v1282, 48
        %v1438 = vpop.permute.xlu0 %1437
        %v1441 = vmul.f32 %v1028, %v1436
        %v1442 = vmul.f32 %v1032, %v1438
        %v1443 = vmin.f32 %v1441, 1.0
        %v1444 = vmin.f32 %v1442, 1.0
        %1445 = vrot.lane.b32.xlu0 %v1276, 48
        %v1446 = vpop.permute.xlu0 %1445
        %1447 = vrot.lane.b32.xlu0 %v1278, 48
        %v1448 = vpop.permute.xlu0 %1447
        %v1451 = vmul.f32 %v1010, %v1446
        %v1452 = vmul.f32 %v1014, %v1448
        %v1453 = vmin.f32 %v1451, 1.0
        %v1454 = vmin.f32 %v1452, 1.0
        %1455 = vrot.lane.b32.xlu0 %v1284, 48
        %v1456 = vpop.permute.xlu0 %1455
        %1457 = vrot.lane.b32.xlu0 %v1286, 48
        %v1458 = vpop.permute.xlu0 %1457
        %v1461 = vsub.f32 %v1005, %v1456
        %v1462 = vsub.f32 %v1007, %v1458
        %v1463 = vmax.f32 %v1461, -100.0
        %v1464 = vmax.f32 %v1462, -100.0
        %v1465 = vsub.f32 1.0, %v1453
        %v1466 = vsub.f32 1.0, %v1454
        %v1467 = vlog2.pop %v1465
        %v1468 = vmul.f32 %v1467, 0.6931472
        %v1469 = vlog2.pop %v1466
        %v1470 = vmul.f32 %v1469, 0.6931472
        %v1471 = vmax.f32 %v1468, -100.0
        %v1472 = vmax.f32 %v1470, -100.0
        %v1473 = vmul.f32 %v1443, %v1463
        %v1474 = vmul.f32 %v1444, %v1464
        %v1475 = vsub.f32 1.0, %v1443
        %v1476 = vsub.f32 1.0, %v1444
        %v1477 = vmul.f32 %v1475, %v1471
        %v1478 = vmul.f32 %v1476, %v1472
        %v1479 = vadd.f32 %v1473, %v1477
        %v1480 = vadd.f32 %v1474, %v1478
        %1483 = vrot.lane.b32.xlu0 %v1479, 80
        %v1484 = vpop.permute.xlu0 %1483
        %1485 = vrot.lane.b32.xlu0 %v1480, 80
        %v1486 = vpop.permute.xlu0 %1485
        %v1489 = vadd.f32 %v1433, %v1484
        %v1490 = vadd.f32 %v1434, %v1486
        %1491 = vrot.lane.b32.xlu0 %v1280, 64
        %v1492 = vpop.permute.xlu0 %1491
        %1493 = vrot.lane.b32.xlu0 %v1282, 64
        %v1494 = vpop.permute.xlu0 %1493
        %v1497 = vmul.f32 %v1028, %v1492
        %v1498 = vmul.f32 %v1032, %v1494
        %v1499 = vmin.f32 %v1497, 1.0
        %v1500 = vmin.f32 %v1498, 1.0
        %1501 = vrot.lane.b32.xlu0 %v1276, 64
        %v1502 = vpop.permute.xlu0 %1501
        %1503 = vrot.lane.b32.xlu0 %v1278, 64
        %v1504 = vpop.permute.xlu0 %1503
        %v1507 = vmul.f32 %v1010, %v1502
        %v1508 = vmul.f32 %v1014, %v1504
        %v1509 = vmin.f32 %v1507, 1.0
        %v1510 = vmin.f32 %v1508, 1.0
        %1511 = vrot.lane.b32.xlu0 %v1284, 64
        %v1512 = vpop.permute.xlu0 %1511
        %1513 = vrot.lane.b32.xlu0 %v1286, 64
        %v1514 = vpop.permute.xlu0 %1513
        %v1517 = vsub.f32 %v1005, %v1512
        %v1518 = vsub.f32 %v1007, %v1514
        %v1519 = vmax.f32 %v1517, -100.0
        %v1520 = vmax.f32 %v1518, -100.0
        %v1521 = vsub.f32 1.0, %v1509
        %v1522 = vsub.f32 1.0, %v1510
        %v1523 = vlog2.pop %v1521
        %v1524 = vmul.f32 %v1523, 0.6931472
        %v1525 = vlog2.pop %v1522
        %v1526 = vmul.f32 %v1525, 0.6931472
        %v1527 = vmax.f32 %v1524, -100.0
        %v1528 = vmax.f32 %v1526, -100.0
        %v1529 = vmul.f32 %v1499, %v1519
        %v1530 = vmul.f32 %v1500, %v1520
        %v1531 = vsub.f32 1.0, %v1499
        %v1532 = vsub.f32 1.0, %v1500
        %v1533 = vmul.f32 %v1531, %v1527
        %v1534 = vmul.f32 %v1532, %v1528
        %v1535 = vadd.f32 %v1529, %v1533
        %v1536 = vadd.f32 %v1530, %v1534
        %1539 = vrot.lane.b32.xlu0 %v1535, 64
        %v1540 = vpop.permute.xlu0 %1539
        %1541 = vrot.lane.b32.xlu0 %v1536, 64
        %v1542 = vpop.permute.xlu0 %1541
        %v1545 = vadd.f32 %v1489, %v1540
        %v1546 = vadd.f32 %v1490, %v1542
        %1547 = vrot.lane.b32.xlu0 %v1280, 80
        %v1548 = vpop.permute.xlu0 %1547
        %1549 = vrot.lane.b32.xlu0 %v1282, 80
        %v1550 = vpop.permute.xlu0 %1549
        %v1553 = vmul.f32 %v1028, %v1548
        %v1554 = vmul.f32 %v1032, %v1550
        %v1555 = vmin.f32 %v1553, 1.0
        %v1556 = vmin.f32 %v1554, 1.0
        %1557 = vrot.lane.b32.xlu0 %v1276, 80
        %v1558 = vpop.permute.xlu0 %1557
        %1559 = vrot.lane.b32.xlu0 %v1278, 80
        %v1560 = vpop.permute.xlu0 %1559
        %v1563 = vmul.f32 %v1010, %v1558
        %v1564 = vmul.f32 %v1014, %v1560
        %v1565 = vmin.f32 %v1563, 1.0
        %v1566 = vmin.f32 %v1564, 1.0
        %1567 = vrot.lane.b32.xlu0 %v1284, 80
        %v1568 = vpop.permute.xlu0 %1567
        %1569 = vrot.lane.b32.xlu0 %v1286, 80
        %v1570 = vpop.permute.xlu0 %1569
        %v1573 = vsub.f32 %v1005, %v1568
        %v1574 = vsub.f32 %v1007, %v1570
        %v1575 = vmax.f32 %v1573, -100.0
        %v1576 = vmax.f32 %v1574, -100.0
        %v1577 = vsub.f32 1.0, %v1565
        %v1578 = vsub.f32 1.0, %v1566
        %v1579 = vlog2.pop %v1577
        %v1580 = vmul.f32 %v1579, 0.6931472
        %v1581 = vlog2.pop %v1578
        %v1582 = vmul.f32 %v1581, 0.6931472
        %v1583 = vmax.f32 %v1580, -100.0
        %v1584 = vmax.f32 %v1582, -100.0
        %v1585 = vmul.f32 %v1555, %v1575
        %v1586 = vmul.f32 %v1556, %v1576
        %v1587 = vsub.f32 1.0, %v1555
        %v1588 = vsub.f32 1.0, %v1556
        %v1589 = vmul.f32 %v1587, %v1583
        %v1590 = vmul.f32 %v1588, %v1584
        %v1591 = vadd.f32 %v1585, %v1589
        %v1592 = vadd.f32 %v1586, %v1590
        %1595 = vrot.lane.b32.xlu0 %v1591, 48
        %v1596 = vpop.permute.xlu0 %1595
        %1597 = vrot.lane.b32.xlu0 %v1592, 48
        %v1598 = vpop.permute.xlu0 %1597
        %v1601 = vadd.f32 %v1545, %v1596
        %v1602 = vadd.f32 %v1546, %v1598
        %1603 = vrot.lane.b32.xlu0 %v1280, 96
        %v1604 = vpop.permute.xlu0 %1603
        %1605 = vrot.lane.b32.xlu0 %v1282, 96
        %v1606 = vpop.permute.xlu0 %1605
        %v1609 = vmul.f32 %v1028, %v1604
        %v1610 = vmul.f32 %v1032, %v1606
        %v1611 = vmin.f32 %v1609, 1.0
        %v1612 = vmin.f32 %v1610, 1.0
        %1613 = vrot.lane.b32.xlu0 %v1276, 96
        %v1614 = vpop.permute.xlu0 %1613
        %1615 = vrot.lane.b32.xlu0 %v1278, 96
        %v1616 = vpop.permute.xlu0 %1615
        %v1619 = vmul.f32 %v1010, %v1614
        %v1620 = vmul.f32 %v1014, %v1616
        %v1621 = vmin.f32 %v1619, 1.0
        %v1622 = vmin.f32 %v1620, 1.0
        %1623 = vrot.lane.b32.xlu0 %v1284, 96
        %v1624 = vpop.permute.xlu0 %1623
        %1625 = vrot.lane.b32.xlu0 %v1286, 96
        %v1626 = vpop.permute.xlu0 %1625
        %v1629 = vsub.f32 %v1005, %v1624
        %v1630 = vsub.f32 %v1007, %v1626
        %v1631 = vmax.f32 %v1629, -100.0
        %v1632 = vmax.f32 %v1630, -100.0
        %v1633 = vsub.f32 1.0, %v1621
        %v1634 = vsub.f32 1.0, %v1622
        %v1635 = vlog2.pop %v1633
        %v1636 = vmul.f32 %v1635, 0.6931472
        %v1637 = vlog2.pop %v1634
        %v1638 = vmul.f32 %v1637, 0.6931472
        %v1639 = vmax.f32 %v1636, -100.0
        %v1640 = vmax.f32 %v1638, -100.0
        %v1641 = vmul.f32 %v1611, %v1631
        %v1642 = vmul.f32 %v1612, %v1632
        %v1643 = vsub.f32 1.0, %v1611
        %v1644 = vsub.f32 1.0, %v1612
        %v1645 = vmul.f32 %v1643, %v1639
        %v1646 = vmul.f32 %v1644, %v1640
        %v1647 = vadd.f32 %v1641, %v1645
        %v1648 = vadd.f32 %v1642, %v1646
        %1651 = vrot.lane.b32.xlu0 %v1647, 32
        %v1652 = vpop.permute.xlu0 %1651
        %1653 = vrot.lane.b32.xlu0 %v1648, 32
        %v1654 = vpop.permute.xlu0 %1653
        %v1657 = vadd.f32 %v1601, %v1652
        %v1658 = vadd.f32 %v1602, %v1654
        %1659 = vrot.lane.b32.xlu0 %v1280, 112
        %v1660 = vpop.permute.xlu0 %1659
        %1661 = vrot.lane.b32.xlu0 %v1282, 112
        %v1662 = vpop.permute.xlu0 %1661
        %v1665 = vmul.f32 %v1028, %v1660
        %v1666 = vmul.f32 %v1032, %v1662
        %v1667 = vmin.f32 %v1665, 1.0
        %v1668 = vmin.f32 %v1666, 1.0
        %1669 = vrot.lane.b32.xlu0 %v1276, 112
        %v1670 = vpop.permute.xlu0 %1669
        %1671 = vrot.lane.b32.xlu0 %v1278, 112
        %v1672 = vpop.permute.xlu0 %1671
        %v1675 = vmul.f32 %v1010, %v1670
        %v1676 = vmul.f32 %v1014, %v1672
        %v1677 = vmin.f32 %v1675, 1.0
        %v1678 = vmin.f32 %v1676, 1.0
        %1679 = vrot.lane.b32.xlu0 %v1284, 112
        %v1680 = vpop.permute.xlu0 %1679
        %1681 = vrot.lane.b32.xlu0 %v1286, 112
        %v1682 = vpop.permute.xlu0 %1681
        %v1685 = vsub.f32 %v1005, %v1680
        %v1686 = vsub.f32 %v1007, %v1682
        %v1687 = vmax.f32 %v1685, -100.0
        %v1688 = vmax.f32 %v1686, -100.0
        %v1689 = vsub.f32 1.0, %v1677
        %v1690 = vsub.f32 1.0, %v1678
        %v1691 = vlog2.pop %v1689
        %v1692 = vmul.f32 %v1691, 0.6931472
        %v1693 = vlog2.pop %v1690
        %v1694 = vmul.f32 %v1693, 0.6931472
        %v1695 = vmax.f32 %v1692, -100.0
        %v1696 = vmax.f32 %v1694, -100.0
        %v1697 = vmul.f32 %v1667, %v1687
        %v1698 = vmul.f32 %v1668, %v1688
        %v1699 = vsub.f32 1.0, %v1667
        %v1700 = vsub.f32 1.0, %v1668
        %v1701 = vmul.f32 %v1699, %v1695
        %v1702 = vmul.f32 %v1700, %v1696
        %v1703 = vadd.f32 %v1697, %v1701
        %v1704 = vadd.f32 %v1698, %v1702
        %1707 = vrot.lane.b32.xlu0 %v1703, 16
        %v1708 = vpop.permute.xlu0 %1707
        %1709 = vrot.lane.b32.xlu0 %v1704, 16
        %v1710 = vpop.permute.xlu0 %1709
        %v1713 = vadd.f32 %v1657, %v1708
        %v1714 = vadd.f32 %v1658, %v1710
        %v1715 = vmul.f32 %v1030, %v1280
        %v1716 = vmul.f32 %v1034, %v1282
        %v1717 = vmin.f32 %v1715, 1.0
        %v1718 = vmin.f32 %v1716, 1.0
        %v1719 = vmul.f32 %v1012, %v1276
        %v1720 = vmul.f32 %v1016, %v1278
        %v1721 = vmin.f32 %v1719, 1.0
        %v1722 = vmin.f32 %v1720, 1.0
        %v1723 = vsub.f32 %v1006, %v1284
        %v1724 = vsub.f32 %v1008, %v1286
        %v1725 = vmax.f32 %v1723, -100.0
        %v1726 = vmax.f32 %v1724, -100.0
        %v1727 = vsub.f32 1.0, %v1721
        %v1728 = vsub.f32 1.0, %v1722
        %v1729 = vlog2.pop %v1727
        %v1730 = vmul.f32 %v1729, 0.6931472
        %v1731 = vlog2.pop %v1728
        %v1732 = vmul.f32 %v1731, 0.6931472
        %v1733 = vmax.f32 %v1730, -100.0
        %v1734 = vmax.f32 %v1732, -100.0
        %v1735 = vmul.f32 %v1717, %v1725
        %v1736 = vmul.f32 %v1718, %v1726
        %v1737 = vsub.f32 1.0, %v1717
        %v1738 = vsub.f32 1.0, %v1718
        %v1739 = vmul.f32 %v1737, %v1733
        %v1740 = vmul.f32 %v1738, %v1734
        %v1741 = vadd.f32 %v1735, %v1739
        %v1742 = vadd.f32 %v1736, %v1740
        %v1743 = vadd.f32 %v1713, %v1741
        %v1744 = vadd.f32 %v1714, %v1742
        %v1745 = vmul.f32 %v1030, %v1320
        %v1746 = vmul.f32 %v1034, %v1322
        %v1747 = vmin.f32 %v1745, 1.0
        %v1748 = vmin.f32 %v1746, 1.0
        %v1749 = vmul.f32 %v1012, %v1332
        %v1750 = vmul.f32 %v1016, %v1334
        %v1751 = vmin.f32 %v1749, 1.0
        %v1752 = vmin.f32 %v1750, 1.0
        %v1753 = vsub.f32 %v1006, %v1344
        %v1754 = vsub.f32 %v1008, %v1346
        %v1755 = vmax.f32 %v1753, -100.0
        %v1756 = vmax.f32 %v1754, -100.0
        %v1757 = vsub.f32 1.0, %v1751
        %v1758 = vsub.f32 1.0, %v1752
        %v1759 = vlog2.pop %v1757
        %v1760 = vmul.f32 %v1759, 0.6931472
        %v1761 = vlog2.pop %v1758
        %v1762 = vmul.f32 %v1761, 0.6931472
        %v1763 = vmax.f32 %v1760, -100.0
        %v1764 = vmax.f32 %v1762, -100.0
        %v1765 = vmul.f32 %v1747, %v1755
        %v1766 = vmul.f32 %v1748, %v1756
        %v1767 = vsub.f32 1.0, %v1747
        %v1768 = vsub.f32 1.0, %v1748
        %v1769 = vmul.f32 %v1767, %v1763
        %v1770 = vmul.f32 %v1768, %v1764
        %v1771 = vadd.f32 %v1765, %v1769
        %v1772 = vadd.f32 %v1766, %v1770
        %1775 = vrot.lane.b32.xlu0 %v1771, 112
        %v1776 = vpop.permute.xlu0 %1775
        %1777 = vrot.lane.b32.xlu0 %v1772, 112
        %v1778 = vpop.permute.xlu0 %1777
        %v1781 = vadd.f32 %v1743, %v1776
        %v1782 = vadd.f32 %v1744, %v1778
        %v1783 = vmul.f32 %v1030, %v1380
        %v1784 = vmul.f32 %v1034, %v1382
        %v1785 = vmin.f32 %v1783, 1.0
        %v1786 = vmin.f32 %v1784, 1.0
        %v1787 = vmul.f32 %v1012, %v1390
        %v1788 = vmul.f32 %v1016, %v1392
        %v1789 = vmin.f32 %v1787, 1.0
        %v1790 = vmin.f32 %v1788, 1.0
        %v1791 = vsub.f32 %v1006, %v1400
        %v1792 = vsub.f32 %v1008, %v1402
        %v1793 = vmax.f32 %v1791, -100.0
        %v1794 = vmax.f32 %v1792, -100.0
        %v1795 = vsub.f32 1.0, %v1789
        %v1796 = vsub.f32 1.0, %v1790
        %v1797 = vlog2.pop %v1795
        %v1798 = vmul.f32 %v1797, 0.6931472
        %v1799 = vlog2.pop %v1796
        %v1800 = vmul.f32 %v1799, 0.6931472
        %v1801 = vmax.f32 %v1798, -100.0
        %v1802 = vmax.f32 %v1800, -100.0
        %v1803 = vmul.f32 %v1785, %v1793
        %v1804 = vmul.f32 %v1786, %v1794
        %v1805 = vsub.f32 1.0, %v1785
        %v1806 = vsub.f32 1.0, %v1786
        %v1807 = vmul.f32 %v1805, %v1801
        %v1808 = vmul.f32 %v1806, %v1802
        %v1809 = vadd.f32 %v1803, %v1807
        %v1810 = vadd.f32 %v1804, %v1808
        %1813 = vrot.lane.b32.xlu0 %v1809, 96
        %v1814 = vpop.permute.xlu0 %1813
        %1815 = vrot.lane.b32.xlu0 %v1810, 96
        %v1816 = vpop.permute.xlu0 %1815
        %v1819 = vadd.f32 %v1781, %v1814
        %v1820 = vadd.f32 %v1782, %v1816
        %v1821 = vmul.f32 %v1030, %v1436
        %v1822 = vmul.f32 %v1034, %v1438
        %v1823 = vmin.f32 %v1821, 1.0
        %v1824 = vmin.f32 %v1822, 1.0
        %v1825 = vmul.f32 %v1012, %v1446
        %v1826 = vmul.f32 %v1016, %v1448
        %v1827 = vmin.f32 %v1825, 1.0
        %v1828 = vmin.f32 %v1826, 1.0
        %v1829 = vsub.f32 %v1006, %v1456
        %v1830 = vsub.f32 %v1008, %v1458
        %v1831 = vmax.f32 %v1829, -100.0
        %v1832 = vmax.f32 %v1830, -100.0
        %v1833 = vsub.f32 1.0, %v1827
        %v1834 = vsub.f32 1.0, %v1828
        %v1835 = vlog2.pop %v1833
        %v1836 = vmul.f32 %v1835, 0.6931472
        %v1837 = vlog2.pop %v1834
        %v1838 = vmul.f32 %v1837, 0.6931472
        %v1839 = vmax.f32 %v1836, -100.0
        %v1840 = vmax.f32 %v1838, -100.0
        %v1841 = vmul.f32 %v1823, %v1831
        %v1842 = vmul.f32 %v1824, %v1832
        %v1843 = vsub.f32 1.0, %v1823
        %v1844 = vsub.f32 1.0, %v1824
        %v1845 = vmul.f32 %v1843, %v1839
        %v1846 = vmul.f32 %v1844, %v1840
        %v1847 = vadd.f32 %v1841, %v1845
        %v1848 = vadd.f32 %v1842, %v1846
        %1851 = vrot.lane.b32.xlu0 %v1847, 80
        %v1852 = vpop.permute.xlu0 %1851
        %1853 = vrot.lane.b32.xlu0 %v1848, 80
        %v1854 = vpop.permute.xlu0 %1853
        %v1857 = vadd.f32 %v1819, %v1852
        %v1858 = vadd.f32 %v1820, %v1854
        %v1859 = vmul.f32 %v1030, %v1492
        %v1860 = vmul.f32 %v1034, %v1494
        %v1861 = vmin.f32 %v1859, 1.0
        %v1862 = vmin.f32 %v1860, 1.0
        %v1863 = vmul.f32 %v1012, %v1502
        %v1864 = vmul.f32 %v1016, %v1504
        %v1865 = vmin.f32 %v1863, 1.0
        %v1866 = vmin.f32 %v1864, 1.0
        %v1867 = vsub.f32 %v1006, %v1512
        %v1868 = vsub.f32 %v1008, %v1514
        %v1869 = vmax.f32 %v1867, -100.0
        %v1870 = vmax.f32 %v1868, -100.0
        %v1871 = vsub.f32 1.0, %v1865
        %v1872 = vsub.f32 1.0, %v1866
        %v1873 = vlog2.pop %v1871
        %v1874 = vmul.f32 %v1873, 0.6931472
        %v1875 = vlog2.pop %v1872
        %v1876 = vmul.f32 %v1875, 0.6931472
        %v1877 = vmax.f32 %v1874, -100.0
        %v1878 = vmax.f32 %v1876, -100.0
        %v1879 = vmul.f32 %v1861, %v1869
        %v1880 = vmul.f32 %v1862, %v1870
        %v1881 = vsub.f32 1.0, %v1861
        %v1882 = vsub.f32 1.0, %v1862
        %v1883 = vmul.f32 %v1881, %v1877
        %v1884 = vmul.f32 %v1882, %v1878
        %v1885 = vadd.f32 %v1879, %v1883
        %v1886 = vadd.f32 %v1880, %v1884
        %1889 = vrot.lane.b32.xlu0 %v1885, 64
        %v1890 = vpop.permute.xlu0 %1889
        %1891 = vrot.lane.b32.xlu0 %v1886, 64
        %v1892 = vpop.permute.xlu0 %1891
        %v1895 = vadd.f32 %v1857, %v1890
        %v1896 = vadd.f32 %v1858, %v1892
        %v1897 = vmul.f32 %v1030, %v1548
        %v1898 = vmul.f32 %v1034, %v1550
        %v1899 = vmin.f32 %v1897, 1.0
        %v1900 = vmin.f32 %v1898, 1.0
        %v1901 = vmul.f32 %v1012, %v1558
        %v1902 = vmul.f32 %v1016, %v1560
        %v1903 = vmin.f32 %v1901, 1.0
        %v1904 = vmin.f32 %v1902, 1.0
        %v1905 = vsub.f32 %v1006, %v1568
        %v1906 = vsub.f32 %v1008, %v1570
        %v1907 = vmax.f32 %v1905, -100.0
        %v1908 = vmax.f32 %v1906, -100.0
        %v1909 = vsub.f32 1.0, %v1903
        %v1910 = vsub.f32 1.0, %v1904
        %v1911 = vlog2.pop %v1909
        %v1912 = vmul.f32 %v1911, 0.6931472
        %v1913 = vlog2.pop %v1910
        %v1914 = vmul.f32 %v1913, 0.6931472
        %v1915 = vmax.f32 %v1912, -100.0
        %v1916 = vmax.f32 %v1914, -100.0
        %v1917 = vmul.f32 %v1899, %v1907
        %v1918 = vmul.f32 %v1900, %v1908
        %v1919 = vsub.f32 1.0, %v1899
        %v1920 = vsub.f32 1.0, %v1900
        %v1921 = vmul.f32 %v1919, %v1915
        %v1922 = vmul.f32 %v1920, %v1916
        %v1923 = vadd.f32 %v1917, %v1921
        %v1924 = vadd.f32 %v1918, %v1922
        %1927 = vrot.lane.b32.xlu0 %v1923, 48
        %v1928 = vpop.permute.xlu0 %1927
        %1929 = vrot.lane.b32.xlu0 %v1924, 48
        %v1930 = vpop.permute.xlu0 %1929
        %v1933 = vadd.f32 %v1895, %v1928
        %v1934 = vadd.f32 %v1896, %v1930
        %v1935 = vmul.f32 %v1030, %v1604
        %v1936 = vmul.f32 %v1034, %v1606
        %v1937 = vmin.f32 %v1935, 1.0
        %v1938 = vmin.f32 %v1936, 1.0
        %v1939 = vmul.f32 %v1012, %v1614
        %v1940 = vmul.f32 %v1016, %v1616
        %v1941 = vmin.f32 %v1939, 1.0
        %v1942 = vmin.f32 %v1940, 1.0
        %v1943 = vsub.f32 %v1006, %v1624
        %v1944 = vsub.f32 %v1008, %v1626
        %v1945 = vmax.f32 %v1943, -100.0
        %v1946 = vmax.f32 %v1944, -100.0
        %v1947 = vsub.f32 1.0, %v1941
        %v1948 = vsub.f32 1.0, %v1942
        %v1949 = vlog2.pop %v1947
        %v1950 = vmul.f32 %v1949, 0.6931472
        %v1951 = vlog2.pop %v1948
        %v1952 = vmul.f32 %v1951, 0.6931472
        %v1953 = vmax.f32 %v1950, -100.0
        %v1954 = vmax.f32 %v1952, -100.0
        %v1955 = vmul.f32 %v1937, %v1945
        %v1956 = vmul.f32 %v1938, %v1946
        %v1957 = vsub.f32 1.0, %v1937
        %v1958 = vsub.f32 1.0, %v1938
        %v1959 = vmul.f32 %v1957, %v1953
        %v1960 = vmul.f32 %v1958, %v1954
        %v1961 = vadd.f32 %v1955, %v1959
        %v1962 = vadd.f32 %v1956, %v1960
        %1965 = vrot.lane.b32.xlu0 %v1961, 32
        %v1966 = vpop.permute.xlu0 %1965
        %1967 = vrot.lane.b32.xlu0 %v1962, 32
        %v1968 = vpop.permute.xlu0 %1967
        %v1971 = vadd.f32 %v1933, %v1966
        %v1972 = vadd.f32 %v1934, %v1968
        %v1973 = vmul.f32 %v1030, %v1660
        %v1974 = vmul.f32 %v1034, %v1662
        %v1975 = vmin.f32 %v1973, 1.0
        %v1976 = vmin.f32 %v1974, 1.0
        %v1977 = vmul.f32 %v1012, %v1670
        %v1978 = vmul.f32 %v1016, %v1672
        %v1979 = vmin.f32 %v1977, 1.0
        %v1980 = vmin.f32 %v1978, 1.0
        %v1981 = vsub.f32 %v1006, %v1680
        %v1982 = vsub.f32 %v1008, %v1682
        %v1983 = vmax.f32 %v1981, -100.0
        %v1984 = vmax.f32 %v1982, -100.0
        %v1985 = vsub.f32 1.0, %v1979
        %v1986 = vsub.f32 1.0, %v1980
        %v1987 = vlog2.pop %v1985
        %v1988 = vmul.f32 %v1987, 0.6931472
        %v1989 = vlog2.pop %v1986
        %v1990 = vmul.f32 %v1989, 0.6931472
        %v1991 = vmax.f32 %v1988, -100.0
        %v1992 = vmax.f32 %v1990, -100.0
        %v1993 = vmul.f32 %v1975, %v1983
        %v1994 = vmul.f32 %v1976, %v1984
        %v1995 = vsub.f32 1.0, %v1975
        %v1996 = vsub.f32 1.0, %v1976
        %v1997 = vmul.f32 %v1995, %v1991
        %v1998 = vmul.f32 %v1996, %v1992
        %v1999 = vadd.f32 %v1993, %v1997
        %v2000 = vadd.f32 %v1994, %v1998
        %2003 = vrot.lane.b32.xlu0 %v1999, 16
        %v2004 = vpop.permute.xlu0 %2003
        %2005 = vrot.lane.b32.xlu0 %v2000, 16
        %v2006 = vpop.permute.xlu0 %2005
        %v2009 = vadd.f32 %v1971, %v2004
        %v2010 = vadd.f32 %v1972, %v2006
        %v2011 = vsel %vm379, %v2009, 0.0
        %v2012 = vsel %vm379, %v2010, 0.0
        %v2013 = vadd.f32 %v2011, %v2012
        %2014 = vadd.xlane.f32.xlu0 %v2013
        %v2015 = vpop.xlane.xlu0 %2014
        %v2016 = vrot.slane %v2015, 4
        %v2017 = vadd.f32 %v2015, %v2016
        %v2018 = vrot.slane %v2017, 2
        %v2019 = vadd.f32 %v2017, %v2018
        %v2020 = vrot.slane %v2019, 1
        %v2021 = vadd.f32 %v2019, %v2020
        %s2022 = vtos %v2021
        %s2023 = ssub.f32 0.0, %s2022
        %2024 = vst.msk [vmem:[%s304] sm:$0xff] %vm884, %v868
        %2025 = vst.msk [vmem:[%s304 + $0x8] sm:$0xff] %vm884, %v871
        %vm2026 = vcmask 15368
        %2027 = vst.msk [vmem:[%s304] sm:$0xff] %vm2026, %v956
        %2028 = vst.msk [vmem:[%s304 + $0x8] sm:$0xff] %vm2026, %v959
        %vm2029 = vcmask 23568
        %2030 = vst.msk [vmem:[%s304] sm:$0xff] %vm2029, %v995
        %2031 = vst.msk [vmem:[%s304 + $0x8] sm:$0xff] %vm2029, %v998
        %v2032 = vlaneseq
        %v2033 = vshrl.u32 %v2032, 7
        %v2034 = vadd.s32 %v2033, 8
        %vm2035 = vcmp.eq.s32.totalorder %v2033, 0
        %vm2036 = vcmp.eq.s32.totalorder %v2034, 0
        %v2037 = vstv %s829
        %v2038 = vsel %vm2035, %v2037, 0.0
        %v2039 = vsel %vm2036, %v2037, 0.0
        %vm2040 = vcmp.eq.s32.totalorder %v2033, 1
        %vm2041 = vcmp.eq.s32.totalorder %v2034, 1
        %v2042 = vstv %s853
        %v2043 = vsel %vm2040, %v2042, 0.0
        %v2044 = vsel %vm2041, %v2042, 0.0
        %v2045 = vadd.f32 %v2038, %v2043
        %v2046 = vadd.f32 %v2039, %v2044
        %vm2047 = vcmp.eq.s32.totalorder %v2033, 2
        %vm2048 = vcmp.eq.s32.totalorder %v2034, 2
        %v2049 = vstv %s896
        %v2050 = vsel %vm2047, %v2049, 0.0
        %v2051 = vsel %vm2048, %v2049, 0.0
        %v2052 = vadd.f32 %v2045, %v2050
        %v2053 = vadd.f32 %v2046, %v2051
        %vm2054 = vcmp.eq.s32.totalorder %v2033, 3
        %vm2055 = vcmp.eq.s32.totalorder %v2034, 3
        %v2056 = vstv %s920
        %v2057 = vsel %vm2054, %v2056, 0.0
        %v2058 = vsel %vm2055, %v2056, 0.0
        %v2059 = vadd.f32 %v2052, %v2057
        %v2060 = vadd.f32 %v2053, %v2058
        %vm2061 = vcmp.eq.s32.totalorder %v2033, 4
        %vm2062 = vcmp.eq.s32.totalorder %v2034, 4
        %v2063 = vstv %s865
        %v2064 = vsel %vm2061, %v2063, 0.0
        %v2065 = vsel %vm2062, %v2063, 0.0
        %v2066 = vadd.f32 %v2059, %v2064
        %v2067 = vadd.f32 %v2060, %v2065
        %vm2068 = vcmp.eq.s32.totalorder %v2033, 5
        %vm2069 = vcmp.eq.s32.totalorder %v2034, 5
        %v2070 = vstv %s2023
        %v2071 = vsel %vm2068, %v2070, 0.0
        %v2072 = vsel %vm2069, %v2070, 0.0
        %v2073 = vadd.f32 %v2066, %v2071
        %v2074 = vadd.f32 %v2067, %v2072
        %vm2075 = vcmask 31768
        %2076 = vst.msk [vmem:[%s304] sm:$0xff] %vm2075, %v2073
        %2077 = vst.msk [vmem:[%s304 + $0x8] sm:$0xff] %vm2075, %v2074
        %p2078 = scmp.lt.s32.totalorder %s22, 2
        %s2079 = scalar_select %p2078, %s22, 2
        %s2080 = smul.addr %s2079, 2
        %s2081 = smul.addr %s2080, 8
        %s2082 = scalar_lea.vmem %s5, %s2081
        // Predicated region
        $region49: #{tpu_custom_call.1} parent=39 // pred_check
          %p2083 = pneg %p160
        $region50: #{tpu_custom_call.1} parent=39 // pred_check_branch
          %2085 = sbr.rel (%p2083) target = $region52
        $region51: #{tpu_custom_call.1} parent=39 // pred_region
          _
        $region52: #{tpu_custom_call.1} parent=39 // pred_fallthru
          _
      $region40: #{tpu_custom_call.1} parent=5 // pred_fallthru
        _
      %p2086 = scmp.le.s32.totalorder 2, %s17
      // Predicated region
      $region53: #{tpu_custom_call.1} parent=5 // pred_check
        %p2087 = pneg %p2086
      $region54: #{tpu_custom_call.1} parent=5 // pred_check_branch
        %2089 = sbr.rel (%p2087) target = $region56
      $region55: #{tpu_custom_call.1} parent=5 // pred_region
        %s2090 = ssub.s32 %s17, 2
        // Predicated region
        $region57: #{tpu_custom_call.1} parent=55 // pred_check
          %p2091 = pneg %p166
        $region58: #{tpu_custom_call.1} parent=55 // pred_check_branch
          %2093 = sbr.rel (%p2091) target = $region60
        $region59: #{tpu_custom_call.1} parent=55 // pred_region
          %p2094 = scmp.lt.s32.totalorder %s23, 2
          %s2095 = scalar_select %p2094, %s23, 2
          %s2096 = smul.addr %s2095, 2
          %s2097 = smul.addr %s2096, 8
          %s2098 = scalar_lea.vmem %s5, %s2097
        $region60: #{tpu_custom_call.1} parent=55 // pred_fallthru
          _
      $region56: #{tpu_custom_call.1} parent=5 // pred_fallthru
        _
    $region6: #{tpu_custom_call.1} parent=1 // loop_footer
      %s21 = sadd.s32 1, %s17
    $region7: #{tpu_custom_call.1} parent=1 // loop_footer_branch
      %16 = sbr.rel target = $region3
    $region8: #{tpu_custom_call.1} parent=1 // loop_exit
      _
    %2099 = vsyncpa [#allocation3], 1
    %s2100 = scalar_lea.sflag [#allocation3], 1
    %2101 = vsyncpa %s2100, 1
    %2102 = vsyncpa [#allocation5], 1
    %s2103 = scalar_lea.sflag [#allocation5], 1
    %2104 = vsyncpa %s2103, 1

</llo_original>
